<compile_context>
chip_gen: v6e
topology: v6e:2x2x1
jax: 0.10.0
libtpu: 0.0.40
codegen_flags: <defaults>
</compile_context>

<pallas_src>
import functools

import jax
import jax.numpy as jnp
from jax.experimental import pallas as pl
from jax.experimental.pallas import tpu as pltpu

EMB = 32            # emb_dim
NUM_LAYER = 5       # num_layer (graph encoder); rationale encoder uses 2
NUM_RAT_LAYER = 2
NUM_TASKS = 3       # num_tasks
GAMMA = 0.4
IN_DIM = 8          # raw node-feature dim fed to the (synthetic) node encoder
PRED_PAD = 128      # lane-dense width for the predictor output slab


def _vmem():
    return pl.BlockSpec(memory_space=pltpu.MemorySpace.VMEM)


# ------------------------------------------------------------------ fully fused CaR kernel
def _make_car_kernel(num_layer, num_rat_layer, num_graphs, gamma):
    num_heads = num_layer + 1            # pred_rem + (num_layer-1) mid heads + pred_rep

    def kernel(x_ref, adj_ref,
               ew_ref, eb_ref, w1_ref, b1_ref, w2_ref, b2_ref,            # graph encoder
               rew_ref, reb_ref, rw1_ref, rb1_ref, rw2_ref, rb2_ref,      # rationale encoder
               g1w_ref, g1b_ref, g2w_ref, g2b_ref,                        # gate_nn
               p1w_ref, p1b_ref, p2w_ref, p2b_ref,                        # predictor (p2 padded)
               gnoise_ref, smean_ref, counts_ref, sshuf_ref, bmean_ref,
               preds_ref, losses_ref,
               hstack_ref, pin_ref):
        x = x_ref[...]
        adj = adj_ref[...]

        # single-pass BatchNorm (var = E[y^2] - mu^2, batch stats, gamma=1/beta=0) + ReLU
        def bn_relu(y, mean_mat=None):
            if mean_mat is None:
                mu = jnp.mean(y, axis=0, keepdims=True)
                m2 = jnp.mean(y * y, axis=0, keepdims=True)
            else:                          # per-head block statistics via one tiny MXU dot
                mu = jnp.dot(mean_mat, y, preferred_element_type=jnp.float32)
                m2 = jnp.dot(mean_mat, y * y, preferred_element_type=jnp.float32)
            var = jnp.maximum(m2 - mu * mu, 0.0)
            return jnp.maximum((y - mu) * jax.lax.rsqrt(var + 1e-5), 0.0)

        # AtomEncoder stand-in + GIN stack; activations stay resident across layers
        def gin_encoder(ew, eb, w1r, b1r, w2r, b2r, n_layers, store_stack):
            h = jnp.dot(x, ew, preferred_element_type=jnp.float32) + eb
            for li in range(n_layers):                                    # static unroll
                agg = jnp.dot(adj, h, preferred_element_type=jnp.float32) + h     # (A+I)h
                y = jnp.dot(agg, w1r[li], preferred_element_type=jnp.float32) + b1r[li]
                y = bn_relu(y)
                out = jnp.dot(y, w2r[li], preferred_element_type=jnp.float32) + b2r[li]
                if li < n_layers - 1:                                     # ReLU on all but last
                    out = jnp.maximum(out, 0.0)
                h = out + h                                               # residual=True
                if store_stack:
                    hstack_ref[li] = h                                    # h_list[li + 1]
            return h                                                      # JK='last'

        h_node = gin_encoder(ew_ref[...], eb_ref[...], w1_ref, b1_ref, w2_ref, b2_ref,
                             num_layer, True)
        x_rat = gin_encoder(rew_ref[...], reb_ref[...], rw1_ref, rb1_ref, rw2_ref, rb2_ref,
                            num_rat_layer, False)                         # stack not needed

        # gate_nn: Linear -> BN -> ReLU -> (Dropout=id) -> Linear
        y = jnp.dot(x_rat, g1w_ref[...], preferred_element_type=jnp.float32) + g1b_ref[...]
        y = bn_relu(y)
        logits = jnp.dot(y, g2w_ref[...], preferred_element_type=jnp.float32) + g2b_ref[...]
        # 2-class gumbel-softmax (tau=1, soft)[:, -1]  ==  sigmoid(z1 - z0)
        z = logits + gnoise_ref[...]
        d = z[:, 1:2] - z[:, 0:1]
        gate = 1.0 / (1.0 + jnp.exp(-d))                                  # (N, 1)

        # gated mean pooling; env pool derived without extra dots
        smean = smean_ref[...]                                            # (G, N)
        counts = counts_ref[...]                                          # (G, 1)
        h_r = jnp.dot(smean, gate * h_node, preferred_element_type=jnp.float32)
        h_env = jnp.dot(smean, h_node, preferred_element_type=jnp.float32) - h_r

        # node-number regularizer: scatter_add(gate) = (smean*counts)@gate; env = counts - r
        r_num = jnp.dot(smean * counts, gate, preferred_element_type=jnp.float32)
        frac = (r_num + 1e-8) * pl.reciprocal(counts + 2e-8, approx=True)
        loss_reg = jnp.mean(jnp.abs(frac - gamma))

        # all (num_mid + 1) shuffled env pools in ONE batched MXU pass
        env_stack = (1.0 - gate) * hstack_ref[...]                        # (L, N, EMB)
        env_all = jnp.einsum('lgn,lnd->lgd', sshuf_ref[...], env_stack,
                             preferred_element_type=jnp.float32)          # (L, G, EMB)

        # batched predictor (6 heads -> 2 dots), per-head BN stats preserved via bmean
        g = num_graphs
        pin_ref[0:g, :] = h_r                                             # head 0: pred_rem
        for i in range(num_layer):                                        # heads 1..L (last=pred_rep)
            pin_ref[(i + 1) * g:(i + 2) * g, :] = h_r + env_all[i]
        t = jnp.dot(pin_ref[...], p1w_ref[...],
                    preferred_element_type=jnp.float32) + p1b_ref[...]    # (H*G, 2*EMB)
        t = bn_relu(t, mean_mat=bmean_ref[...])
        preds_ref[...] = jnp.dot(t, p2w_ref[...],
                                 preferred_element_type=jnp.float32) + p2b_ref[...]  # (H*G, 128)

        # contrastive loss: x = h_r, x_aug = h_r + h_env, x_cp = h_env, T = 0.2
        inv_T = 1.0 / 0.2
        xa = h_r + h_env

        def rowdot(a, b):   # contract last dims: (G,K)x(G,K) -> (G,G)
            return jax.lax.dot_general(a, b, (((1,), (1,)), ((), ())),
                                       preferred_element_type=jnp.float32)

        xn = jnp.sqrt(jnp.sum(h_r * h_r, axis=1, keepdims=True))
        xan = jnp.sqrt(jnp.sum(xa * xa, axis=1, keepdims=True))
        xcn = jnp.sqrt(jnp.sum(h_env * h_env, axis=1, keepdims=True))
        sim = jnp.exp(rowdot(h_r, xa) *
                      pl.reciprocal(rowdot(xn, xan) + 1e-8, approx=True) * inv_T)
        sim_cp = jnp.exp(rowdot(h_r, h_env) *
                         pl.reciprocal(rowdot(xn, xcn) + 1e-8, approx=True) * inv_T)
        ri = jax.lax.broadcasted_iota(jnp.int32, (g, g), 0)
        ci = jax.lax.broadcasted_iota(jnp.int32, (g, g), 1)
        pos = jnp.sum(jnp.where(ri == ci, sim, 0.0), axis=1, keepdims=True)
        loss2 = pos * pl.reciprocal(jnp.sum(sim_cp, axis=1, keepdims=True) + pos, approx=True)
        loss_con = -jnp.mean(jnp.log(loss2))

        # both scalar losses in ONE lane-dense (1, 128) store: [loss_reg, loss_con, 0, ...]
        lane = jax.lax.broadcasted_iota(jnp.int32, (1, 128), 1)
        losses_ref[...] = (jnp.where(lane == 0, loss_reg, 0.0) +
                           jnp.where(lane == 1, loss_con, 0.0))

    return kernel


def fused_car(x_feat, adj, enc, layers, rat_enc, rat_layers,
              gate1, gate2, pred1, pred2_pad,
              gnoise, smean, counts, smean_shuf, bmean, gamma):
    ew, eb = enc
    w1, b1, w2, b2 = layers
    rew, reb = rat_enc
    rw1, rb1, rw2, rb2 = rat_layers
    g1w, g1b = gate1
    g2w, g2b = gate2
    p1w, p1b = pred1
    p2w, p2b = pred2_pad
    num_layer = w1.shape[0]
    num_rat_layer = rw1.shape[0]
    n = x_feat.shape[0]
    emb = w2.shape[-1]
    g = smean.shape[0]
    num_heads = num_layer + 1
    return pl.pallas_call(
        _make_car_kernel(num_layer, num_rat_layer, g, gamma),
        out_shape=(jax.ShapeDtypeStruct((num_heads * g, PRED_PAD), jnp.float32),
                   jax.ShapeDtypeStruct((1, 128), jnp.float32)),
        in_specs=[_vmem() for _ in range(27)],
        out_specs=(_vmem(), _vmem()),
        scratch_shapes=[pltpu.VMEM((num_layer, n, emb), jnp.float32),      # graph-encoder h_list
                        pltpu.VMEM((num_heads * g, emb), jnp.float32)],    # stacked predictor input
    )(x_feat, adj, ew, eb, w1, b1, w2, b2, rew, reb, rw1, rb1, rw2, rb2,
      g1w, g1b, g2w, g2b, p1w, p1b, p2w, p2b,
      gnoise, smean, counts, smean_shuf, bmean)


# ------------------------------------------------------------------ parameters
def init_linear(key, din, dout):
    k1, k2 = jax.random.split(key)
    bound = 1.0 / float(din) ** 0.5
    w = jax.random.uniform(k1, (din, dout), jnp.float32, -bound, bound)
    b = jax.random.uniform(k2, (1, dout), jnp.float32, -bound, bound)
    return w, b


def init_gin_layers(keys, num_layers, emb):
    w1, b1, w2, b2 = [], [], [], []
    for _ in range(num_layers):
        a, c = init_linear(next(keys), emb, 2 * emb)
        d, f = init_linear(next(keys), 2 * emb, emb)
        w1.append(a); b1.append(c); w2.append(d); b2.append(f)
    return (jnp.stack(w1), jnp.stack(b1), jnp.stack(w2), jnp.stack(b2))


def init_params(key):
    keys = iter(jax.random.split(key, 64))
    p = {}
    p["enc"] = init_linear(next(keys), IN_DIM, EMB)
    p["layers"] = init_gin_layers(keys, NUM_LAYER, EMB)          # stacked (L, ...) weights
    p["rat_enc"] = init_linear(next(keys), IN_DIM, EMB)
    p["rat_layers"] = init_gin_layers(keys, NUM_RAT_LAYER, EMB)
    p["gate1"] = init_linear(next(keys), EMB, 2 * EMB)           # gate_nn Linear(emb, 2*emb)
    p["gate2"] = init_linear(next(keys), 2 * EMB, 2)             # gate_nn Linear(2*emb, 2)
    p["pred1"] = init_linear(next(keys), EMB, 2 * EMB)           # predictor Linear(emb, 2*emb)
    p["pred2"] = init_linear(next(keys), 2 * EMB, NUM_TASKS)
    return p


# ------------------------------------------------------------------ CaR forward (fully jitted)
@functools.partial(jax.jit, static_argnames=("size",))
def car_forward(params, x_feat, adj, batch, key, *, size):
    n = x_feat.shape[0]
    num_mid = NUM_LAYER - 1
    num_heads = num_mid + 2

    # dense pooling matrices (tiny XLA glue, fused under jit)
    onehot = (batch[None, :] == jnp.arange(size)[:, None]).astype(jnp.float32)   # (G, N)
    counts = jnp.sum(onehot, axis=1, keepdims=True)                              # (G, 1)
    smean = onehot / counts            # NOTE: assumes no empty graph in the batch

    k_gumbel, k_shuf = jax.random.split(key)
    gnoise = jax.random.gumbel(k_gumbel, (n, 2), jnp.float32)

    # random.shuffle of pooled outputs -> permuted mean-pool matrices, consumed in-kernel
    shuffle_keys = jax.random.split(k_shuf, num_mid + 1)
    perms = jnp.stack([jax.random.permutation(k, size) for k in shuffle_keys])
    smean_shuf = smean[perms]                                     # (num_mid+1, G, N)

    # per-head block-mean matrix (preserves per-head BatchNorm batch statistics)
    hg = num_heads * size
    head_r = jnp.arange(hg)[:, None] // size
    head_c = jnp.arange(hg)[None, :] // size
    bmean = jnp.where(head_r == head_c, 1.0 / size, 0.0).astype(jnp.float32)

    # pad predictor output weights to 128 lanes -> lane-dense preds slab, sliced below
    p2w, p2b = params["pred2"]
    p2w_pad = jnp.zeros((p2w.shape[0], PRED_PAD), jnp.float32).at[:, :NUM_TASKS].set(p2w)
    p2b_pad = jnp.zeros((1, PRED_PAD), jnp.float32).at[:, :NUM_TASKS].set(p2b)

    preds_pad, losses = fused_car(
        x_feat, adj, params["enc"], params["layers"], params["rat_enc"], params["rat_layers"],
        params["gate1"], params["gate2"], params["pred1"], (p2w_pad, p2b_pad),
        gnoise, smean, counts, smean_shuf, bmean, GAMMA)

    preds = preds_pad[:, :NUM_TASKS].reshape(num_heads, size, NUM_TASKS)
    pred_rem = preds[0]
    pred_multi = [preds[1 + i] for i in range(num_mid)] + [preds[1 + num_mid]]
    return {
        "pred_rem": pred_rem,
        "loss_reg": losses[0, 0],
        "pred_rep": pred_multi,
        "loss_contrastive": losses[0, 1],
    }


# ------------------------------------------------------------------ main
if __name__ == "__main__":
    key = jax.random.PRNGKey(0)
    k_x, k_a, k_p, k_fwd = jax.random.split(key, 4)

    G = 4                          # graphs in the batch (static)
    nodes_per_graph = 6
    N = G * nodes_per_graph        # 24 nodes total
    batch = jnp.repeat(jnp.arange(G, dtype=jnp.int32), nodes_per_graph)

    x_feat = jax.random.normal(k_x, (N, IN_DIM), jnp.float32)

    same_graph = batch[:, None] == batch[None, :]
    rand_edges = jax.random.bernoulli(k_a, 0.5, (N, N))
    adj = jnp.where(same_graph & ~jnp.eye(N, dtype=bool), rand_edges, False)
    adj = (adj | adj.T).astype(jnp.float32)

    params = init_params(k_p)

    out = car_forward(params, x_feat, adj, batch, k_fwd, size=G)
    jax.block_until_ready(out)

    assert out["pred_rem"].shape == (G, NUM_TASKS)
    assert len(out["pred_rep"]) == (NUM_LAYER - 1) + 1
    assert all(p.shape == (G, NUM_TASKS) for p in out["pred_rep"])
    assert out["loss_reg"].shape == () and out["loss_contrastive"].shape == ()
    assert bool(jnp.isfinite(out["loss_reg"])) and bool(jnp.isfinite(out["loss_contrastive"]))
    print("KERNEL_OK")
</pallas_src>

<mosaic_0001>
module attributes {stable_mosaic.version = 11 : i64} {
  func.func @kernel(%arg0: memref<24x8xf32, #tpu.memory_space<vmem>>, %arg1: memref<24x24xf32, #tpu.memory_space<vmem>>, %arg2: memref<8x32xf32, #tpu.memory_space<vmem>>, %arg3: memref<1x32xf32, #tpu.memory_space<vmem>>, %arg4: memref<5x32x64xf32, #tpu.memory_space<vmem>>, %arg5: memref<5x1x64xf32, #tpu.memory_space<vmem>>, %arg6: memref<5x64x32xf32, #tpu.memory_space<vmem>>, %arg7: memref<5x1x32xf32, #tpu.memory_space<vmem>>, %arg8: memref<8x32xf32, #tpu.memory_space<vmem>>, %arg9: memref<1x32xf32, #tpu.memory_space<vmem>>, %arg10: memref<2x32x64xf32, #tpu.memory_space<vmem>>, %arg11: memref<2x1x64xf32, #tpu.memory_space<vmem>>, %arg12: memref<2x64x32xf32, #tpu.memory_space<vmem>>, %arg13: memref<2x1x32xf32, #tpu.memory_space<vmem>>, %arg14: memref<32x64xf32, #tpu.memory_space<vmem>>, %arg15: memref<1x64xf32, #tpu.memory_space<vmem>>, %arg16: memref<64x2xf32, #tpu.memory_space<vmem>>, %arg17: memref<1x2xf32, #tpu.memory_space<vmem>>, %arg18: memref<32x64xf32, #tpu.memory_space<vmem>>, %arg19: memref<1x64xf32, #tpu.memory_space<vmem>>, %arg20: memref<64x128xf32, #tpu.memory_space<vmem>>, %arg21: memref<1x128xf32, #tpu.memory_space<vmem>>, %arg22: memref<24x2xf32, #tpu.memory_space<vmem>>, %arg23: memref<4x24xf32, #tpu.memory_space<vmem>>, %arg24: memref<4x1xf32, #tpu.memory_space<vmem>>, %arg25: memref<5x4x24xf32, #tpu.memory_space<vmem>>, %arg26: memref<24x24xf32, #tpu.memory_space<vmem>>, %arg27: memref<24x128xf32, #tpu.memory_space<vmem>>, %arg28: memref<1x128xf32, #tpu.memory_space<vmem>>, %arg29: memref<5x24x32xf32, #tpu.memory_space<vmem>>, %arg30: memref<24x32xf32, #tpu.memory_space<vmem>>) attributes {dimension_semantics = [], scalar_prefetch = 0 : i64, scratch_operands = 2 : i64, tpu.core_type = #tpu.core_type<tc>} {
    %c0 = arith.constant 0 : index
    %c0_0 = arith.constant 0 : index
    %0 = vector.load %arg0[%c0, %c0_0] : memref<24x8xf32, #tpu.memory_space<vmem>>, vector<24x8xf32>
    %c0_1 = arith.constant 0 : index
    %c0_2 = arith.constant 0 : index
    %1 = vector.load %arg1[%c0_1, %c0_2] : memref<24x24xf32, #tpu.memory_space<vmem>>, vector<24x24xf32>
    %c0_3 = arith.constant 0 : index
    %c0_4 = arith.constant 0 : index
    %2 = vector.load %arg2[%c0_3, %c0_4] : memref<8x32xf32, #tpu.memory_space<vmem>>, vector<8x32xf32>
    %c0_5 = arith.constant 0 : index
    %c0_6 = arith.constant 0 : index
    %3 = vector.load %arg3[%c0_5, %c0_6] : memref<1x32xf32, #tpu.memory_space<vmem>>, vector<1x32xf32>
    %cst = arith.constant dense<0.000000e+00> : vector<24x32xf32>
    %4 = tpu.matmul %0, %2, %cst {dimension_numbers = #tpu.dot_dimension_numbers<[1], [0], [0], [1], [0, 0, 1, 1], [], []>} : vector<24x8xf32>, vector<8x32xf32>, vector<24x32xf32> -> vector<24x32xf32>
    %5 = vector.broadcast %3 : vector<1x32xf32> to vector<24x32xf32>
    %6 = arith.addf %4, %5 : vector<24x32xf32>
    %cst_7 = arith.constant dense<0.000000e+00> : vector<24x32xf32>
    %7 = tpu.matmul %1, %6, %cst_7 {dimension_numbers = #tpu.dot_dimension_numbers<[1], [0], [0], [1], [0, 0, 1, 1], [], []>} : vector<24x24xf32>, vector<24x32xf32>, vector<24x32xf32> -> vector<24x32xf32>
    %8 = arith.addf %7, %6 : vector<24x32xf32>
    %c0_8 = arith.constant 0 : index
    %c0_9 = arith.constant 0 : index
    %c0_10 = arith.constant 0 : index
    %9 = vector.load %arg4[%c0_8, %c0_9, %c0_10] : memref<5x32x64xf32, #tpu.memory_space<vmem>>, vector<1x32x64xf32>
    %10 = vector.shape_cast %9 : vector<1x32x64xf32> to vector<32x64xf32>
    %cst_11 = arith.constant dense<0.000000e+00> : vector<24x64xf32>
    %11 = tpu.matmul %8, %10, %cst_11 {dimension_numbers = #tpu.dot_dimension_numbers<[1], [0], [0], [1], [0, 0, 1, 1], [], []>} : vector<24x32xf32>, vector<32x64xf32>, vector<24x64xf32> -> vector<24x64xf32>
    %c0_12 = arith.constant 0 : index
    %c0_13 = arith.constant 0 : index
    %c0_14 = arith.constant 0 : index
    %12 = vector.load %arg5[%c0_12, %c0_13, %c0_14] : memref<5x1x64xf32, #tpu.memory_space<vmem>>, vector<1x1x64xf32>
    %13 = vector.shape_cast %12 : vector<1x1x64xf32> to vector<1x64xf32>
    %14 = vector.broadcast %13 : vector<1x64xf32> to vector<24x64xf32>
    %15 = arith.addf %11, %14 : vector<24x64xf32>
    %cst_15 = arith.constant dense<0.000000e+00> : vector<64xf32>
    %16 = vector.multi_reduction <add>, %15, %cst_15 [0] : vector<24x64xf32> to vector<64xf32>
    %17 = vector.shape_cast %16 : vector<64xf32> to vector<1x64xf32>
    %cst_16 = arith.constant 2.400000e+01 : f32
    %18 = vector.broadcast %cst_16 : f32 to vector<1x64xf32>
    %19 = arith.divf %17, %18 : vector<1x64xf32>
    %20 = arith.mulf %15, %15 : vector<24x64xf32>
    %cst_17 = arith.constant dense<0.000000e+00> : vector<64xf32>
    %21 = vector.multi_reduction <add>, %20, %cst_17 [0] : vector<24x64xf32> to vector<64xf32>
    %22 = vector.shape_cast %21 : vector<64xf32> to vector<1x64xf32>
    %cst_18 = arith.constant 2.400000e+01 : f32
    %23 = vector.broadcast %cst_18 : f32 to vector<1x64xf32>
    %24 = arith.divf %22, %23 : vector<1x64xf32>
    %25 = arith.mulf %19, %19 : vector<1x64xf32>
    %26 = arith.subf %24, %25 : vector<1x64xf32>
    %cst_19 = arith.constant 0.000000e+00 : f32
    %27 = vector.broadcast %cst_19 : f32 to vector<1x64xf32>
    %28 = arith.maximumf %26, %27 : vector<1x64xf32>
    %29 = vector.broadcast %19 : vector<1x64xf32> to vector<24x64xf32>
    %30 = arith.subf %15, %29 : vector<24x64xf32>
    %cst_20 = arith.constant 9.99999974E-6 : f32
    %31 = vector.broadcast %cst_20 : f32 to vector<1x64xf32>
    %32 = arith.addf %28, %31 : vector<1x64xf32>
    %33 = math.rsqrt %32 : vector<1x64xf32>
    %34 = vector.broadcast %33 : vector<1x64xf32> to vector<24x64xf32>
    %35 = arith.mulf %30, %34 : vector<24x64xf32>
    %cst_21 = arith.constant 0.000000e+00 : f32
    %36 = vector.broadcast %cst_21 : f32 to vector<24x64xf32>
    %37 = arith.maximumf %35, %36 : vector<24x64xf32>
    %c0_22 = arith.constant 0 : index
    %c0_23 = arith.constant 0 : index
    %c0_24 = arith.constant 0 : index
    %38 = vector.load %arg6[%c0_22, %c0_23, %c0_24] : memref<5x64x32xf32, #tpu.memory_space<vmem>>, vector<1x64x32xf32>
    %39 = vector.shape_cast %38 : vector<1x64x32xf32> to vector<64x32xf32>
    %cst_25 = arith.constant dense<0.000000e+00> : vector<24x32xf32>
    %40 = tpu.matmul %37, %39, %cst_25 {dimension_numbers = #tpu.dot_dimension_numbers<[1], [0], [0], [1], [0, 0, 1, 1], [], []>} : vector<24x64xf32>, vector<64x32xf32>, vector<24x32xf32> -> vector<24x32xf32>
    %c0_26 = arith.constant 0 : index
    %c0_27 = arith.constant 0 : index
    %c0_28 = arith.constant 0 : index
    %41 = vector.load %arg7[%c0_26, %c0_27, %c0_28] : memref<5x1x32xf32, #tpu.memory_space<vmem>>, vector<1x1x32xf32>
    %42 = vector.shape_cast %41 : vector<1x1x32xf32> to vector<1x32xf32>
    %43 = vector.broadcast %42 : vector<1x32xf32> to vector<24x32xf32>
    %44 = arith.addf %40, %43 : vector<24x32xf32>
    %cst_29 = arith.constant 0.000000e+00 : f32
    %45 = vector.broadcast %cst_29 : f32 to vector<24x32xf32>
    %46 = arith.maximumf %44, %45 : vector<24x32xf32>
    %47 = arith.addf %46, %6 : vector<24x32xf32>
    %c0_30 = arith.constant 0 : index
    %c0_31 = arith.constant 0 : index
    %c0_32 = arith.constant 0 : index
    %48 = vector.load %arg29[%c0_30, %c0_31, %c0_32] : memref<5x24x32xf32, #tpu.memory_space<vmem>>, vector<1x24x32xf32>
    %49 = vector.shape_cast %48 : vector<1x24x32xf32> to vector<24x32xf32>
    %50 = vector.shape_cast %47 : vector<24x32xf32> to vector<1x24x32xf32>
    tpu.vector_store %arg29[%c0_30, %c0_31, %c0_32], %50 {strides = array<i32>} : memref<5x24x32xf32, #tpu.memory_space<vmem>>, vector<1x24x32xf32>,
    %cst_33 = arith.constant dense<0.000000e+00> : vector<24x32xf32>
    %51 = tpu.matmul %1, %47, %cst_33 {dimension_numbers = #tpu.dot_dimension_numbers<[1], [0], [0], [1], [0, 0, 1, 1], [], []>} : vector<24x24xf32>, vector<24x32xf32>, vector<24x32xf32> -> vector<24x32xf32>
    %52 = arith.addf %51, %47 : vector<24x32xf32>
    %c1 = arith.constant 1 : index
    %c0_34 = arith.constant 0 : index
    %c0_35 = arith.constant 0 : index
    %53 = vector.load %arg4[%c1, %c0_34, %c0_35] : memref<5x32x64xf32, #tpu.memory_space<vmem>>, vector<1x32x64xf32>
    %54 = vector.shape_cast %53 : vector<1x32x64xf32> to vector<32x64xf32>
    %cst_36 = arith.constant dense<0.000000e+00> : vector<24x64xf32>
    %55 = tpu.matmul %52, %54, %cst_36 {dimension_numbers = #tpu.dot_dimension_numbers<[1], [0], [0], [1], [0, 0, 1, 1], [], []>} : vector<24x32xf32>, vector<32x64xf32>, vector<24x64xf32> -> vector<24x64xf32>
    %c1_37 = arith.constant 1 : index
    %c0_38 = arith.constant 0 : index
    %c0_39 = arith.constant 0 : index
    %56 = vector.load %arg5[%c1_37, %c0_38, %c0_39] : memref<5x1x64xf32, #tpu.memory_space<vmem>>, vector<1x1x64xf32>
    %57 = vector.shape_cast %56 : vector<1x1x64xf32> to vector<1x64xf32>
    %58 = vector.broadcast %57 : vector<1x64xf32> to vector<24x64xf32>
    %59 = arith.addf %55, %58 : vector<24x64xf32>
    %cst_40 = arith.constant dense<0.000000e+00> : vector<64xf32>
    %60 = vector.multi_reduction <add>, %59, %cst_40 [0] : vector<24x64xf32> to vector<64xf32>
    %61 = vector.shape_cast %60 : vector<64xf32> to vector<1x64xf32>
    %cst_41 = arith.constant 2.400000e+01 : f32
    %62 = vector.broadcast %cst_41 : f32 to vector<1x64xf32>
    %63 = arith.divf %61, %62 : vector<1x64xf32>
    %64 = arith.mulf %59, %59 : vector<24x64xf32>
    %cst_42 = arith.constant dense<0.000000e+00> : vector<64xf32>
    %65 = vector.multi_reduction <add>, %64, %cst_42 [0] : vector<24x64xf32> to vector<64xf32>
    %66 = vector.shape_cast %65 : vector<64xf32> to vector<1x64xf32>
    %cst_43 = arith.constant 2.400000e+01 : f32
    %67 = vector.broadcast %cst_43 : f32 to vector<1x64xf32>
    %68 = arith.divf %66, %67 : vector<1x64xf32>
    %69 = arith.mulf %63, %63 : vector<1x64xf32>
    %70 = arith.subf %68, %69 : vector<1x64xf32>
    %cst_44 = arith.constant 0.000000e+00 : f32
    %71 = vector.broadcast %cst_44 : f32 to vector<1x64xf32>
    %72 = arith.maximumf %70, %71 : vector<1x64xf32>
    %73 = vector.broadcast %63 : vector<1x64xf32> to vector<24x64xf32>
    %74 = arith.subf %59, %73 : vector<24x64xf32>
    %cst_45 = arith.constant 9.99999974E-6 : f32
    %75 = vector.broadcast %cst_45 : f32 to vector<1x64xf32>
    %76 = arith.addf %72, %75 : vector<1x64xf32>
    %77 = math.rsqrt %76 : vector<1x64xf32>
    %78 = vector.broadcast %77 : vector<1x64xf32> to vector<24x64xf32>
    %79 = arith.mulf %74, %78 : vector<24x64xf32>
    %cst_46 = arith.constant 0.000000e+00 : f32
    %80 = vector.broadcast %cst_46 : f32 to vector<24x64xf32>
    %81 = arith.maximumf %79, %80 : vector<24x64xf32>
    %c1_47 = arith.constant 1 : index
    %c0_48 = arith.constant 0 : index
    %c0_49 = arith.constant 0 : index
    %82 = vector.load %arg6[%c1_47, %c0_48, %c0_49] : memref<5x64x32xf32, #tpu.memory_space<vmem>>, vector<1x64x32xf32>
    %83 = vector.shape_cast %82 : vector<1x64x32xf32> to vector<64x32xf32>
    %cst_50 = arith.constant dense<0.000000e+00> : vector<24x32xf32>
    %84 = tpu.matmul %81, %83, %cst_50 {dimension_numbers = #tpu.dot_dimension_numbers<[1], [0], [0], [1], [0, 0, 1, 1], [], []>} : vector<24x64xf32>, vector<64x32xf32>, vector<24x32xf32> -> vector<24x32xf32>
    %c1_51 = arith.constant 1 : index
    %c0_52 = arith.constant 0 : index
    %c0_53 = arith.constant 0 : index
    %85 = vector.load %arg7[%c1_51, %c0_52, %c0_53] : memref<5x1x32xf32, #tpu.memory_space<vmem>>, vector<1x1x32xf32>
    %86 = vector.shape_cast %85 : vector<1x1x32xf32> to vector<1x32xf32>
    %87 = vector.broadcast %86 : vector<1x32xf32> to vector<24x32xf32>
    %88 = arith.addf %84, %87 : vector<24x32xf32>
    %cst_54 = arith.constant 0.000000e+00 : f32
    %89 = vector.broadcast %cst_54 : f32 to vector<24x32xf32>
    %90 = arith.maximumf %88, %89 : vector<24x32xf32>
    %91 = arith.addf %90, %47 : vector<24x32xf32>
    %c1_55 = arith.constant 1 : index
    %c0_56 = arith.constant 0 : index
    %c0_57 = arith.constant 0 : index
    %92 = vector.load %arg29[%c1_55, %c0_56, %c0_57] : memref<5x24x32xf32, #tpu.memory_space<vmem>>, vector<1x24x32xf32>
    %93 = vector.shape_cast %92 : vector<1x24x32xf32> to vector<24x32xf32>
    %94 = vector.shape_cast %91 : vector<24x32xf32> to vector<1x24x32xf32>
    tpu.vector_store %arg29[%c1_55, %c0_56, %c0_57], %94 {strides = array<i32>} : memref<5x24x32xf32, #tpu.memory_space<vmem>>, vector<1x24x32xf32>,
    %cst_58 = arith.constant dense<0.000000e+00> : vector<24x32xf32>
    %95 = tpu.matmul %1, %91, %cst_58 {dimension_numbers = #tpu.dot_dimension_numbers<[1], [0], [0], [1], [0, 0, 1, 1], [], []>} : vector<24x24xf32>, vector<24x32xf32>, vector<24x32xf32> -> vector<24x32xf32>
    %96 = arith.addf %95, %91 : vector<24x32xf32>
    %c2 = arith.constant 2 : index
    %c0_59 = arith.constant 0 : index
    %c0_60 = arith.constant 0 : index
    %97 = vector.load %arg4[%c2, %c0_59, %c0_60] : memref<5x32x64xf32, #tpu.memory_space<vmem>>, vector<1x32x64xf32>
    %98 = vector.shape_cast %97 : vector<1x32x64xf32> to vector<32x64xf32>
    %cst_61 = arith.constant dense<0.000000e+00> : vector<24x64xf32>
    %99 = tpu.matmul %96, %98, %cst_61 {dimension_numbers = #tpu.dot_dimension_numbers<[1], [0], [0], [1], [0, 0, 1, 1], [], []>} : vector<24x32xf32>, vector<32x64xf32>, vector<24x64xf32> -> vector<24x64xf32>
    %c2_62 = arith.constant 2 : index
    %c0_63 = arith.constant 0 : index
    %c0_64 = arith.constant 0 : index
    %100 = vector.load %arg5[%c2_62, %c0_63, %c0_64] : memref<5x1x64xf32, #tpu.memory_space<vmem>>, vector<1x1x64xf32>
    %101 = vector.shape_cast %100 : vector<1x1x64xf32> to vector<1x64xf32>
    %102 = vector.broadcast %101 : vector<1x64xf32> to vector<24x64xf32>
    %103 = arith.addf %99, %102 : vector<24x64xf32>
    %cst_65 = arith.constant dense<0.000000e+00> : vector<64xf32>
    %104 = vector.multi_reduction <add>, %103, %cst_65 [0] : vector<24x64xf32> to vector<64xf32>
    %105 = vector.shape_cast %104 : vector<64xf32> to vector<1x64xf32>
    %cst_66 = arith.constant 2.400000e+01 : f32
    %106 = vector.broadcast %cst_66 : f32 to vector<1x64xf32>
    %107 = arith.divf %105, %106 : vector<1x64xf32>
    %108 = arith.mulf %103, %103 : vector<24x64xf32>
    %cst_67 = arith.constant dense<0.000000e+00> : vector<64xf32>
    %109 = vector.multi_reduction <add>, %108, %cst_67 [0] : vector<24x64xf32> to vector<64xf32>
    %110 = vector.shape_cast %109 : vector<64xf32> to vector<1x64xf32>
    %cst_68 = arith.constant 2.400000e+01 : f32
    %111 = vector.broadcast %cst_68 : f32 to vector<1x64xf32>
    %112 = arith.divf %110, %111 : vector<1x64xf32>
    %113 = arith.mulf %107, %107 : vector<1x64xf32>
    %114 = arith.subf %112, %113 : vector<1x64xf32>
    %cst_69 = arith.constant 0.000000e+00 : f32
    %115 = vector.broadcast %cst_69 : f32 to vector<1x64xf32>
    %116 = arith.maximumf %114, %115 : vector<1x64xf32>
    %117 = vector.broadcast %107 : vector<1x64xf32> to vector<24x64xf32>
    %118 = arith.subf %103, %117 : vector<24x64xf32>
    %cst_70 = arith.constant 9.99999974E-6 : f32
    %119 = vector.broadcast %cst_70 : f32 to vector<1x64xf32>
    %120 = arith.addf %116, %119 : vector<1x64xf32>
    %121 = math.rsqrt %120 : vector<1x64xf32>
    %122 = vector.broadcast %121 : vector<1x64xf32> to vector<24x64xf32>
    %123 = arith.mulf %118, %122 : vector<24x64xf32>
    %cst_71 = arith.constant 0.000000e+00 : f32
    %124 = vector.broadcast %cst_71 : f32 to vector<24x64xf32>
    %125 = arith.maximumf %123, %124 : vector<24x64xf32>
    %c2_72 = arith.constant 2 : index
    %c0_73 = arith.constant 0 : index
    %c0_74 = arith.constant 0 : index
    %126 = vector.load %arg6[%c2_72, %c0_73, %c0_74] : memref<5x64x32xf32, #tpu.memory_space<vmem>>, vector<1x64x32xf32>
    %127 = vector.shape_cast %126 : vector<1x64x32xf32> to vector<64x32xf32>
    %cst_75 = arith.constant dense<0.000000e+00> : vector<24x32xf32>
    %128 = tpu.matmul %125, %127, %cst_75 {dimension_numbers = #tpu.dot_dimension_numbers<[1], [0], [0], [1], [0, 0, 1, 1], [], []>} : vector<24x64xf32>, vector<64x32xf32>, vector<24x32xf32> -> vector<24x32xf32>
    %c2_76 = arith.constant 2 : index
    %c0_77 = arith.constant 0 : index
    %c0_78 = arith.constant 0 : index
    %129 = vector.load %arg7[%c2_76, %c0_77, %c0_78] : memref<5x1x32xf32, #tpu.memory_space<vmem>>, vector<1x1x32xf32>
    %130 = vector.shape_cast %129 : vector<1x1x32xf32> to vector<1x32xf32>
    %131 = vector.broadcast %130 : vector<1x32xf32> to vector<24x32xf32>
    %132 = arith.addf %128, %131 : vector<24x32xf32>
    %cst_79 = arith.constant 0.000000e+00 : f32
    %133 = vector.broadcast %cst_79 : f32 to vector<24x32xf32>
    %134 = arith.maximumf %132, %133 : vector<24x32xf32>
    %135 = arith.addf %134, %91 : vector<24x32xf32>
    %c2_80 = arith.constant 2 : index
    %c0_81 = arith.constant 0 : index
    %c0_82 = arith.constant 0 : index
    %136 = vector.load %arg29[%c2_80, %c0_81, %c0_82] : memref<5x24x32xf32, #tpu.memory_space<vmem>>, vector<1x24x32xf32>
    %137 = vector.shape_cast %136 : vector<1x24x32xf32> to vector<24x32xf32>
    %138 = vector.shape_cast %135 : vector<24x32xf32> to vector<1x24x32xf32>
    tpu.vector_store %arg29[%c2_80, %c0_81, %c0_82], %138 {strides = array<i32>} : memref<5x24x32xf32, #tpu.memory_space<vmem>>, vector<1x24x32xf32>,
    %cst_83 = arith.constant dense<0.000000e+00> : vector<24x32xf32>
    %139 = tpu.matmul %1, %135, %cst_83 {dimension_numbers = #tpu.dot_dimension_numbers<[1], [0], [0], [1], [0, 0, 1, 1], [], []>} : vector<24x24xf32>, vector<24x32xf32>, vector<24x32xf32> -> vector<24x32xf32>
    %140 = arith.addf %139, %135 : vector<24x32xf32>
    %c3 = arith.constant 3 : index
    %c0_84 = arith.constant 0 : index
    %c0_85 = arith.constant 0 : index
    %141 = vector.load %arg4[%c3, %c0_84, %c0_85] : memref<5x32x64xf32, #tpu.memory_space<vmem>>, vector<1x32x64xf32>
    %142 = vector.shape_cast %141 : vector<1x32x64xf32> to vector<32x64xf32>
    %cst_86 = arith.constant dense<0.000000e+00> : vector<24x64xf32>
    %143 = tpu.matmul %140, %142, %cst_86 {dimension_numbers = #tpu.dot_dimension_numbers<[1], [0], [0], [1], [0, 0, 1, 1], [], []>} : vector<24x32xf32>, vector<32x64xf32>, vector<24x64xf32> -> vector<24x64xf32>
    %c3_87 = arith.constant 3 : index
    %c0_88 = arith.constant 0 : index
    %c0_89 = arith.constant 0 : index
    %144 = vector.load %arg5[%c3_87, %c0_88, %c0_89] : memref<5x1x64xf32, #tpu.memory_space<vmem>>, vector<1x1x64xf32>
    %145 = vector.shape_cast %144 : vector<1x1x64xf32> to vector<1x64xf32>
    %146 = vector.broadcast %145 : vector<1x64xf32> to vector<24x64xf32>
    %147 = arith.addf %143, %146 : vector<24x64xf32>
    %cst_90 = arith.constant dense<0.000000e+00> : vector<64xf32>
    %148 = vector.multi_reduction <add>, %147, %cst_90 [0] : vector<24x64xf32> to vector<64xf32>
    %149 = vector.shape_cast %148 : vector<64xf32> to vector<1x64xf32>
    %cst_91 = arith.constant 2.400000e+01 : f32
    %150 = vector.broadcast %cst_91 : f32 to vector<1x64xf32>
    %151 = arith.divf %149, %150 : vector<1x64xf32>
    %152 = arith.mulf %147, %147 : vector<24x64xf32>
    %cst_92 = arith.constant dense<0.000000e+00> : vector<64xf32>
    %153 = vector.multi_reduction <add>, %152, %cst_92 [0] : vector<24x64xf32> to vector<64xf32>
    %154 = vector.shape_cast %153 : vector<64xf32> to vector<1x64xf32>
    %cst_93 = arith.constant 2.400000e+01 : f32
    %155 = vector.broadcast %cst_93 : f32 to vector<1x64xf32>
    %156 = arith.divf %154, %155 : vector<1x64xf32>
    %157 = arith.mulf %151, %151 : vector<1x64xf32>
    %158 = arith.subf %156, %157 : vector<1x64xf32>
    %cst_94 = arith.constant 0.000000e+00 : f32
    %159 = vector.broadcast %cst_94 : f32 to vector<1x64xf32>
    %160 = arith.maximumf %158, %159 : vector<1x64xf32>
    %161 = vector.broadcast %151 : vector<1x64xf32> to vector<24x64xf32>
    %162 = arith.subf %147, %161 : vector<24x64xf32>
    %cst_95 = arith.constant 9.99999974E-6 : f32
    %163 = vector.broadcast %cst_95 : f32 to vector<1x64xf32>
    %164 = arith.addf %160, %163 : vector<1x64xf32>
    %165 = math.rsqrt %164 : vector<1x64xf32>
    %166 = vector.broadcast %165 : vector<1x64xf32> to vector<24x64xf32>
    %167 = arith.mulf %162, %166 : vector<24x64xf32>
    %cst_96 = arith.constant 0.000000e+00 : f32
    %168 = vector.broadcast %cst_96 : f32 to vector<24x64xf32>
    %169 = arith.maximumf %167, %168 : vector<24x64xf32>
    %c3_97 = arith.constant 3 : index
    %c0_98 = arith.constant 0 : index
    %c0_99 = arith.constant 0 : index
    %170 = vector.load %arg6[%c3_97, %c0_98, %c0_99] : memref<5x64x32xf32, #tpu.memory_space<vmem>>, vector<1x64x32xf32>
    %171 = vector.shape_cast %170 : vector<1x64x32xf32> to vector<64x32xf32>
    %cst_100 = arith.constant dense<0.000000e+00> : vector<24x32xf32>
    %172 = tpu.matmul %169, %171, %cst_100 {dimension_numbers = #tpu.dot_dimension_numbers<[1], [0], [0], [1], [0, 0, 1, 1], [], []>} : vector<24x64xf32>, vector<64x32xf32>, vector<24x32xf32> -> vector<24x32xf32>
    %c3_101 = arith.constant 3 : index
    %c0_102 = arith.constant 0 : index
    %c0_103 = arith.constant 0 : index
    %173 = vector.load %arg7[%c3_101, %c0_102, %c0_103] : memref<5x1x32xf32, #tpu.memory_space<vmem>>, vector<1x1x32xf32>
    %174 = vector.shape_cast %173 : vector<1x1x32xf32> to vector<1x32xf32>
    %175 = vector.broadcast %174 : vector<1x32xf32> to vector<24x32xf32>
    %176 = arith.addf %172, %175 : vector<24x32xf32>
    %cst_104 = arith.constant 0.000000e+00 : f32
    %177 = vector.broadcast %cst_104 : f32 to vector<24x32xf32>
    %178 = arith.maximumf %176, %177 : vector<24x32xf32>
    %179 = arith.addf %178, %135 : vector<24x32xf32>
    %c3_105 = arith.constant 3 : index
    %c0_106 = arith.constant 0 : index
    %c0_107 = arith.constant 0 : index
    %180 = vector.load %arg29[%c3_105, %c0_106, %c0_107] : memref<5x24x32xf32, #tpu.memory_space<vmem>>, vector<1x24x32xf32>
    %181 = vector.shape_cast %180 : vector<1x24x32xf32> to vector<24x32xf32>
    %182 = vector.shape_cast %179 : vector<24x32xf32> to vector<1x24x32xf32>
    tpu.vector_store %arg29[%c3_105, %c0_106, %c0_107], %182 {strides = array<i32>} : memref<5x24x32xf32, #tpu.memory_space<vmem>>, vector<1x24x32xf32>,
    %cst_108 = arith.constant dense<0.000000e+00> : vector<24x32xf32>
    %183 = tpu.matmul %1, %179, %cst_108 {dimension_numbers = #tpu.dot_dimension_numbers<[1], [0], [0], [1], [0, 0, 1, 1], [], []>} : vector<24x24xf32>, vector<24x32xf32>, vector<24x32xf32> -> vector<24x32xf32>
    %184 = arith.addf %183, %179 : vector<24x32xf32>
    %c4 = arith.constant 4 : index
    %c0_109 = arith.constant 0 : index
    %c0_110 = arith.constant 0 : index
    %185 = vector.load %arg4[%c4, %c0_109, %c0_110] : memref<5x32x64xf32, #tpu.memory_space<vmem>>, vector<1x32x64xf32>
    %186 = vector.shape_cast %185 : vector<1x32x64xf32> to vector<32x64xf32>
    %cst_111 = arith.constant dense<0.000000e+00> : vector<24x64xf32>
    %187 = tpu.matmul %184, %186, %cst_111 {dimension_numbers = #tpu.dot_dimension_numbers<[1], [0], [0], [1], [0, 0, 1, 1], [], []>} : vector<24x32xf32>, vector<32x64xf32>, vector<24x64xf32> -> vector<24x64xf32>
    %c4_112 = arith.constant 4 : index
    %c0_113 = arith.constant 0 : index
    %c0_114 = arith.constant 0 : index
    %188 = vector.load %arg5[%c4_112, %c0_113, %c0_114] : memref<5x1x64xf32, #tpu.memory_space<vmem>>, vector<1x1x64xf32>
    %189 = vector.shape_cast %188 : vector<1x1x64xf32> to vector<1x64xf32>
    %190 = vector.broadcast %189 : vector<1x64xf32> to vector<24x64xf32>
    %191 = arith.addf %187, %190 : vector<24x64xf32>
    %cst_115 = arith.constant dense<0.000000e+00> : vector<64xf32>
    %192 = vector.multi_reduction <add>, %191, %cst_115 [0] : vector<24x64xf32> to vector<64xf32>
    %193 = vector.shape_cast %192 : vector<64xf32> to vector<1x64xf32>
    %cst_116 = arith.constant 2.400000e+01 : f32
    %194 = vector.broadcast %cst_116 : f32 to vector<1x64xf32>
    %195 = arith.divf %193, %194 : vector<1x64xf32>
    %196 = arith.mulf %191, %191 : vector<24x64xf32>
    %cst_117 = arith.constant dense<0.000000e+00> : vector<64xf32>
    %197 = vector.multi_reduction <add>, %196, %cst_117 [0] : vector<24x64xf32> to vector<64xf32>
    %198 = vector.shape_cast %197 : vector<64xf32> to vector<1x64xf32>
    %cst_118 = arith.constant 2.400000e+01 : f32
    %199 = vector.broadcast %cst_118 : f32 to vector<1x64xf32>
    %200 = arith.divf %198, %199 : vector<1x64xf32>
    %201 = arith.mulf %195, %195 : vector<1x64xf32>
    %202 = arith.subf %200, %201 : vector<1x64xf32>
    %cst_119 = arith.constant 0.000000e+00 : f32
    %203 = vector.broadcast %cst_119 : f32 to vector<1x64xf32>
    %204 = arith.maximumf %202, %203 : vector<1x64xf32>
    %205 = vector.broadcast %195 : vector<1x64xf32> to vector<24x64xf32>
    %206 = arith.subf %191, %205 : vector<24x64xf32>
    %cst_120 = arith.constant 9.99999974E-6 : f32
    %207 = vector.broadcast %cst_120 : f32 to vector<1x64xf32>
    %208 = arith.addf %204, %207 : vector<1x64xf32>
    %209 = math.rsqrt %208 : vector<1x64xf32>
    %210 = vector.broadcast %209 : vector<1x64xf32> to vector<24x64xf32>
    %211 = arith.mulf %206, %210 : vector<24x64xf32>
    %cst_121 = arith.constant 0.000000e+00 : f32
    %212 = vector.broadcast %cst_121 : f32 to vector<24x64xf32>
    %213 = arith.maximumf %211, %212 : vector<24x64xf32>
    %c4_122 = arith.constant 4 : index
    %c0_123 = arith.constant 0 : index
    %c0_124 = arith.constant 0 : index
    %214 = vector.load %arg6[%c4_122, %c0_123, %c0_124] : memref<5x64x32xf32, #tpu.memory_space<vmem>>, vector<1x64x32xf32>
    %215 = vector.shape_cast %214 : vector<1x64x32xf32> to vector<64x32xf32>
    %cst_125 = arith.constant dense<0.000000e+00> : vector<24x32xf32>
    %216 = tpu.matmul %213, %215, %cst_125 {dimension_numbers = #tpu.dot_dimension_numbers<[1], [0], [0], [1], [0, 0, 1, 1], [], []>} : vector<24x64xf32>, vector<64x32xf32>, vector<24x32xf32> -> vector<24x32xf32>
    %c4_126 = arith.constant 4 : index
    %c0_127 = arith.constant 0 : index
    %c0_128 = arith.constant 0 : index
    %217 = vector.load %arg7[%c4_126, %c0_127, %c0_128] : memref<5x1x32xf32, #tpu.memory_space<vmem>>, vector<1x1x32xf32>
    %218 = vector.shape_cast %217 : vector<1x1x32xf32> to vector<1x32xf32>
    %219 = vector.broadcast %218 : vector<1x32xf32> to vector<24x32xf32>
    %220 = arith.addf %216, %219 : vector<24x32xf32>
    %221 = arith.addf %220, %179 : vector<24x32xf32>
    %c4_129 = arith.constant 4 : index
    %c0_130 = arith.constant 0 : index
    %c0_131 = arith.constant 0 : index
    %222 = vector.load %arg29[%c4_129, %c0_130, %c0_131] : memref<5x24x32xf32, #tpu.memory_space<vmem>>, vector<1x24x32xf32>
    %223 = vector.shape_cast %222 : vector<1x24x32xf32> to vector<24x32xf32>
    %224 = vector.shape_cast %221 : vector<24x32xf32> to vector<1x24x32xf32>
    tpu.vector_store %arg29[%c4_129, %c0_130, %c0_131], %224 {strides = array<i32>} : memref<5x24x32xf32, #tpu.memory_space<vmem>>, vector<1x24x32xf32>,
    %c0_132 = arith.constant 0 : index
    %c0_133 = arith.constant 0 : index
    %225 = vector.load %arg8[%c0_132, %c0_133] : memref<8x32xf32, #tpu.memory_space<vmem>>, vector<8x32xf32>
    %c0_134 = arith.constant 0 : index
    %c0_135 = arith.constant 0 : index
    %226 = vector.load %arg9[%c0_134, %c0_135] : memref<1x32xf32, #tpu.memory_space<vmem>>, vector<1x32xf32>
    %cst_136 = arith.constant dense<0.000000e+00> : vector<24x32xf32>
    %227 = tpu.matmul %0, %225, %cst_136 {dimension_numbers = #tpu.dot_dimension_numbers<[1], [0], [0], [1], [0, 0, 1, 1], [], []>} : vector<24x8xf32>, vector<8x32xf32>, vector<24x32xf32> -> vector<24x32xf32>
    %228 = vector.broadcast %226 : vector<1x32xf32> to vector<24x32xf32>
    %229 = arith.addf %227, %228 : vector<24x32xf32>
    %cst_137 = arith.constant dense<0.000000e+00> : vector<24x32xf32>
    %230 = tpu.matmul %1, %229, %cst_137 {dimension_numbers = #tpu.dot_dimension_numbers<[1], [0], [0], [1], [0, 0, 1, 1], [], []>} : vector<24x24xf32>, vector<24x32xf32>, vector<24x32xf32> -> vector<24x32xf32>
    %231 = arith.addf %230, %229 : vector<24x32xf32>
    %c0_138 = arith.constant 0 : index
    %c0_139 = arith.constant 0 : index
    %c0_140 = arith.constant 0 : index
    %232 = vector.load %arg10[%c0_138, %c0_139, %c0_140] : memref<2x32x64xf32, #tpu.memory_space<vmem>>, vector<1x32x64xf32>
    %233 = vector.shape_cast %232 : vector<1x32x64xf32> to vector<32x64xf32>
    %cst_141 = arith.constant dense<0.000000e+00> : vector<24x64xf32>
    %234 = tpu.matmul %231, %233, %cst_141 {dimension_numbers = #tpu.dot_dimension_numbers<[1], [0], [0], [1], [0, 0, 1, 1], [], []>} : vector<24x32xf32>, vector<32x64xf32>, vector<24x64xf32> -> vector<24x64xf32>
    %c0_142 = arith.constant 0 : index
    %c0_143 = arith.constant 0 : index
    %c0_144 = arith.constant 0 : index
    %235 = vector.load %arg11[%c0_142, %c0_143, %c0_144] : memref<2x1x64xf32, #tpu.memory_space<vmem>>, vector<1x1x64xf32>
    %236 = vector.shape_cast %235 : vector<1x1x64xf32> to vector<1x64xf32>
    %237 = vector.broadcast %236 : vector<1x64xf32> to vector<24x64xf32>
    %238 = arith.addf %234, %237 : vector<24x64xf32>
    %cst_145 = arith.constant dense<0.000000e+00> : vector<64xf32>
    %239 = vector.multi_reduction <add>, %238, %cst_145 [0] : vector<24x64xf32> to vector<64xf32>
    %240 = vector.shape_cast %239 : vector<64xf32> to vector<1x64xf32>
    %cst_146 = arith.constant 2.400000e+01 : f32
    %241 = vector.broadcast %cst_146 : f32 to vector<1x64xf32>
    %242 = arith.divf %240, %241 : vector<1x64xf32>
    %243 = arith.mulf %238, %238 : vector<24x64xf32>
    %cst_147 = arith.constant dense<0.000000e+00> : vector<64xf32>
    %244 = vector.multi_reduction <add>, %243, %cst_147 [0] : vector<24x64xf32> to vector<64xf32>
    %245 = vector.shape_cast %244 : vector<64xf32> to vector<1x64xf32>
    %cst_148 = arith.constant 2.400000e+01 : f32
    %246 = vector.broadcast %cst_148 : f32 to vector<1x64xf32>
    %247 = arith.divf %245, %246 : vector<1x64xf32>
    %248 = arith.mulf %242, %242 : vector<1x64xf32>
    %249 = arith.subf %247, %248 : vector<1x64xf32>
    %cst_149 = arith.constant 0.000000e+00 : f32
    %250 = vector.broadcast %cst_149 : f32 to vector<1x64xf32>
    %251 = arith.maximumf %249, %250 : vector<1x64xf32>
    %252 = vector.broadcast %242 : vector<1x64xf32> to vector<24x64xf32>
    %253 = arith.subf %238, %252 : vector<24x64xf32>
    %cst_150 = arith.constant 9.99999974E-6 : f32
    %254 = vector.broadcast %cst_150 : f32 to vector<1x64xf32>
    %255 = arith.addf %251, %254 : vector<1x64xf32>
    %256 = math.rsqrt %255 : vector<1x64xf32>
    %257 = vector.broadcast %256 : vector<1x64xf32> to vector<24x64xf32>
    %258 = arith.mulf %253, %257 : vector<24x64xf32>
    %cst_151 = arith.constant 0.000000e+00 : f32
    %259 = vector.broadcast %cst_151 : f32 to vector<24x64xf32>
    %260 = arith.maximumf %258, %259 : vector<24x64xf32>
    %c0_152 = arith.constant 0 : index
    %c0_153 = arith.constant 0 : index
    %c0_154 = arith.constant 0 : index
    %261 = vector.load %arg12[%c0_152, %c0_153, %c0_154] : memref<2x64x32xf32, #tpu.memory_space<vmem>>, vector<1x64x32xf32>
    %262 = vector.shape_cast %261 : vector<1x64x32xf32> to vector<64x32xf32>
    %cst_155 = arith.constant dense<0.000000e+00> : vector<24x32xf32>
    %263 = tpu.matmul %260, %262, %cst_155 {dimension_numbers = #tpu.dot_dimension_numbers<[1], [0], [0], [1], [0, 0, 1, 1], [], []>} : vector<24x64xf32>, vector<64x32xf32>, vector<24x32xf32> -> vector<24x32xf32>
    %c0_156 = arith.constant 0 : index
    %c0_157 = arith.constant 0 : index
    %c0_158 = arith.constant 0 : index
    %264 = vector.load %arg13[%c0_156, %c0_157, %c0_158] : memref<2x1x32xf32, #tpu.memory_space<vmem>>, vector<1x1x32xf32>
    %265 = vector.shape_cast %264 : vector<1x1x32xf32> to vector<1x32xf32>
    %266 = vector.broadcast %265 : vector<1x32xf32> to vector<24x32xf32>
    %267 = arith.addf %263, %266 : vector<24x32xf32>
    %cst_159 = arith.constant 0.000000e+00 : f32
    %268 = vector.broadcast %cst_159 : f32 to vector<24x32xf32>
    %269 = arith.maximumf %267, %268 : vector<24x32xf32>
    %270 = arith.addf %269, %229 : vector<24x32xf32>
    %cst_160 = arith.constant dense<0.000000e+00> : vector<24x32xf32>
    %271 = tpu.matmul %1, %270, %cst_160 {dimension_numbers = #tpu.dot_dimension_numbers<[1], [0], [0], [1], [0, 0, 1, 1], [], []>} : vector<24x24xf32>, vector<24x32xf32>, vector<24x32xf32> -> vector<24x32xf32>
    %272 = arith.addf %271, %270 : vector<24x32xf32>
    %c1_161 = arith.constant 1 : index
    %c0_162 = arith.constant 0 : index
    %c0_163 = arith.constant 0 : index
    %273 = vector.load %arg10[%c1_161, %c0_162, %c0_163] : memref<2x32x64xf32, #tpu.memory_space<vmem>>, vector<1x32x64xf32>
    %274 = vector.shape_cast %273 : vector<1x32x64xf32> to vector<32x64xf32>
    %cst_164 = arith.constant dense<0.000000e+00> : vector<24x64xf32>
    %275 = tpu.matmul %272, %274, %cst_164 {dimension_numbers = #tpu.dot_dimension_numbers<[1], [0], [0], [1], [0, 0, 1, 1], [], []>} : vector<24x32xf32>, vector<32x64xf32>, vector<24x64xf32> -> vector<24x64xf32>
    %c1_165 = arith.constant 1 : index
    %c0_166 = arith.constant 0 : index
    %c0_167 = arith.constant 0 : index
    %276 = vector.load %arg11[%c1_165, %c0_166, %c0_167] : memref<2x1x64xf32, #tpu.memory_space<vmem>>, vector<1x1x64xf32>
    %277 = vector.shape_cast %276 : vector<1x1x64xf32> to vector<1x64xf32>
    %278 = vector.broadcast %277 : vector<1x64xf32> to vector<24x64xf32>
    %279 = arith.addf %275, %278 : vector<24x64xf32>
    %cst_168 = arith.constant dense<0.000000e+00> : vector<64xf32>
    %280 = vector.multi_reduction <add>, %279, %cst_168 [0] : vector<24x64xf32> to vector<64xf32>
    %281 = vector.shape_cast %280 : vector<64xf32> to vector<1x64xf32>
    %cst_169 = arith.constant 2.400000e+01 : f32
    %282 = vector.broadcast %cst_169 : f32 to vector<1x64xf32>
    %283 = arith.divf %281, %282 : vector<1x64xf32>
    %284 = arith.mulf %279, %279 : vector<24x64xf32>
    %cst_170 = arith.constant dense<0.000000e+00> : vector<64xf32>
    %285 = vector.multi_reduction <add>, %284, %cst_170 [0] : vector<24x64xf32> to vector<64xf32>
    %286 = vector.shape_cast %285 : vector<64xf32> to vector<1x64xf32>
    %cst_171 = arith.constant 2.400000e+01 : f32
    %287 = vector.broadcast %cst_171 : f32 to vector<1x64xf32>
    %288 = arith.divf %286, %287 : vector<1x64xf32>
    %289 = arith.mulf %283, %283 : vector<1x64xf32>
    %290 = arith.subf %288, %289 : vector<1x64xf32>
    %cst_172 = arith.constant 0.000000e+00 : f32
    %291 = vector.broadcast %cst_172 : f32 to vector<1x64xf32>
    %292 = arith.maximumf %290, %291 : vector<1x64xf32>
    %293 = vector.broadcast %283 : vector<1x64xf32> to vector<24x64xf32>
    %294 = arith.subf %279, %293 : vector<24x64xf32>
    %cst_173 = arith.constant 9.99999974E-6 : f32
    %295 = vector.broadcast %cst_173 : f32 to vector<1x64xf32>
    %296 = arith.addf %292, %295 : vector<1x64xf32>
    %297 = math.rsqrt %296 : vector<1x64xf32>
    %298 = vector.broadcast %297 : vector<1x64xf32> to vector<24x64xf32>
    %299 = arith.mulf %294, %298 : vector<24x64xf32>
    %cst_174 = arith.constant 0.000000e+00 : f32
    %300 = vector.broadcast %cst_174 : f32 to vector<24x64xf32>
    %301 = arith.maximumf %299, %300 : vector<24x64xf32>
    %c1_175 = arith.constant 1 : index
    %c0_176 = arith.constant 0 : index
    %c0_177 = arith.constant 0 : index
    %302 = vector.load %arg12[%c1_175, %c0_176, %c0_177] : memref<2x64x32xf32, #tpu.memory_space<vmem>>, vector<1x64x32xf32>
    %303 = vector.shape_cast %302 : vector<1x64x32xf32> to vector<64x32xf32>
    %cst_178 = arith.constant dense<0.000000e+00> : vector<24x32xf32>
    %304 = tpu.matmul %301, %303, %cst_178 {dimension_numbers = #tpu.dot_dimension_numbers<[1], [0], [0], [1], [0, 0, 1, 1], [], []>} : vector<24x64xf32>, vector<64x32xf32>, vector<24x32xf32> -> vector<24x32xf32>
    %c1_179 = arith.constant 1 : index
    %c0_180 = arith.constant 0 : index
    %c0_181 = arith.constant 0 : index
    %305 = vector.load %arg13[%c1_179, %c0_180, %c0_181] : memref<2x1x32xf32, #tpu.memory_space<vmem>>, vector<1x1x32xf32>
    %306 = vector.shape_cast %305 : vector<1x1x32xf32> to vector<1x32xf32>
    %307 = vector.broadcast %306 : vector<1x32xf32> to vector<24x32xf32>
    %308 = arith.addf %304, %307 : vector<24x32xf32>
    %309 = arith.addf %308, %270 : vector<24x32xf32>
    %c0_182 = arith.constant 0 : index
    %c0_183 = arith.constant 0 : index
    %310 = vector.load %arg14[%c0_182, %c0_183] : memref<32x64xf32, #tpu.memory_space<vmem>>, vector<32x64xf32>
    %cst_184 = arith.constant dense<0.000000e+00> : vector<24x64xf32>
    %311 = tpu.matmul %309, %310, %cst_184 {dimension_numbers = #tpu.dot_dimension_numbers<[1], [0], [0], [1], [0, 0, 1, 1], [], []>} : vector<24x32xf32>, vector<32x64xf32>, vector<24x64xf32> -> vector<24x64xf32>
    %c0_185 = arith.constant 0 : index
    %c0_186 = arith.constant 0 : index
    %312 = vector.load %arg15[%c0_185, %c0_186] : memref<1x64xf32, #tpu.memory_space<vmem>>, vector<1x64xf32>
    %313 = vector.broadcast %312 : vector<1x64xf32> to vector<24x64xf32>
    %314 = arith.addf %311, %313 : vector<24x64xf32>
    %cst_187 = arith.constant dense<0.000000e+00> : vector<64xf32>
    %315 = vector.multi_reduction <add>, %314, %cst_187 [0] : vector<24x64xf32> to vector<64xf32>
    %316 = vector.shape_cast %315 : vector<64xf32> to vector<1x64xf32>
    %cst_188 = arith.constant 2.400000e+01 : f32
    %317 = vector.broadcast %cst_188 : f32 to vector<1x64xf32>
    %318 = arith.divf %316, %317 : vector<1x64xf32>
    %319 = arith.mulf %314, %314 : vector<24x64xf32>
    %cst_189 = arith.constant dense<0.000000e+00> : vector<64xf32>
    %320 = vector.multi_reduction <add>, %319, %cst_189 [0] : vector<24x64xf32> to vector<64xf32>
    %321 = vector.shape_cast %320 : vector<64xf32> to vector<1x64xf32>
    %cst_190 = arith.constant 2.400000e+01 : f32
    %322 = vector.broadcast %cst_190 : f32 to vector<1x64xf32>
    %323 = arith.divf %321, %322 : vector<1x64xf32>
    %324 = arith.mulf %318, %318 : vector<1x64xf32>
    %325 = arith.subf %323, %324 : vector<1x64xf32>
    %cst_191 = arith.constant 0.000000e+00 : f32
    %326 = vector.broadcast %cst_191 : f32 to vector<1x64xf32>
    %327 = arith.maximumf %325, %326 : vector<1x64xf32>
    %328 = vector.broadcast %318 : vector<1x64xf32> to vector<24x64xf32>
    %329 = arith.subf %314, %328 : vector<24x64xf32>
    %cst_192 = arith.constant 9.99999974E-6 : f32
    %330 = vector.broadcast %cst_192 : f32 to vector<1x64xf32>
    %331 = arith.addf %327, %330 : vector<1x64xf32>
    %332 = math.rsqrt %331 : vector<1x64xf32>
    %333 = vector.broadcast %332 : vector<1x64xf32> to vector<24x64xf32>
    %334 = arith.mulf %329, %333 : vector<24x64xf32>
    %cst_193 = arith.constant 0.000000e+00 : f32
    %335 = vector.broadcast %cst_193 : f32 to vector<24x64xf32>
    %336 = arith.maximumf %334, %335 : vector<24x64xf32>
    %c0_194 = arith.constant 0 : index
    %c0_195 = arith.constant 0 : index
    %337 = vector.load %arg16[%c0_194, %c0_195] : memref<64x2xf32, #tpu.memory_space<vmem>>, vector<64x2xf32>
    %cst_196 = arith.constant dense<0.000000e+00> : vector<24x2xf32>
    %338 = tpu.matmul %336, %337, %cst_196 {dimension_numbers = #tpu.dot_dimension_numbers<[1], [0], [0], [1], [0, 0, 1, 1], [], []>} : vector<24x64xf32>, vector<64x2xf32>, vector<24x2xf32> -> vector<24x2xf32>
    %c0_197 = arith.constant 0 : index
    %c0_198 = arith.constant 0 : index
    %339 = vector.load %arg17[%c0_197, %c0_198] : memref<1x2xf32, #tpu.memory_space<vmem>>, vector<1x2xf32>
    %340 = vector.broadcast %339 : vector<1x2xf32> to vector<24x2xf32>
    %341 = arith.addf %338, %340 : vector<24x2xf32>
    %c0_199 = arith.constant 0 : index
    %c0_200 = arith.constant 0 : index
    %342 = vector.load %arg22[%c0_199, %c0_200] : memref<24x2xf32, #tpu.memory_space<vmem>>, vector<24x2xf32>
    %343 = arith.addf %341, %342 : vector<24x2xf32>
    %344 = vector.extract_strided_slice %343 {offsets = [0, 1], sizes = [24, 1], strides = [1, 1]} : vector<24x2xf32> to vector<24x1xf32>
    %345 = vector.extract_strided_slice %343 {offsets = [0, 0], sizes = [24, 1], strides = [1, 1]} : vector<24x2xf32> to vector<24x1xf32>
    %346 = arith.subf %344, %345 : vector<24x1xf32>
    %cst_201 = arith.constant 0.000000e+00 : f32
    %347 = vector.broadcast %cst_201 : f32 to vector<24x1xf32>
    %348 = arith.subf %347, %346 : vector<24x1xf32>
    %349 = math.exp %348 : vector<24x1xf32>
    %cst_202 = arith.constant 1.000000e+00 : f32
    %350 = vector.broadcast %cst_202 : f32 to vector<24x1xf32>
    %351 = arith.addf %350, %349 : vector<24x1xf32>
    %cst_203 = arith.constant 1.000000e+00 : f32
    %352 = vector.broadcast %cst_203 : f32 to vector<24x1xf32>
    %353 = arith.divf %352, %351 : vector<24x1xf32>
    %c0_204 = arith.constant 0 : index
    %c0_205 = arith.constant 0 : index
    %354 = vector.load %arg23[%c0_204, %c0_205] : memref<4x24xf32, #tpu.memory_space<vmem>>, vector<4x24xf32>
    %c0_206 = arith.constant 0 : index
    %c0_207 = arith.constant 0 : index
    %355 = vector.load %arg24[%c0_206, %c0_207] : memref<4x1xf32, #tpu.memory_space<vmem>>, vector<4x1xf32>
    %356 = vector.broadcast %353 : vector<24x1xf32> to vector<24x32xf32>
    %357 = arith.mulf %356, %221 : vector<24x32xf32>
    %cst_208 = arith.constant dense<0.000000e+00> : vector<4x32xf32>
    %358 = tpu.matmul %354, %357, %cst_208 {dimension_numbers = #tpu.dot_dimension_numbers<[1], [0], [0], [1], [0, 0, 1, 1], [], []>} : vector<4x24xf32>, vector<24x32xf32>, vector<4x32xf32> -> vector<4x32xf32>
    %cst_209 = arith.constant dense<0.000000e+00> : vector<4x32xf32>
    %359 = tpu.matmul %354, %221, %cst_209 {dimension_numbers = #tpu.dot_dimension_numbers<[1], [0], [0], [1], [0, 0, 1, 1], [], []>} : vector<4x24xf32>, vector<24x32xf32>, vector<4x32xf32> -> vector<4x32xf32>
    %360 = arith.subf %359, %358 : vector<4x32xf32>
    %361 = vector.broadcast %355 : vector<4x1xf32> to vector<4x24xf32>
    %362 = arith.mulf %354, %361 : vector<4x24xf32>
    %cst_210 = arith.constant dense<0.000000e+00> : vector<4x1xf32>
    %363 = tpu.matmul %362, %353, %cst_210 {dimension_numbers = #tpu.dot_dimension_numbers<[1], [0], [0], [1], [0, 0, 1, 1], [], []>} : vector<4x24xf32>, vector<24x1xf32>, vector<4x1xf32> -> vector<4x1xf32>
    %cst_211 = arith.constant 9.99999993E-9 : f32
    %364 = vector.broadcast %cst_211 : f32 to vector<4x1xf32>
    %365 = arith.addf %363, %364 : vector<4x1xf32>
    %cst_212 = arith.constant 2.000000e-08 : f32
    %366 = vector.broadcast %cst_212 : f32 to vector<4x1xf32>
    %367 = arith.addf %355, %366 : vector<4x1xf32>
    %368 = tpu.reciprocal %367 {approx = true} : vector<4x1xf32> -> vector<4x1xf32>
    %369 = arith.mulf %365, %368 : vector<4x1xf32>
    %cst_213 = arith.constant 4.000000e-01 : f32
    %370 = vector.broadcast %cst_213 : f32 to vector<4x1xf32>
    %371 = arith.subf %369, %370 : vector<4x1xf32>
    %372 = math.absf %371 : vector<4x1xf32>
    %373 = vector.shape_cast %372 : vector<4x1xf32> to vector<1x4x1xf32>
    %cst_214 = arith.constant dense<0.000000e+00> : vector<1xf32>
    %374 = vector.multi_reduction <add>, %373, %cst_214 [1, 2] : vector<1x4x1xf32> to vector<1xf32>
    %375 = vector.shape_cast %374 : vector<1xf32> to vector<1x1x1xf32>
    %376 = vector.extract %375[0, 0, 0] : f32 from vector<1x1x1xf32>
    %cst_215 = arith.constant 4.000000e+00 : f32
    %377 = arith.divf %376, %cst_215 : f32
    %cst_216 = arith.constant 1.000000e+00 : f32
    %378 = vector.broadcast %cst_216 : f32 to vector<24x1xf32>
    %379 = arith.subf %378, %353 : vector<24x1xf32>
    %c0_217 = arith.constant 0 : index
    %c0_218 = arith.constant 0 : index
    %c0_219 = arith.constant 0 : index
    %380 = vector.load %arg29[%c0_217, %c0_218, %c0_219] : memref<5x24x32xf32, #tpu.memory_space<vmem>>, vector<5x24x32xf32>
    %381 = vector.shape_cast %379 : vector<24x1xf32> to vector<1x24x1xf32>
    %382 = vector.broadcast %381 : vector<1x24x1xf32> to vector<5x24x32xf32>
    %383 = arith.mulf %382, %380 : vector<5x24x32xf32>
    %c0_220 = arith.constant 0 : index
    %c0_221 = arith.constant 0 : index
    %c0_222 = arith.constant 0 : index
    %384 = vector.load %arg25[%c0_220, %c0_221, %c0_222] : memref<5x4x24xf32, #tpu.memory_space<vmem>>, vector<5x4x24xf32>
    "tpu.trace_start"() <{level = 10 : i32, message = "lgn,lnd->lgd"}> : () -> ()
    %cst_223 = arith.constant dense<0.000000e+00> : vector<5x4x32xf32>
    %385 = tpu.matmul %384, %383, %cst_223 {dimension_numbers = #tpu.dot_dimension_numbers<[2], [1], [1], [2], [0, 0, 0, 1, 1, 2], [0], [0]>} : vector<5x4x24xf32>, vector<5x24x32xf32>, vector<5x4x32xf32> -> vector<5x4x32xf32>
    "tpu.trace_stop"() : () -> ()
    %c0_224 = arith.constant 0 : index
    %c0_225 = arith.constant 0 : index
    %386 = vector.load %arg30[%c0_224, %c0_225] : memref<24x32xf32, #tpu.memory_space<vmem>>, vector<4x32xf32>
    tpu.vector_store %arg30[%c0_224, %c0_225], %358 {strides = array<i32>} : memref<24x32xf32, #tpu.memory_space<vmem>>, vector<4x32xf32>,
    %387 = vector.extract_strided_slice %385 {offsets = [0, 0, 0], sizes = [1, 4, 32], strides = [1, 1, 1]} : vector<5x4x32xf32> to vector<1x4x32xf32>
    %388 = vector.shape_cast %387 : vector<1x4x32xf32> to vector<4x32xf32>
    %389 = arith.addf %358, %388 : vector<4x32xf32>
    %c4_226 = arith.constant 4 : index
    %c0_227 = arith.constant 0 : index
    %390 = vector.load %arg30[%c4_226, %c0_227] : memref<24x32xf32, #tpu.memory_space<vmem>>, vector<4x32xf32>
    tpu.vector_store %arg30[%c4_226, %c0_227], %389 {strides = array<i32>} : memref<24x32xf32, #tpu.memory_space<vmem>>, vector<4x32xf32>,
    %391 = vector.extract_strided_slice %385 {offsets = [1, 0, 0], sizes = [1, 4, 32], strides = [1, 1, 1]} : vector<5x4x32xf32> to vector<1x4x32xf32>
    %392 = vector.shape_cast %391 : vector<1x4x32xf32> to vector<4x32xf32>
    %393 = arith.addf %358, %392 : vector<4x32xf32>
    %c8 = arith.constant 8 : index
    %c0_228 = arith.constant 0 : index
    %394 = vector.load %arg30[%c8, %c0_228] : memref<24x32xf32, #tpu.memory_space<vmem>>, vector<4x32xf32>
    tpu.vector_store %arg30[%c8, %c0_228], %393 {strides = array<i32>} : memref<24x32xf32, #tpu.memory_space<vmem>>, vector<4x32xf32>,
    %395 = vector.extract_strided_slice %385 {offsets = [2, 0, 0], sizes = [1, 4, 32], strides = [1, 1, 1]} : vector<5x4x32xf32> to vector<1x4x32xf32>
    %396 = vector.shape_cast %395 : vector<1x4x32xf32> to vector<4x32xf32>
    %397 = arith.addf %358, %396 : vector<4x32xf32>
    %c12 = arith.constant 12 : index
    %c0_229 = arith.constant 0 : index
    %398 = vector.load %arg30[%c12, %c0_229] : memref<24x32xf32, #tpu.memory_space<vmem>>, vector<4x32xf32>
    tpu.vector_store %arg30[%c12, %c0_229], %397 {strides = array<i32>} : memref<24x32xf32, #tpu.memory_space<vmem>>, vector<4x32xf32>,
    %399 = vector.extract_strided_slice %385 {offsets = [3, 0, 0], sizes = [1, 4, 32], strides = [1, 1, 1]} : vector<5x4x32xf32> to vector<1x4x32xf32>
    %400 = vector.shape_cast %399 : vector<1x4x32xf32> to vector<4x32xf32>
    %401 = arith.addf %358, %400 : vector<4x32xf32>
    %c16 = arith.constant 16 : index
    %c0_230 = arith.constant 0 : index
    %402 = vector.load %arg30[%c16, %c0_230] : memref<24x32xf32, #tpu.memory_space<vmem>>, vector<4x32xf32>
    tpu.vector_store %arg30[%c16, %c0_230], %401 {strides = array<i32>} : memref<24x32xf32, #tpu.memory_space<vmem>>, vector<4x32xf32>,
    %403 = vector.extract_strided_slice %385 {offsets = [4, 0, 0], sizes = [1, 4, 32], strides = [1, 1, 1]} : vector<5x4x32xf32> to vector<1x4x32xf32>
    %404 = vector.shape_cast %403 : vector<1x4x32xf32> to vector<4x32xf32>
    %405 = arith.addf %358, %404 : vector<4x32xf32>
    %c20 = arith.constant 20 : index
    %c0_231 = arith.constant 0 : index
    %406 = vector.load %arg30[%c20, %c0_231] : memref<24x32xf32, #tpu.memory_space<vmem>>, vector<4x32xf32>
    tpu.vector_store %arg30[%c20, %c0_231], %405 {strides = array<i32>} : memref<24x32xf32, #tpu.memory_space<vmem>>, vector<4x32xf32>,
    %c0_232 = arith.constant 0 : index
    %c0_233 = arith.constant 0 : index
    %407 = vector.load %arg30[%c0_232, %c0_233] : memref<24x32xf32, #tpu.memory_space<vmem>>, vector<24x32xf32>
    %c0_234 = arith.constant 0 : index
    %c0_235 = arith.constant 0 : index
    %408 = vector.load %arg18[%c0_234, %c0_235] : memref<32x64xf32, #tpu.memory_space<vmem>>, vector<32x64xf32>
    %cst_236 = arith.constant dense<0.000000e+00> : vector<24x64xf32>
    %409 = tpu.matmul %407, %408, %cst_236 {dimension_numbers = #tpu.dot_dimension_numbers<[1], [0], [0], [1], [0, 0, 1, 1], [], []>} : vector<24x32xf32>, vector<32x64xf32>, vector<24x64xf32> -> vector<24x64xf32>
    %c0_237 = arith.constant 0 : index
    %c0_238 = arith.constant 0 : index
    %410 = vector.load %arg19[%c0_237, %c0_238] : memref<1x64xf32, #tpu.memory_space<vmem>>, vector<1x64xf32>
    %411 = vector.broadcast %410 : vector<1x64xf32> to vector<24x64xf32>
    %412 = arith.addf %409, %411 : vector<24x64xf32>
    %c0_239 = arith.constant 0 : index
    %c0_240 = arith.constant 0 : index
    %413 = vector.load %arg26[%c0_239, %c0_240] : memref<24x24xf32, #tpu.memory_space<vmem>>, vector<24x24xf32>
    %cst_241 = arith.constant dense<0.000000e+00> : vector<24x64xf32>
    %414 = tpu.matmul %413, %412, %cst_241 {dimension_numbers = #tpu.dot_dimension_numbers<[1], [0], [0], [1], [0, 0, 1, 1], [], []>} : vector<24x24xf32>, vector<24x64xf32>, vector<24x64xf32> -> vector<24x64xf32>
    %415 = arith.mulf %412, %412 : vector<24x64xf32>
    %cst_242 = arith.constant dense<0.000000e+00> : vector<24x64xf32>
    %416 = tpu.matmul %413, %415, %cst_242 {dimension_numbers = #tpu.dot_dimension_numbers<[1], [0], [0], [1], [0, 0, 1, 1], [], []>} : vector<24x24xf32>, vector<24x64xf32>, vector<24x64xf32> -> vector<24x64xf32>
    %417 = arith.mulf %414, %414 : vector<24x64xf32>
    %418 = arith.subf %416, %417 : vector<24x64xf32>
    %cst_243 = arith.constant 0.000000e+00 : f32
    %419 = vector.broadcast %cst_243 : f32 to vector<24x64xf32>
    %420 = arith.maximumf %418, %419 : vector<24x64xf32>
    %421 = arith.subf %412, %414 : vector<24x64xf32>
    %cst_244 = arith.constant 9.99999974E-6 : f32
    %422 = vector.broadcast %cst_244 : f32 to vector<24x64xf32>
    %423 = arith.addf %420, %422 : vector<24x64xf32>
    %424 = math.rsqrt %423 : vector<24x64xf32>
    %425 = arith.mulf %421, %424 : vector<24x64xf32>
    %cst_245 = arith.constant 0.000000e+00 : f32
    %426 = vector.broadcast %cst_245 : f32 to vector<24x64xf32>
    %427 = arith.maximumf %425, %426 : vector<24x64xf32>
    %c0_246 = arith.constant 0 : index
    %c0_247 = arith.constant 0 : index
    %428 = vector.load %arg20[%c0_246, %c0_247] : memref<64x128xf32, #tpu.memory_space<vmem>>, vector<64x128xf32>
    %cst_248 = arith.constant dense<0.000000e+00> : vector<24x128xf32>
    %429 = tpu.matmul %427, %428, %cst_248 {dimension_numbers = #tpu.dot_dimension_numbers<[1], [0], [0], [1], [0, 0, 1, 1], [], []>} : vector<24x64xf32>, vector<64x128xf32>, vector<24x128xf32> -> vector<24x128xf32>
    %c0_249 = arith.constant 0 : index
    %c0_250 = arith.constant 0 : index
    %430 = vector.load %arg21[%c0_249, %c0_250] : memref<1x128xf32, #tpu.memory_space<vmem>>, vector<1x128xf32>
    %431 = vector.broadcast %430 : vector<1x128xf32> to vector<24x128xf32>
    %432 = arith.addf %429, %431 : vector<24x128xf32>
    %c0_251 = arith.constant 0 : index
    %c0_252 = arith.constant 0 : index
    %433 = vector.load %arg27[%c0_251, %c0_252] : memref<24x128xf32, #tpu.memory_space<vmem>>, vector<24x128xf32>
    tpu.vector_store %arg27[%c0_251, %c0_252], %432 {strides = array<i32>} : memref<24x128xf32, #tpu.memory_space<vmem>>, vector<24x128xf32>,
    %434 = arith.addf %358, %360 : vector<4x32xf32>
    %435 = arith.mulf %358, %358 : vector<4x32xf32>
    %cst_253 = arith.constant dense<0.000000e+00> : vector<4xf32>
    %436 = vector.multi_reduction <add>, %435, %cst_253 [1] : vector<4x32xf32> to vector<4xf32>
    %437 = vector.shape_cast %436 : vector<4xf32> to vector<4x1xf32>
    %438 = math.sqrt %437 : vector<4x1xf32>
    %439 = arith.mulf %434, %434 : vector<4x32xf32>
    %cst_254 = arith.constant dense<0.000000e+00> : vector<4xf32>
    %440 = vector.multi_reduction <add>, %439, %cst_254 [1] : vector<4x32xf32> to vector<4xf32>
    %441 = vector.shape_cast %440 : vector<4xf32> to vector<4x1xf32>
    %442 = math.sqrt %441 : vector<4x1xf32>
    %443 = arith.mulf %360, %360 : vector<4x32xf32>
    %cst_255 = arith.constant dense<0.000000e+00> : vector<4xf32>
    %444 = vector.multi_reduction <add>, %443, %cst_255 [1] : vector<4x32xf32> to vector<4xf32>
    %445 = vector.shape_cast %444 : vector<4xf32> to vector<4x1xf32>
    %446 = math.sqrt %445 : vector<4x1xf32>
    %cst_256 = arith.constant dense<0.000000e+00> : vector<4x4xf32>
    %447 = tpu.matmul %358, %434, %cst_256 {dimension_numbers = #tpu.dot_dimension_numbers<[1], [1], [0], [0], [0, 0, 1, 0], [], []>} : vector<4x32xf32>, vector<4x32xf32>, vector<4x4xf32> -> vector<4x4xf32>
    %cst_257 = arith.constant dense<0.000000e+00> : vector<4x4xf32>
    %448 = tpu.matmul %438, %442, %cst_257 {dimension_numbers = #tpu.dot_dimension_numbers<[1], [1], [0], [0], [0, 0, 1, 0], [], []>} : vector<4x1xf32>, vector<4x1xf32>, vector<4x4xf32> -> vector<4x4xf32>
    %cst_258 = arith.constant 9.99999993E-9 : f32
    %449 = vector.broadcast %cst_258 : f32 to vector<4x4xf32>
    %450 = arith.addf %448, %449 : vector<4x4xf32>
    %451 = tpu.reciprocal %450 {approx = true} : vector<4x4xf32> -> vector<4x4xf32>
    %452 = arith.mulf %447, %451 : vector<4x4xf32>
    %cst_259 = arith.constant 5.000000e+00 : f32
    %453 = vector.broadcast %cst_259 : f32 to vector<4x4xf32>
    %454 = arith.mulf %452, %453 : vector<4x4xf32>
    %455 = math.exp %454 : vector<4x4xf32>
    %cst_260 = arith.constant dense<0.000000e+00> : vector<4x4xf32>
    %456 = tpu.matmul %358, %360, %cst_260 {dimension_numbers = #tpu.dot_dimension_numbers<[1], [1], [0], [0], [0, 0, 1, 0], [], []>} : vector<4x32xf32>, vector<4x32xf32>, vector<4x4xf32> -> vector<4x4xf32>
    %cst_261 = arith.constant dense<0.000000e+00> : vector<4x4xf32>
    %457 = tpu.matmul %438, %446, %cst_261 {dimension_numbers = #tpu.dot_dimension_numbers<[1], [1], [0], [0], [0, 0, 1, 0], [], []>} : vector<4x1xf32>, vector<4x1xf32>, vector<4x4xf32> -> vector<4x4xf32>
    %cst_262 = arith.constant 9.99999993E-9 : f32
    %458 = vector.broadcast %cst_262 : f32 to vector<4x4xf32>
    %459 = arith.addf %457, %458 : vector<4x4xf32>
    %460 = tpu.reciprocal %459 {approx = true} : vector<4x4xf32> -> vector<4x4xf32>
    %461 = arith.mulf %456, %460 : vector<4x4xf32>
    %cst_263 = arith.constant 5.000000e+00 : f32
    %462 = vector.broadcast %cst_263 : f32 to vector<4x4xf32>
    %463 = arith.mulf %461, %462 : vector<4x4xf32>
    %464 = math.exp %463 : vector<4x4xf32>
    %465 = tpu.iota {dimensions = array<i32: 0>} : vector<4x4xi32>
    %466 = tpu.iota {dimensions = array<i32: 1>} : vector<4x4xi32>
    %467 = arith.cmpi eq, %465, %466 : vector<4x4xi32>
    %cst_264 = arith.constant 0.000000e+00 : f32
    %468 = vector.broadcast %cst_264 : f32 to vector<4x4xf32>
    %469 = arith.select %467, %455, %468 : vector<4x4xi1>, vector<4x4xf32>
    %cst_265 = arith.constant dense<0.000000e+00> : vector<4xf32>
    %470 = vector.multi_reduction <add>, %469, %cst_265 [1] : vector<4x4xf32> to vector<4xf32>
    %471 = vector.shape_cast %470 : vector<4xf32> to vector<4x1xf32>
    %cst_266 = arith.constant dense<0.000000e+00> : vector<4xf32>
    %472 = vector.multi_reduction <add>, %464, %cst_266 [1] : vector<4x4xf32> to vector<4xf32>
    %473 = vector.shape_cast %472 : vector<4xf32> to vector<4x1xf32>
    %474 = arith.addf %473, %471 : vector<4x1xf32>
    %475 = tpu.reciprocal %474 {approx = true} : vector<4x1xf32> -> vector<4x1xf32>
    %476 = arith.mulf %471, %475 : vector<4x1xf32>
    %477 = math.log %476 : vector<4x1xf32>
    %478 = vector.shape_cast %477 : vector<4x1xf32> to vector<1x4x1xf32>
    %cst_267 = arith.constant dense<0.000000e+00> : vector<1xf32>
    %479 = vector.multi_reduction <add>, %478, %cst_267 [1, 2] : vector<1x4x1xf32> to vector<1xf32>
    %480 = vector.shape_cast %479 : vector<1xf32> to vector<1x1x1xf32>
    %481 = vector.extract %480[0, 0, 0] : f32 from vector<1x1x1xf32>
    %cst_268 = arith.constant 4.000000e+00 : f32
    %482 = arith.divf %481, %cst_268 : f32
    %cst_269 = arith.constant 0.000000e+00 : f32
    %483 = arith.subf %cst_269, %482 : f32
    %484 = tpu.iota {dimensions = array<i32: 1>} : vector<1x128xi32>
    %c0_i32 = arith.constant 0 : i32
    %485 = vector.broadcast %c0_i32 : i32 to vector<1x128xi32>
    %486 = arith.cmpi eq, %484, %485 : vector<1x128xi32>
    %cst_270 = arith.constant 0.000000e+00 : f32
    %487 = vector.broadcast %377 : f32 to vector<1x128xf32>
    %488 = vector.broadcast %cst_270 : f32 to vector<1x128xf32>
    %489 = arith.select %486, %487, %488 : vector<1x128xi1>, vector<1x128xf32>
    %c1_i32 = arith.constant 1 : i32
    %490 = vector.broadcast %c1_i32 : i32 to vector<1x128xi32>
    %491 = arith.cmpi eq, %484, %490 : vector<1x128xi32>
    %cst_271 = arith.constant 0.000000e+00 : f32
    %492 = vector.broadcast %483 : f32 to vector<1x128xf32>
    %493 = vector.broadcast %cst_271 : f32 to vector<1x128xf32>
    %494 = arith.select %491, %492, %493 : vector<1x128xi1>, vector<1x128xf32>
    %495 = arith.addf %489, %494 : vector<1x128xf32>
    %c0_272 = arith.constant 0 : index
    %c0_273 = arith.constant 0 : index
    %496 = vector.load %arg28[%c0_272, %c0_273] : memref<1x128xf32, #tpu.memory_space<vmem>>, vector<1x128xf32>
    tpu.vector_store %arg28[%c0_272, %c0_273], %495 {strides = array<i32>} : memref<1x128xf32, #tpu.memory_space<vmem>>, vector<1x128xf32>,
    return
  }
}

</mosaic_0001>

<llo_original>
// kernel: car_forward.3
$region0: #{car_forward.3}
  #allocation0 [shape = 'u32[]', space=smem, size = 0x4, offset = 0x4, fixed_abs, tag = 'smem constant byte address 0x4 - core index']
  #allocation1 [shape = 'u32[144,128]{1,0:T(1,128)}', space=vmem, size = 0x12000, scoped, tag = 'internal scratch']
  #allocation2 [shape = 'f32[5,24,32]{2,1,0:T(8,128)}', space=vmem, size = 0xf000, scoped, tag = 'scratch operand']
  #allocation3 [shape = 'f32[24,32]{1,0:T(8,128)}', space=vmem, size = 0x3000, scoped, tag = 'scratch operand']
  %s0 = inlined_call_operand.vmem [shape: f32[24,8], index: 0, kind: input, shape index: {}]
  %s1 = inlined_call_operand.vmem [shape: f32[24,24], index: 1, kind: input, shape index: {}]
  %s2 = inlined_call_operand.vmem [shape: f32[8,32], index: 2, kind: input, shape index: {}]
  %s3 = inlined_call_operand.vmem [shape: f32[1,32], index: 3, kind: input, shape index: {}]
  %s4 = inlined_call_operand.vmem [shape: f32[5,32,64], index: 4, kind: input, shape index: {}]
  %s5 = inlined_call_operand.vmem [shape: f32[5,1,64], index: 5, kind: input, shape index: {}]
  %s6 = inlined_call_operand.vmem [shape: f32[5,64,32], index: 6, kind: input, shape index: {}]
  %s7 = inlined_call_operand.vmem [shape: f32[5,1,32], index: 7, kind: input, shape index: {}]
  %s8 = inlined_call_operand.vmem [shape: f32[8,32], index: 8, kind: input, shape index: {}]
  %s9 = inlined_call_operand.vmem [shape: f32[1,32], index: 9, kind: input, shape index: {}]
  %s10 = inlined_call_operand.vmem [shape: f32[2,32,64], index: 10, kind: input, shape index: {}]
  %s11 = inlined_call_operand.vmem [shape: f32[2,1,64], index: 11, kind: input, shape index: {}]
  %s12 = inlined_call_operand.vmem [shape: f32[2,64,32], index: 12, kind: input, shape index: {}]
  %s13 = inlined_call_operand.vmem [shape: f32[2,1,32], index: 13, kind: input, shape index: {}]
  %s14 = inlined_call_operand.vmem [shape: f32[32,64], index: 14, kind: input, shape index: {}]
  %s15 = inlined_call_operand.vmem [shape: f32[1,64], index: 15, kind: input, shape index: {}]
  %s16 = inlined_call_operand.vmem [shape: f32[64,2], index: 16, kind: input, shape index: {}]
  %s17 = inlined_call_operand.vmem [shape: f32[1,2], index: 17, kind: input, shape index: {}]
  %s18 = inlined_call_operand.vmem [shape: f32[32,64], index: 18, kind: input, shape index: {}]
  %s19 = inlined_call_operand.vmem [shape: f32[1,64], index: 19, kind: input, shape index: {}]
  %s20 = inlined_call_operand.vmem [shape: f32[64,128], index: 20, kind: input, shape index: {}]
  %s21 = inlined_call_operand.vmem [shape: f32[1,128], index: 21, kind: input, shape index: {}]
  %s22 = inlined_call_operand.vmem [shape: f32[24,2], index: 22, kind: input, shape index: {}]
  %s23 = inlined_call_operand.vmem [shape: f32[4,24], index: 23, kind: input, shape index: {}]
  %s24 = inlined_call_operand.vmem [shape: f32[4,1], index: 24, kind: input, shape index: {}]
  %s25 = inlined_call_operand.vmem [shape: f32[5,4,24], index: 25, kind: input, shape index: {}]
  %s26 = inlined_call_operand.vmem [shape: f32[24,24], index: 26, kind: input, shape index: {}]
  %s27 = inlined_call_operand.vmem [shape: f32[24,128], index: 27, kind: output, shape index: {0}]
  %s28 = inlined_call_operand.vmem [shape: f32[1,128], index: 28, kind: output, shape index: {1}]
  %29 = xla_tuple %s27, %s28
  %s30 = sld [smem:[#allocation0]]
  $region126: #{car_forward.3} parent=0
    _
  %s32 = ssub.s32 1, %s30
  %s33 = scalar_select 0, %s32, %s30
  // Predicated region
  $region2: #{car_forward.3} parent=0 // pred_check
    _
  $region3: #{car_forward.3} parent=0 // pred_check_branch
    %35 = sbr.rel (0) target = $region5
  $region4: #{car_forward.3} parent=0 // pred_region
    _
  $region5: #{car_forward.3} parent=0 // pred_fallthru
    _
  // Predicated region
  $region6: #{car_forward.3} parent=0 // pred_check
    _
  $region7: #{car_forward.3} parent=0 // pred_check_branch
    %37 = sbr.rel (0) target = $region9
  $region8: #{car_forward.3} parent=0 // pred_region
    _
  $region9: #{car_forward.3} parent=0 // pred_fallthru
    _
  // Predicated region
  $region10: #{car_forward.3} parent=0 // pred_check
    _
  $region11: #{car_forward.3} parent=0 // pred_check_branch
    %39 = sbr.rel (0) target = $region13
  $region12: #{car_forward.3} parent=0 // pred_region
    _
  $region13: #{car_forward.3} parent=0 // pred_fallthru
    _
  // Predicated region
  $region14: #{car_forward.3} parent=0 // pred_check
    _
  $region15: #{car_forward.3} parent=0 // pred_check_branch
    %41 = sbr.rel (0) target = $region17
  $region16: #{car_forward.3} parent=0 // pred_region
    _
  $region17: #{car_forward.3} parent=0 // pred_fallthru
    _
  // Predicated region
  $region18: #{car_forward.3} parent=0 // pred_check
    _
  $region19: #{car_forward.3} parent=0 // pred_check_branch
    %43 = sbr.rel (0) target = $region21
  $region20: #{car_forward.3} parent=0 // pred_region
    _
  $region21: #{car_forward.3} parent=0 // pred_fallthru
    _
  // Predicated region
  $region22: #{car_forward.3} parent=0 // pred_check
    _
  $region23: #{car_forward.3} parent=0 // pred_check_branch
    %45 = sbr.rel (0) target = $region25
  $region24: #{car_forward.3} parent=0 // pred_region
    _
  $region25: #{car_forward.3} parent=0 // pred_fallthru
    _
  // Predicated region
  $region26: #{car_forward.3} parent=0 // pred_check
    _
  $region27: #{car_forward.3} parent=0 // pred_check_branch
    %47 = sbr.rel (0) target = $region29
  $region28: #{car_forward.3} parent=0 // pred_region
    _
  $region29: #{car_forward.3} parent=0 // pred_fallthru
    _
  // Predicated region
  $region30: #{car_forward.3} parent=0 // pred_check
    _
  $region31: #{car_forward.3} parent=0 // pred_check_branch
    %49 = sbr.rel (0) target = $region33
  $region32: #{car_forward.3} parent=0 // pred_region
    _
  $region33: #{car_forward.3} parent=0 // pred_fallthru
    _
  // Predicated region
  $region34: #{car_forward.3} parent=0 // pred_check
    _
  $region35: #{car_forward.3} parent=0 // pred_check_branch
    %51 = sbr.rel (0) target = $region37
  $region36: #{car_forward.3} parent=0 // pred_region
    _
  $region37: #{car_forward.3} parent=0 // pred_fallthru
    _
  // Predicated region
  $region38: #{car_forward.3} parent=0 // pred_check
    _
  $region39: #{car_forward.3} parent=0 // pred_check_branch
    %53 = sbr.rel (0) target = $region41
  $region40: #{car_forward.3} parent=0 // pred_region
    _
  $region41: #{car_forward.3} parent=0 // pred_fallthru
    _
  // Predicated region
  $region42: #{car_forward.3} parent=0 // pred_check
    _
  $region43: #{car_forward.3} parent=0 // pred_check_branch
    %55 = sbr.rel (0) target = $region45
  $region44: #{car_forward.3} parent=0 // pred_region
    _
  $region45: #{car_forward.3} parent=0 // pred_fallthru
    _
  // Predicated region
  $region46: #{car_forward.3} parent=0 // pred_check
    _
  $region47: #{car_forward.3} parent=0 // pred_check_branch
    %57 = sbr.rel (0) target = $region49
  $region48: #{car_forward.3} parent=0 // pred_region
    _
  $region49: #{car_forward.3} parent=0 // pred_fallthru
    _
  // Predicated region
  $region50: #{car_forward.3} parent=0 // pred_check
    _
  $region51: #{car_forward.3} parent=0 // pred_check_branch
    %59 = sbr.rel (0) target = $region53
  $region52: #{car_forward.3} parent=0 // pred_region
    _
  $region53: #{car_forward.3} parent=0 // pred_fallthru
    _
  // Predicated region
  $region54: #{car_forward.3} parent=0 // pred_check
    _
  $region55: #{car_forward.3} parent=0 // pred_check_branch
    %61 = sbr.rel (0) target = $region57
  $region56: #{car_forward.3} parent=0 // pred_region
    _
  $region57: #{car_forward.3} parent=0 // pred_fallthru
    _
  // Predicated region
  $region58: #{car_forward.3} parent=0 // pred_check
    _
  $region59: #{car_forward.3} parent=0 // pred_check_branch
    %63 = sbr.rel (0) target = $region61
  $region60: #{car_forward.3} parent=0 // pred_region
    _
  $region61: #{car_forward.3} parent=0 // pred_fallthru
    _
  // Predicated region
  $region62: #{car_forward.3} parent=0 // pred_check
    _
  $region63: #{car_forward.3} parent=0 // pred_check_branch
    %65 = sbr.rel (0) target = $region65
  $region64: #{car_forward.3} parent=0 // pred_region
    _
  $region65: #{car_forward.3} parent=0 // pred_fallthru
    _
  // Predicated region
  $region66: #{car_forward.3} parent=0 // pred_check
    _
  $region67: #{car_forward.3} parent=0 // pred_check_branch
    %67 = sbr.rel (0) target = $region69
  $region68: #{car_forward.3} parent=0 // pred_region
    _
  $region69: #{car_forward.3} parent=0 // pred_fallthru
    _
  // Predicated region
  $region70: #{car_forward.3} parent=0 // pred_check
    _
  $region71: #{car_forward.3} parent=0 // pred_check_branch
    %69 = sbr.rel (0) target = $region73
  $region72: #{car_forward.3} parent=0 // pred_region
    _
  $region73: #{car_forward.3} parent=0 // pred_fallthru
    _
  // Predicated region
  $region74: #{car_forward.3} parent=0 // pred_check
    _
  $region75: #{car_forward.3} parent=0 // pred_check_branch
    %71 = sbr.rel (0) target = $region77
  $region76: #{car_forward.3} parent=0 // pred_region
    _
  $region77: #{car_forward.3} parent=0 // pred_fallthru
    _
  // Predicated region
  $region78: #{car_forward.3} parent=0 // pred_check
    _
  $region79: #{car_forward.3} parent=0 // pred_check_branch
    %73 = sbr.rel (0) target = $region81
  $region80: #{car_forward.3} parent=0 // pred_region
    _
  $region81: #{car_forward.3} parent=0 // pred_fallthru
    _
  // Predicated region
  $region82: #{car_forward.3} parent=0 // pred_check
    _
  $region83: #{car_forward.3} parent=0 // pred_check_branch
    %75 = sbr.rel (0) target = $region85
  $region84: #{car_forward.3} parent=0 // pred_region
    _
  $region85: #{car_forward.3} parent=0 // pred_fallthru
    _
  // Predicated region
  $region86: #{car_forward.3} parent=0 // pred_check
    _
  $region87: #{car_forward.3} parent=0 // pred_check_branch
    %77 = sbr.rel (0) target = $region89
  $region88: #{car_forward.3} parent=0 // pred_region
    _
  $region89: #{car_forward.3} parent=0 // pred_fallthru
    _
  // Predicated region
  $region90: #{car_forward.3} parent=0 // pred_check
    _
  $region91: #{car_forward.3} parent=0 // pred_check_branch
    %79 = sbr.rel (0) target = $region93
  $region92: #{car_forward.3} parent=0 // pred_region
    _
  $region93: #{car_forward.3} parent=0 // pred_fallthru
    _
  // Predicated region
  $region94: #{car_forward.3} parent=0 // pred_check
    _
  $region95: #{car_forward.3} parent=0 // pred_check_branch
    %81 = sbr.rel (0) target = $region97
  $region96: #{car_forward.3} parent=0 // pred_region
    _
  $region97: #{car_forward.3} parent=0 // pred_fallthru
    _
  // Predicated region
  $region98: #{car_forward.3} parent=0 // pred_check
    _
  $region99: #{car_forward.3} parent=0 // pred_check_branch
    %83 = sbr.rel (0) target = $region101
  $region100: #{car_forward.3} parent=0 // pred_region
    _
  $region101: #{car_forward.3} parent=0 // pred_fallthru
    _
  // Predicated region
  $region102: #{car_forward.3} parent=0 // pred_check
    _
  $region103: #{car_forward.3} parent=0 // pred_check_branch
    %85 = sbr.rel (0) target = $region105
  $region104: #{car_forward.3} parent=0 // pred_region
    _
  $region105: #{car_forward.3} parent=0 // pred_fallthru
    _
  // Predicated region
  $region106: #{car_forward.3} parent=0 // pred_check
    _
  $region107: #{car_forward.3} parent=0 // pred_check_branch
    %87 = sbr.rel (0) target = $region109
  $region108: #{car_forward.3} parent=0 // pred_region
    _
  $region109: #{car_forward.3} parent=0 // pred_fallthru
    _
  %v88 = vld [vmem:[%s0] sm:$0xff]
  %v89 = vld [vmem:[%s0 + $0x8] sm:$0xff]
  %v90 = vld [vmem:[%s0 + $0x10] sm:$0xff]
  %v91 = vld [vmem:[%s1] sm:$0xff]
  %v92 = vld [vmem:[%s1 + $0x8] sm:$0xff]
  %v93 = vld [vmem:[%s1 + $0x10] sm:$0xff]
  %v94 = vld [vmem:[%s2] sm:$0xff]
  %v95 = vld [vmem:[%s3] sm:$0x1]
  %v97 = vlaneseq
  %v98 = vshrl.u32 %v97, 7
  %v99 = vsub.s32 0, %v98
  %v100 = vrot.slane %v95, %v99
  %vm102 = vcmask 64512
  %v104 = vsel %vm102, %v88, 0
  %v107 = vsel %vm102, %v89, 0
  %v110 = vsel %vm102, %v90, 0
  %112 = vmatprep.subr.mxu0 0.0
  %113 = vmatpush1.msra.mxu0 0.0
  %114 = vmatprep.subr.mxu0 0.0
  %115 = vmatpush1.msra.mxu0 0.0
  %116 = vmatprep.subr.mxu0 0.0
  %117 = vmatpush1.msra.mxu0 0.0
  %118 = vmatprep.subr.mxu0 0.0
  %119 = vmatpush1.msra.mxu0 0.0
  %120 = vmatprep.subr.mxu0 0.0
  %121 = vmatpush1.msra.mxu0 0.0
  %122 = vmatprep.subr.mxu0 0.0
  %123 = vmatpush1.msra.mxu0 0.0
  %124 = vmatprep.subr.mxu0 0.0
  %125 = vmatpush1.msra.mxu0 0.0
  %126 = vmatprep.subr.mxu0 0.0
  %127 = vmatpush1.msra.mxu0 0.0
  %128 = vmatprep.subr.mxu0 0.0
  %129 = vmatpush1.msra.mxu0 0.0
  %130 = vmatprep.subr.mxu0 0.0
  %131 = vmatpush1.msra.mxu0 0.0
  %132 = vmatprep.subr.mxu0 0.0
  %133 = vmatpush1.msra.mxu0 0.0
  %134 = vmatprep.subr.mxu0 0.0
  %135 = vmatpush1.msra.mxu0 0.0
  %136 = vmatprep.subr.mxu0 0.0
  %137 = vmatpush1.msra.mxu0 0.0
  %138 = vmatprep.subr.mxu0 0.0
  %139 = vmatpush1.msra.mxu0 0.0
  %140 = vmatprep.subr.mxu0 0.0
  %141 = vmatpush1.msra.mxu0 0.0
  %142 = vmatprep.subr.mxu0 0.0
  %143 = vmatpush1.msra.mxu0 %v94
  %144 = vmatprep.subr.mxu0 0.0
  %145 = vmatpush2.msra.mxu0 0.0
  %146 = vmatprep.subr.mxu0 0.0
  %147 = vmatpush2.msra.mxu0 0.0
  %148 = vmatprep.subr.mxu0 0.0
  %149 = vmatpush2.msra.mxu0 0.0
  %150 = vmatprep.subr.mxu0 0.0
  %151 = vmatpush2.msra.mxu0 0.0
  %152 = vmatprep.subr.mxu0 0.0
  %153 = vmatpush2.msra.mxu0 0.0
  %154 = vmatprep.subr.mxu0 0.0
  %155 = vmatpush2.msra.mxu0 0.0
  %156 = vmatprep.subr.mxu0 0.0
  %157 = vmatpush2.msra.mxu0 0.0
  %158 = vmatprep.subr.mxu0 0.0
  %159 = vmatpush2.msra.mxu0 0.0
  %160 = vmatprep.subr.mxu0 0.0
  %161 = vmatpush2.msra.mxu0 0.0
  %162 = vmatprep.subr.mxu0 0.0
  %163 = vmatpush2.msra.mxu0 0.0
  %164 = vmatprep.subr.mxu0 0.0
  %165 = vmatpush2.msra.mxu0 0.0
  %166 = vmatprep.subr.mxu0 0.0
  %167 = vmatpush2.msra.mxu0 0.0
  %168 = vmatprep.subr.mxu0 0.0
  %169 = vmatpush2.msra.mxu0 0.0
  %170 = vmatprep.subr.mxu0 0.0
  %171 = vmatpush2.msra.mxu0 0.0
  %172 = vmatprep.subr.mxu0 0.0
  %173 = vmatpush2.msra.mxu0 0.0
  %174 = vmatprep.subr.mxu0 0.0
  %175 = vmatpush2.msra.mxu0 0.0
  %176 = vmatprep.mubr.f32.mxu0 0.0
  %177 = vmatmul.mubr.f32.gmra.mxu0 %v104
  %v178 = vpop.f32.mrf.mxu0
  %v179 = vadd.f32 %v100, %v178
  %v180 = vpop.f32.mrf.mxu0
  %181 = vmatprep.mubr.f32.mxu0 0.0
  %182 = vmatmul.mubr.f32.gmra.mxu0 %v107
  %v183 = vpop.f32.mrf.mxu0
  %v184 = vadd.f32 %v100, %v183
  %v185 = vpop.f32.mrf.mxu0
  %186 = vmatprep.mubr.f32.mxu0 0.0
  %187 = vmatmul.mubr.f32.gmra.mxu0 %v110
  %v188 = vpop.f32.mrf.mxu0
  %v189 = vadd.f32 %v100, %v188
  %v190 = vpop.f32.mrf.mxu0
  %191 = vdwg.mxu0
  %vm192 = vcmask 195584
  %v194 = vsel %vm192, %v91, 0
  %v197 = vsel %vm192, %v92, 0
  %v200 = vsel %vm192, %v93, 0
  %202 = vmatprep.subr.mxu0 0.0
  %203 = vmatpush1.msra.mxu0 0.0
  %204 = vmatprep.subr.mxu0 0.0
  %205 = vmatpush1.msra.mxu0 0.0
  %206 = vmatprep.subr.mxu0 0.0
  %207 = vmatpush1.msra.mxu0 0.0
  %208 = vmatprep.subr.mxu0 0.0
  %209 = vmatpush1.msra.mxu0 0.0
  %210 = vmatprep.subr.mxu0 0.0
  %211 = vmatpush1.msra.mxu0 0.0
  %212 = vmatprep.subr.mxu0 0.0
  %213 = vmatpush1.msra.mxu0 0.0
  %214 = vmatprep.subr.mxu0 0.0
  %215 = vmatpush1.msra.mxu0 0.0
  %216 = vmatprep.subr.mxu0 0.0
  %217 = vmatpush1.msra.mxu0 0.0
  %218 = vmatprep.subr.mxu0 0.0
  %219 = vmatpush1.msra.mxu0 0.0
  %220 = vmatprep.subr.mxu0 0.0
  %221 = vmatpush1.msra.mxu0 0.0
  %222 = vmatprep.subr.mxu0 0.0
  %223 = vmatpush1.msra.mxu0 0.0
  %224 = vmatprep.subr.mxu0 0.0
  %225 = vmatpush1.msra.mxu0 0.0
  %226 = vmatprep.subr.mxu0 0.0
  %227 = vmatpush1.msra.mxu0 0.0
  %228 = vmatprep.subr.mxu0 0.0
  %229 = vmatpush1.msra.mxu0 %v189
  %230 = vmatprep.subr.mxu0 0.0
  %231 = vmatpush1.msra.mxu0 %v184
  %232 = vmatprep.subr.mxu0 0.0
  %233 = vmatpush1.msra.mxu0 %v179
  %234 = vmatprep.subr.mxu0 0.0
  %235 = vmatpush2.msra.mxu0 0.0
  %236 = vmatprep.subr.mxu0 0.0
  %237 = vmatpush2.msra.mxu0 0.0
  %238 = vmatprep.subr.mxu0 0.0
  %239 = vmatpush2.msra.mxu0 0.0
  %240 = vmatprep.subr.mxu0 0.0
  %241 = vmatpush2.msra.mxu0 0.0
  %242 = vmatprep.subr.mxu0 0.0
  %243 = vmatpush2.msra.mxu0 0.0
  %244 = vmatprep.subr.mxu0 0.0
  %245 = vmatpush2.msra.mxu0 0.0
  %246 = vmatprep.subr.mxu0 0.0
  %247 = vmatpush2.msra.mxu0 0.0
  %248 = vmatprep.subr.mxu0 0.0
  %249 = vmatpush2.msra.mxu0 0.0
  %250 = vmatprep.subr.mxu0 0.0
  %251 = vmatpush2.msra.mxu0 0.0
  %252 = vmatprep.subr.mxu0 0.0
  %253 = vmatpush2.msra.mxu0 0.0
  %254 = vmatprep.subr.mxu0 0.0
  %255 = vmatpush2.msra.mxu0 0.0
  %256 = vmatprep.subr.mxu0 0.0
  %257 = vmatpush2.msra.mxu0 0.0
  %258 = vmatprep.subr.mxu0 0.0
  %259 = vmatpush2.msra.mxu0 0.0
  %260 = vmatprep.subr.mxu0 0.0
  %261 = vmatpush2.msra.mxu0 0.0
  %262 = vmatprep.subr.mxu0 0.0
  %263 = vmatpush2.msra.mxu0 0.0
  %264 = vmatprep.subr.mxu0 0.0
  %265 = vmatpush2.msra.mxu0 0.0
  %266 = vmatprep.mubr.f32.mxu0 0.0
  %267 = vmatmul.mubr.f32.gmra.mxu0 %v194
  %v268 = vpop.f32.mrf.mxu0
  %v269 = vadd.f32 %v179, %v268
  %v270 = vpop.f32.mrf.mxu0
  %271 = vmatprep.mubr.f32.mxu0 0.0
  %272 = vmatmul.mubr.f32.gmra.mxu0 %v197
  %v273 = vpop.f32.mrf.mxu0
  %v274 = vadd.f32 %v184, %v273
  %v275 = vpop.f32.mrf.mxu0
  %276 = vmatprep.mubr.f32.mxu0 0.0
  %277 = vmatmul.mubr.f32.gmra.mxu0 %v200
  %v278 = vpop.f32.mrf.mxu0
  %v279 = vadd.f32 %v189, %v278
  %v280 = vpop.f32.mrf.mxu0
  %281 = vdwg.mxu0
  %v282 = vld [vmem:[%s4] sm:$0xff]
  %v283 = vld [vmem:[%s4 + $0x8] sm:$0xff]
  %v284 = vld [vmem:[%s4 + $0x10] sm:$0xff]
  %v285 = vld [vmem:[%s4 + $0x18] sm:$0xff]
  %v286 = vld [vmem:[%s5] sm:$0x1]
  %v288 = vlaneseq
  %v289 = vshrl.u32 %v288, 7
  %v290 = vsub.s32 0, %v289
  %v291 = vrot.slane %v286, %v290
  %vm293 = vcmask 261120
  %v295 = vsel %vm293, %v269, 0
  %v298 = vsel %vm293, %v274, 0
  %v301 = vsel %vm293, %v279, 0
  %303 = vmatprep.subr.mxu0 0.0
  %304 = vmatpush1.msra.mxu0 0.0
  %305 = vmatprep.subr.mxu0 0.0
  %306 = vmatpush1.msra.mxu0 0.0
  %307 = vmatprep.subr.mxu0 0.0
  %308 = vmatpush1.msra.mxu0 0.0
  %309 = vmatprep.subr.mxu0 0.0
  %310 = vmatpush1.msra.mxu0 0.0
  %311 = vmatprep.subr.mxu0 0.0
  %312 = vmatpush1.msra.mxu0 0.0
  %313 = vmatprep.subr.mxu0 0.0
  %314 = vmatpush1.msra.mxu0 0.0
  %315 = vmatprep.subr.mxu0 0.0
  %316 = vmatpush1.msra.mxu0 0.0
  %317 = vmatprep.subr.mxu0 0.0
  %318 = vmatpush1.msra.mxu0 0.0
  %319 = vmatprep.subr.mxu0 0.0
  %320 = vmatpush1.msra.mxu0 0.0
  %321 = vmatprep.subr.mxu0 0.0
  %322 = vmatpush1.msra.mxu0 0.0
  %323 = vmatprep.subr.mxu0 0.0
  %324 = vmatpush1.msra.mxu0 0.0
  %325 = vmatprep.subr.mxu0 0.0
  %326 = vmatpush1.msra.mxu0 0.0
  %327 = vmatprep.subr.mxu0 0.0
  %328 = vmatpush1.msra.mxu0 %v285
  %329 = vmatprep.subr.mxu0 0.0
  %330 = vmatpush1.msra.mxu0 %v284
  %331 = vmatprep.subr.mxu0 0.0
  %332 = vmatpush1.msra.mxu0 %v283
  %333 = vmatprep.subr.mxu0 0.0
  %334 = vmatpush1.msra.mxu0 %v282
  %335 = vmatprep.subr.mxu0 0.0
  %336 = vmatpush2.msra.mxu0 0.0
  %337 = vmatprep.subr.mxu0 0.0
  %338 = vmatpush2.msra.mxu0 0.0
  %339 = vmatprep.subr.mxu0 0.0
  %340 = vmatpush2.msra.mxu0 0.0
  %341 = vmatprep.subr.mxu0 0.0
  %342 = vmatpush2.msra.mxu0 0.0
  %343 = vmatprep.subr.mxu0 0.0
  %344 = vmatpush2.msra.mxu0 0.0
  %345 = vmatprep.subr.mxu0 0.0
  %346 = vmatpush2.msra.mxu0 0.0
  %347 = vmatprep.subr.mxu0 0.0
  %348 = vmatpush2.msra.mxu0 0.0
  %349 = vmatprep.subr.mxu0 0.0
  %350 = vmatpush2.msra.mxu0 0.0
  %351 = vmatprep.subr.mxu0 0.0
  %352 = vmatpush2.msra.mxu0 0.0
  %353 = vmatprep.subr.mxu0 0.0
  %354 = vmatpush2.msra.mxu0 0.0
  %355 = vmatprep.subr.mxu0 0.0
  %356 = vmatpush2.msra.mxu0 0.0
  %357 = vmatprep.subr.mxu0 0.0
  %358 = vmatpush2.msra.mxu0 0.0
  %359 = vmatprep.subr.mxu0 0.0
  %360 = vmatpush2.msra.mxu0 0.0
  %361 = vmatprep.subr.mxu0 0.0
  %362 = vmatpush2.msra.mxu0 0.0
  %363 = vmatprep.subr.mxu0 0.0
  %364 = vmatpush2.msra.mxu0 0.0
  %365 = vmatprep.subr.mxu0 0.0
  %366 = vmatpush2.msra.mxu0 0.0
  %367 = vmatprep.mubr.f32.mxu0 0.0
  %368 = vmatmul.mubr.f32.gmra.mxu0 %v295
  %v369 = vpop.f32.mrf.mxu0
  %v370 = vadd.f32 %v291, %v369
  %v371 = vpop.f32.mrf.mxu0
  %372 = vmatprep.mubr.f32.mxu0 0.0
  %373 = vmatmul.mubr.f32.gmra.mxu0 %v298
  %v374 = vpop.f32.mrf.mxu0
  %v375 = vadd.f32 %v291, %v374
  %v376 = vpop.f32.mrf.mxu0
  %377 = vmatprep.mubr.f32.mxu0 0.0
  %378 = vmatmul.mubr.f32.gmra.mxu0 %v301
  %v379 = vpop.f32.mrf.mxu0
  %v380 = vadd.f32 %v291, %v379
  %v381 = vpop.f32.mrf.mxu0
  %382 = vdwg.mxu0
  %vm383 = vcmask 523264
  %v384 = vsel %vm383, %v370, 0.0
  %v385 = vsel %vm383, %v375, 0.0
  %v386 = vadd.f32 %v384, %v385
  %v387 = vsel %vm383, %v380, 0.0
  %v388 = vadd.f32 %v386, %v387
  %v389 = vrot.slane %v388, 4
  %v390 = vadd.f32 %v388, %v389
  %v391 = vrot.slane %v390, 2
  %v392 = vadd.f32 %v390, %v391
  %v393 = vrot.slane %v392, 1
  %v394 = vadd.f32 %v392, %v393
  %v395 = vrcp.pop 24.0
  %v396 = vmul.f32 %v394, %v395
  %v397 = vmul.f32 %v370, %v370
  %v398 = vmul.f32 %v375, %v375
  %v399 = vmul.f32 %v380, %v380
  %v400 = vsel %vm383, %v397, 0.0
  %v401 = vsel %vm383, %v398, 0.0
  %v402 = vadd.f32 %v400, %v401
  %v403 = vsel %vm383, %v399, 0.0
  %v404 = vadd.f32 %v402, %v403
  %v405 = vrot.slane %v404, 4
  %v406 = vadd.f32 %v404, %v405
  %v407 = vrot.slane %v406, 2
  %v408 = vadd.f32 %v406, %v407
  %v409 = vrot.slane %v408, 1
  %v410 = vadd.f32 %v408, %v409
  %v411 = vmul.f32 %v410, %v395
  %v412 = vmul.f32 %v396, %v396
  %v413 = vsub.f32 %v411, %v412
  %v414 = vmax.f32 %v413, 0.0
  %v415 = vsub.f32 %v370, %v396
  %v416 = vsub.f32 %v375, %v396
  %v417 = vsub.f32 %v380, %v396
  %v418 = vadd.f32 %v414, 1e-05
  %v419 = vrsqrt.pop %v418
  %v420 = vmul.f32 %v415, %v419
  %v421 = vmul.f32 %v416, %v419
  %v422 = vmul.f32 %v417, %v419
  %v423 = vmax.f32 %v420, 0.0
  %v424 = vmax.f32 %v421, 0.0
  %v425 = vmax.f32 %v422, 0.0
  %v426 = vld [vmem:[%s6] sm:$0xff]
  %v427 = vld [vmem:[%s6 + $0x8] sm:$0xff]
  %v428 = vld [vmem:[%s6 + $0x10] sm:$0xff]
  %v429 = vld [vmem:[%s6 + $0x18] sm:$0xff]
  %v430 = vld [vmem:[%s6 + $0x20] sm:$0xff]
  %v431 = vld [vmem:[%s6 + $0x28] sm:$0xff]
  %v432 = vld [vmem:[%s6 + $0x30] sm:$0xff]
  %v433 = vld [vmem:[%s6 + $0x38] sm:$0xff]
  %v434 = vld [vmem:[%s7] sm:$0x1]
  %v436 = vlaneseq
  %v437 = vshrl.u32 %v436, 7
  %v438 = vsub.s32 0, %v437
  %v439 = vrot.slane %v434, %v438
  %v442 = vsel %vm383, %v423, 0
  %v445 = vsel %vm383, %v424, 0
  %v448 = vsel %vm383, %v425, 0
  %450 = vmatprep.subr.mxu0 0.0
  %451 = vmatpush1.msra.mxu0 0.0
  %452 = vmatprep.subr.mxu0 0.0
  %453 = vmatpush1.msra.mxu0 0.0
  %454 = vmatprep.subr.mxu0 0.0
  %455 = vmatpush1.msra.mxu0 0.0
  %456 = vmatprep.subr.mxu0 0.0
  %457 = vmatpush1.msra.mxu0 0.0
  %458 = vmatprep.subr.mxu0 0.0
  %459 = vmatpush1.msra.mxu0 0.0
  %460 = vmatprep.subr.mxu0 0.0
  %461 = vmatpush1.msra.mxu0 0.0
  %462 = vmatprep.subr.mxu0 0.0
  %463 = vmatpush1.msra.mxu0 0.0
  %464 = vmatprep.subr.mxu0 0.0
  %465 = vmatpush1.msra.mxu0 0.0
  %466 = vmatprep.subr.mxu0 0.0
  %467 = vmatpush1.msra.mxu0 %v433
  %468 = vmatprep.subr.mxu0 0.0
  %469 = vmatpush1.msra.mxu0 %v432
  %470 = vmatprep.subr.mxu0 0.0
  %471 = vmatpush1.msra.mxu0 %v431
  %472 = vmatprep.subr.mxu0 0.0
  %473 = vmatpush1.msra.mxu0 %v430
  %474 = vmatprep.subr.mxu0 0.0
  %475 = vmatpush1.msra.mxu0 %v429
  %476 = vmatprep.subr.mxu0 0.0
  %477 = vmatpush1.msra.mxu0 %v428
  %478 = vmatprep.subr.mxu0 0.0
  %479 = vmatpush1.msra.mxu0 %v427
  %480 = vmatprep.subr.mxu0 0.0
  %481 = vmatpush1.msra.mxu0 %v426
  %482 = vmatprep.subr.mxu0 0.0
  %483 = vmatpush2.msra.mxu0 0.0
  %484 = vmatprep.subr.mxu0 0.0
  %485 = vmatpush2.msra.mxu0 0.0
  %486 = vmatprep.subr.mxu0 0.0
  %487 = vmatpush2.msra.mxu0 0.0
  %488 = vmatprep.subr.mxu0 0.0
  %489 = vmatpush2.msra.mxu0 0.0
  %490 = vmatprep.subr.mxu0 0.0
  %491 = vmatpush2.msra.mxu0 0.0
  %492 = vmatprep.subr.mxu0 0.0
  %493 = vmatpush2.msra.mxu0 0.0
  %494 = vmatprep.subr.mxu0 0.0
  %495 = vmatpush2.msra.mxu0 0.0
  %496 = vmatprep.subr.mxu0 0.0
  %497 = vmatpush2.msra.mxu0 0.0
  %498 = vmatprep.subr.mxu0 0.0
  %499 = vmatpush2.msra.mxu0 0.0
  %500 = vmatprep.subr.mxu0 0.0
  %501 = vmatpush2.msra.mxu0 0.0
  %502 = vmatprep.subr.mxu0 0.0
  %503 = vmatpush2.msra.mxu0 0.0
  %504 = vmatprep.subr.mxu0 0.0
  %505 = vmatpush2.msra.mxu0 0.0
  %506 = vmatprep.subr.mxu0 0.0
  %507 = vmatpush2.msra.mxu0 0.0
  %508 = vmatprep.subr.mxu0 0.0
  %509 = vmatpush2.msra.mxu0 0.0
  %510 = vmatprep.subr.mxu0 0.0
  %511 = vmatpush2.msra.mxu0 0.0
  %512 = vmatprep.subr.mxu0 0.0
  %513 = vmatpush2.msra.mxu0 0.0
  %514 = vmatprep.mubr.f32.mxu0 0.0
  %515 = vmatmul.mubr.f32.gmra.mxu0 %v442
  %v516 = vpop.f32.mrf.mxu0
  %v517 = vadd.f32 %v439, %v516
  %v518 = vpop.f32.mrf.mxu0
  %519 = vmatprep.mubr.f32.mxu0 0.0
  %520 = vmatmul.mubr.f32.gmra.mxu0 %v445
  %v521 = vpop.f32.mrf.mxu0
  %v522 = vadd.f32 %v439, %v521
  %v523 = vpop.f32.mrf.mxu0
  %524 = vmatprep.mubr.f32.mxu0 0.0
  %525 = vmatmul.mubr.f32.gmra.mxu0 %v448
  %v526 = vpop.f32.mrf.mxu0
  %v527 = vadd.f32 %v439, %v526
  %v528 = vpop.f32.mrf.mxu0
  %529 = vdwg.mxu0
  %v530 = vmax.f32 %v517, 0.0
  %v531 = vmax.f32 %v522, 0.0
  %v532 = vmax.f32 %v527, 0.0
  %v533 = vadd.f32 %v530, %v179
  %v534 = vadd.f32 %v531, %v184
  %v535 = vadd.f32 %v532, %v189
  %536 = vst.msk [vmem:[#allocation2] sm:$0xff] %vm293, %v533
  %537 = vst.msk [vmem:[#allocation2 + $0x8] sm:$0xff] %vm293, %v534
  %538 = vst.msk [vmem:[#allocation2 + $0x10] sm:$0xff] %vm293, %v535
  %539 = vmatprep.subr.mxu0 0.0
  %540 = vmatpush1.msra.mxu0 0.0
  %541 = vmatprep.subr.mxu0 0.0
  %542 = vmatpush1.msra.mxu0 0.0
  %543 = vmatprep.subr.mxu0 0.0
  %544 = vmatpush1.msra.mxu0 0.0
  %545 = vmatprep.subr.mxu0 0.0
  %546 = vmatpush1.msra.mxu0 0.0
  %547 = vmatprep.subr.mxu0 0.0
  %548 = vmatpush1.msra.mxu0 0.0
  %549 = vmatprep.subr.mxu0 0.0
  %550 = vmatpush1.msra.mxu0 0.0
  %551 = vmatprep.subr.mxu0 0.0
  %552 = vmatpush1.msra.mxu0 0.0
  %553 = vmatprep.subr.mxu0 0.0
  %554 = vmatpush1.msra.mxu0 0.0
  %555 = vmatprep.subr.mxu0 0.0
  %556 = vmatpush1.msra.mxu0 0.0
  %557 = vmatprep.subr.mxu0 0.0
  %558 = vmatpush1.msra.mxu0 0.0
  %559 = vmatprep.subr.mxu0 0.0
  %560 = vmatpush1.msra.mxu0 0.0
  %561 = vmatprep.subr.mxu0 0.0
  %562 = vmatpush1.msra.mxu0 0.0
  %563 = vmatprep.subr.mxu0 0.0
  %564 = vmatpush1.msra.mxu0 0.0
  %565 = vmatprep.subr.mxu0 0.0
  %566 = vmatpush1.msra.mxu0 %v535
  %567 = vmatprep.subr.mxu0 0.0
  %568 = vmatpush1.msra.mxu0 %v534
  %569 = vmatprep.subr.mxu0 0.0
  %570 = vmatpush1.msra.mxu0 %v533
  %571 = vmatprep.subr.mxu0 0.0
  %572 = vmatpush2.msra.mxu0 0.0
  %573 = vmatprep.subr.mxu0 0.0
  %574 = vmatpush2.msra.mxu0 0.0
  %575 = vmatprep.subr.mxu0 0.0
  %576 = vmatpush2.msra.mxu0 0.0
  %577 = vmatprep.subr.mxu0 0.0
  %578 = vmatpush2.msra.mxu0 0.0
  %579 = vmatprep.subr.mxu0 0.0
  %580 = vmatpush2.msra.mxu0 0.0
  %581 = vmatprep.subr.mxu0 0.0
  %582 = vmatpush2.msra.mxu0 0.0
  %583 = vmatprep.subr.mxu0 0.0
  %584 = vmatpush2.msra.mxu0 0.0
  %585 = vmatprep.subr.mxu0 0.0
  %586 = vmatpush2.msra.mxu0 0.0
  %587 = vmatprep.subr.mxu0 0.0
  %588 = vmatpush2.msra.mxu0 0.0
  %589 = vmatprep.subr.mxu0 0.0
  %590 = vmatpush2.msra.mxu0 0.0
  %591 = vmatprep.subr.mxu0 0.0
  %592 = vmatpush2.msra.mxu0 0.0
  %593 = vmatprep.subr.mxu0 0.0
  %594 = vmatpush2.msra.mxu0 0.0
  %595 = vmatprep.subr.mxu0 0.0
  %596 = vmatpush2.msra.mxu0 0.0
  %597 = vmatprep.subr.mxu0 0.0
  %598 = vmatpush2.msra.mxu0 0.0
  %599 = vmatprep.subr.mxu0 0.0
  %600 = vmatpush2.msra.mxu0 0.0
  %601 = vmatprep.subr.mxu0 0.0
  %602 = vmatpush2.msra.mxu0 0.0
  %603 = vmatprep.mubr.f32.mxu0 0.0
  %604 = vmatmul.mubr.f32.gmra.mxu0 %v194
  %v605 = vpop.f32.mrf.mxu0
  %v606 = vadd.f32 %v533, %v605
  %v607 = vpop.f32.mrf.mxu0
  %608 = vmatprep.mubr.f32.mxu0 0.0
  %609 = vmatmul.mubr.f32.gmra.mxu0 %v197
  %v610 = vpop.f32.mrf.mxu0
  %v611 = vadd.f32 %v534, %v610
  %v612 = vpop.f32.mrf.mxu0
  %613 = vmatprep.mubr.f32.mxu0 0.0
  %614 = vmatmul.mubr.f32.gmra.mxu0 %v200
  %v615 = vpop.f32.mrf.mxu0
  %v616 = vadd.f32 %v535, %v615
  %v617 = vpop.f32.mrf.mxu0
  %618 = vdwg.mxu0
  %s619 = scalar_lea.vmem %s4, 32
  %v620 = vld [vmem:[%s619] sm:$0xff]
  %v621 = vld [vmem:[%s619 + $0x8] sm:$0xff]
  %v622 = vld [vmem:[%s619 + $0x10] sm:$0xff]
  %v623 = vld [vmem:[%s619 + $0x18] sm:$0xff]
  %s624 = scalar_lea.vmem %s5, 1
  %v625 = vld [vmem:[%s624] sm:$0x1]
  %v627 = vlaneseq
  %v628 = vshrl.u32 %v627, 7
  %v629 = vsub.s32 0, %v628
  %v630 = vrot.slane %v625, %v629
  %v633 = vsel %vm293, %v606, 0
  %v636 = vsel %vm293, %v611, 0
  %v639 = vsel %vm293, %v616, 0
  %641 = vmatprep.subr.mxu0 0.0
  %642 = vmatpush1.msra.mxu0 0.0
  %643 = vmatprep.subr.mxu0 0.0
  %644 = vmatpush1.msra.mxu0 0.0
  %645 = vmatprep.subr.mxu0 0.0
  %646 = vmatpush1.msra.mxu0 0.0
  %647 = vmatprep.subr.mxu0 0.0
  %648 = vmatpush1.msra.mxu0 0.0
  %649 = vmatprep.subr.mxu0 0.0
  %650 = vmatpush1.msra.mxu0 0.0
  %651 = vmatprep.subr.mxu0 0.0
  %652 = vmatpush1.msra.mxu0 0.0
  %653 = vmatprep.subr.mxu0 0.0
  %654 = vmatpush1.msra.mxu0 0.0
  %655 = vmatprep.subr.mxu0 0.0
  %656 = vmatpush1.msra.mxu0 0.0
  %657 = vmatprep.subr.mxu0 0.0
  %658 = vmatpush1.msra.mxu0 0.0
  %659 = vmatprep.subr.mxu0 0.0
  %660 = vmatpush1.msra.mxu0 0.0
  %661 = vmatprep.subr.mxu0 0.0
  %662 = vmatpush1.msra.mxu0 0.0
  %663 = vmatprep.subr.mxu0 0.0
  %664 = vmatpush1.msra.mxu0 0.0
  %665 = vmatprep.subr.mxu0 0.0
  %666 = vmatpush1.msra.mxu0 %v623
  %667 = vmatprep.subr.mxu0 0.0
  %668 = vmatpush1.msra.mxu0 %v622
  %669 = vmatprep.subr.mxu0 0.0
  %670 = vmatpush1.msra.mxu0 %v621
  %671 = vmatprep.subr.mxu0 0.0
  %672 = vmatpush1.msra.mxu0 %v620
  %673 = vmatprep.subr.mxu0 0.0
  %674 = vmatpush2.msra.mxu0 0.0
  %675 = vmatprep.subr.mxu0 0.0
  %676 = vmatpush2.msra.mxu0 0.0
  %677 = vmatprep.subr.mxu0 0.0
  %678 = vmatpush2.msra.mxu0 0.0
  %679 = vmatprep.subr.mxu0 0.0
  %680 = vmatpush2.msra.mxu0 0.0
  %681 = vmatprep.subr.mxu0 0.0
  %682 = vmatpush2.msra.mxu0 0.0
  %683 = vmatprep.subr.mxu0 0.0
  %684 = vmatpush2.msra.mxu0 0.0
  %685 = vmatprep.subr.mxu0 0.0
  %686 = vmatpush2.msra.mxu0 0.0
  %687 = vmatprep.subr.mxu0 0.0
  %688 = vmatpush2.msra.mxu0 0.0
  %689 = vmatprep.subr.mxu0 0.0
  %690 = vmatpush2.msra.mxu0 0.0
  %691 = vmatprep.subr.mxu0 0.0
  %692 = vmatpush2.msra.mxu0 0.0
  %693 = vmatprep.subr.mxu0 0.0
  %694 = vmatpush2.msra.mxu0 0.0
  %695 = vmatprep.subr.mxu0 0.0
  %696 = vmatpush2.msra.mxu0 0.0
  %697 = vmatprep.subr.mxu0 0.0
  %698 = vmatpush2.msra.mxu0 0.0
  %699 = vmatprep.subr.mxu0 0.0
  %700 = vmatpush2.msra.mxu0 0.0
  %701 = vmatprep.subr.mxu0 0.0
  %702 = vmatpush2.msra.mxu0 0.0
  %703 = vmatprep.subr.mxu0 0.0
  %704 = vmatpush2.msra.mxu0 0.0
  %705 = vmatprep.mubr.f32.mxu0 0.0
  %706 = vmatmul.mubr.f32.gmra.mxu0 %v633
  %v707 = vpop.f32.mrf.mxu0
  %v708 = vadd.f32 %v630, %v707
  %v709 = vpop.f32.mrf.mxu0
  %710 = vmatprep.mubr.f32.mxu0 0.0
  %711 = vmatmul.mubr.f32.gmra.mxu0 %v636
  %v712 = vpop.f32.mrf.mxu0
  %v713 = vadd.f32 %v630, %v712
  %v714 = vpop.f32.mrf.mxu0
  %715 = vmatprep.mubr.f32.mxu0 0.0
  %716 = vmatmul.mubr.f32.gmra.mxu0 %v639
  %v717 = vpop.f32.mrf.mxu0
  %v718 = vadd.f32 %v630, %v717
  %v719 = vpop.f32.mrf.mxu0
  %720 = vdwg.mxu0
  %v721 = vsel %vm383, %v708, 0.0
  %v722 = vsel %vm383, %v713, 0.0
  %v723 = vadd.f32 %v721, %v722
  %v724 = vsel %vm383, %v718, 0.0
  %v725 = vadd.f32 %v723, %v724
  %v726 = vrot.slane %v725, 4
  %v727 = vadd.f32 %v725, %v726
  %v728 = vrot.slane %v727, 2
  %v729 = vadd.f32 %v727, %v728
  %v730 = vrot.slane %v729, 1
  %v731 = vadd.f32 %v729, %v730
  %v732 = vmul.f32 %v731, %v395
  %v733 = vmul.f32 %v708, %v708
  %v734 = vmul.f32 %v713, %v713
  %v735 = vmul.f32 %v718, %v718
  %v736 = vsel %vm383, %v733, 0.0
  %v737 = vsel %vm383, %v734, 0.0
  %v738 = vadd.f32 %v736, %v737
  %v739 = vsel %vm383, %v735, 0.0
  %v740 = vadd.f32 %v738, %v739
  %v741 = vrot.slane %v740, 4
  %v742 = vadd.f32 %v740, %v741
  %v743 = vrot.slane %v742, 2
  %v744 = vadd.f32 %v742, %v743
  %v745 = vrot.slane %v744, 1
  %v746 = vadd.f32 %v744, %v745
  %v747 = vmul.f32 %v746, %v395
  %v748 = vmul.f32 %v732, %v732
  %v749 = vsub.f32 %v747, %v748
  %v750 = vmax.f32 %v749, 0.0
  %v751 = vsub.f32 %v708, %v732
  %v752 = vsub.f32 %v713, %v732
  %v753 = vsub.f32 %v718, %v732
  %v754 = vadd.f32 %v750, 1e-05
  %v755 = vrsqrt.pop %v754
  %v756 = vmul.f32 %v751, %v755
  %v757 = vmul.f32 %v752, %v755
  %v758 = vmul.f32 %v753, %v755
  %v759 = vmax.f32 %v756, 0.0
  %v760 = vmax.f32 %v757, 0.0
  %v761 = vmax.f32 %v758, 0.0
  %s762 = scalar_lea.vmem %s6, 64
  %v763 = vld [vmem:[%s762] sm:$0xff]
  %v764 = vld [vmem:[%s762 + $0x8] sm:$0xff]
  %v765 = vld [vmem:[%s762 + $0x10] sm:$0xff]
  %v766 = vld [vmem:[%s762 + $0x18] sm:$0xff]
  %v767 = vld [vmem:[%s762 + $0x20] sm:$0xff]
  %v768 = vld [vmem:[%s762 + $0x28] sm:$0xff]
  %v769 = vld [vmem:[%s762 + $0x30] sm:$0xff]
  %v770 = vld [vmem:[%s762 + $0x38] sm:$0xff]
  %s771 = scalar_lea.vmem %s7, 1
  %v772 = vld [vmem:[%s771] sm:$0x1]
  %v774 = vlaneseq
  %v775 = vshrl.u32 %v774, 7
  %v776 = vsub.s32 0, %v775
  %v777 = vrot.slane %v772, %v776
  %v780 = vsel %vm383, %v759, 0
  %v783 = vsel %vm383, %v760, 0
  %v786 = vsel %vm383, %v761, 0
  %788 = vmatprep.subr.mxu0 0.0
  %789 = vmatpush1.msra.mxu0 0.0
  %790 = vmatprep.subr.mxu0 0.0
  %791 = vmatpush1.msra.mxu0 0.0
  %792 = vmatprep.subr.mxu0 0.0
  %793 = vmatpush1.msra.mxu0 0.0
  %794 = vmatprep.subr.mxu0 0.0
  %795 = vmatpush1.msra.mxu0 0.0
  %796 = vmatprep.subr.mxu0 0.0
  %797 = vmatpush1.msra.mxu0 0.0
  %798 = vmatprep.subr.mxu0 0.0
  %799 = vmatpush1.msra.mxu0 0.0
  %800 = vmatprep.subr.mxu0 0.0
  %801 = vmatpush1.msra.mxu0 0.0
  %802 = vmatprep.subr.mxu0 0.0
  %803 = vmatpush1.msra.mxu0 0.0
  %804 = vmatprep.subr.mxu0 0.0
  %805 = vmatpush1.msra.mxu0 %v770
  %806 = vmatprep.subr.mxu0 0.0
  %807 = vmatpush1.msra.mxu0 %v769
  %808 = vmatprep.subr.mxu0 0.0
  %809 = vmatpush1.msra.mxu0 %v768
  %810 = vmatprep.subr.mxu0 0.0
  %811 = vmatpush1.msra.mxu0 %v767
  %812 = vmatprep.subr.mxu0 0.0
  %813 = vmatpush1.msra.mxu0 %v766
  %814 = vmatprep.subr.mxu0 0.0
  %815 = vmatpush1.msra.mxu0 %v765
  %816 = vmatprep.subr.mxu0 0.0
  %817 = vmatpush1.msra.mxu0 %v764
  %818 = vmatprep.subr.mxu0 0.0
  %819 = vmatpush1.msra.mxu0 %v763
  %820 = vmatprep.subr.mxu0 0.0
  %821 = vmatpush2.msra.mxu0 0.0
  %822 = vmatprep.subr.mxu0 0.0
  %823 = vmatpush2.msra.mxu0 0.0
  %824 = vmatprep.subr.mxu0 0.0
  %825 = vmatpush2.msra.mxu0 0.0
  %826 = vmatprep.subr.mxu0 0.0
  %827 = vmatpush2.msra.mxu0 0.0
  %828 = vmatprep.subr.mxu0 0.0
  %829 = vmatpush2.msra.mxu0 0.0
  %830 = vmatprep.subr.mxu0 0.0
  %831 = vmatpush2.msra.mxu0 0.0
  %832 = vmatprep.subr.mxu0 0.0
  %833 = vmatpush2.msra.mxu0 0.0
  %834 = vmatprep.subr.mxu0 0.0
  %835 = vmatpush2.msra.mxu0 0.0
  %836 = vmatprep.subr.mxu0 0.0
  %837 = vmatpush2.msra.mxu0 0.0
  %838 = vmatprep.subr.mxu0 0.0
  %839 = vmatpush2.msra.mxu0 0.0
  %840 = vmatprep.subr.mxu0 0.0
  %841 = vmatpush2.msra.mxu0 0.0
  %842 = vmatprep.subr.mxu0 0.0
  %843 = vmatpush2.msra.mxu0 0.0
  %844 = vmatprep.subr.mxu0 0.0
  %845 = vmatpush2.msra.mxu0 0.0
  %846 = vmatprep.subr.mxu0 0.0
  %847 = vmatpush2.msra.mxu0 0.0
  %848 = vmatprep.subr.mxu0 0.0
  %849 = vmatpush2.msra.mxu0 0.0
  %850 = vmatprep.subr.mxu0 0.0
  %851 = vmatpush2.msra.mxu0 0.0
  %852 = vmatprep.mubr.f32.mxu0 0.0
  %853 = vmatmul.mubr.f32.gmra.mxu0 %v780
  %v854 = vpop.f32.mrf.mxu0
  %v855 = vadd.f32 %v777, %v854
  %v856 = vpop.f32.mrf.mxu0
  %857 = vmatprep.mubr.f32.mxu0 0.0
  %858 = vmatmul.mubr.f32.gmra.mxu0 %v783
  %v859 = vpop.f32.mrf.mxu0
  %v860 = vadd.f32 %v777, %v859
  %v861 = vpop.f32.mrf.mxu0
  %862 = vmatprep.mubr.f32.mxu0 0.0
  %863 = vmatmul.mubr.f32.gmra.mxu0 %v786
  %v864 = vpop.f32.mrf.mxu0
  %v865 = vadd.f32 %v777, %v864
  %v866 = vpop.f32.mrf.mxu0
  %867 = vdwg.mxu0
  %v868 = vmax.f32 %v855, 0.0
  %v869 = vmax.f32 %v860, 0.0
  %v870 = vmax.f32 %v865, 0.0
  %v871 = vadd.f32 %v868, %v533
  %v872 = vadd.f32 %v869, %v534
  %v873 = vadd.f32 %v870, %v535
  %s874 = scalar_lea.vmem [#allocation2], 24
  %875 = vst.msk [vmem:[%s874] sm:$0xff] %vm293, %v871
  %876 = vst.msk [vmem:[%s874 + $0x8] sm:$0xff] %vm293, %v872
  %877 = vst.msk [vmem:[%s874 + $0x10] sm:$0xff] %vm293, %v873
  %878 = vmatprep.subr.mxu0 0.0
  %879 = vmatpush1.msra.mxu0 0.0
  %880 = vmatprep.subr.mxu0 0.0
  %881 = vmatpush1.msra.mxu0 0.0
  %882 = vmatprep.subr.mxu0 0.0
  %883 = vmatpush1.msra.mxu0 0.0
  %884 = vmatprep.subr.mxu0 0.0
  %885 = vmatpush1.msra.mxu0 0.0
  %886 = vmatprep.subr.mxu0 0.0
  %887 = vmatpush1.msra.mxu0 0.0
  %888 = vmatprep.subr.mxu0 0.0
  %889 = vmatpush1.msra.mxu0 0.0
  %890 = vmatprep.subr.mxu0 0.0
  %891 = vmatpush1.msra.mxu0 0.0
  %892 = vmatprep.subr.mxu0 0.0
  %893 = vmatpush1.msra.mxu0 0.0
  %894 = vmatprep.subr.mxu0 0.0
  %895 = vmatpush1.msra.mxu0 0.0
  %896 = vmatprep.subr.mxu0 0.0
  %897 = vmatpush1.msra.mxu0 0.0
  %898 = vmatprep.subr.mxu0 0.0
  %899 = vmatpush1.msra.mxu0 0.0
  %900 = vmatprep.subr.mxu0 0.0
  %901 = vmatpush1.msra.mxu0 0.0
  %902 = vmatprep.subr.mxu0 0.0
  %903 = vmatpush1.msra.mxu0 0.0
  %904 = vmatprep.subr.mxu0 0.0
  %905 = vmatpush1.msra.mxu0 %v873
  %906 = vmatprep.subr.mxu0 0.0
  %907 = vmatpush1.msra.mxu0 %v872
  %908 = vmatprep.subr.mxu0 0.0
  %909 = vmatpush1.msra.mxu0 %v871
  %910 = vmatprep.subr.mxu0 0.0
  %911 = vmatpush2.msra.mxu0 0.0
  %912 = vmatprep.subr.mxu0 0.0
  %913 = vmatpush2.msra.mxu0 0.0
  %914 = vmatprep.subr.mxu0 0.0
  %915 = vmatpush2.msra.mxu0 0.0
  %916 = vmatprep.subr.mxu0 0.0
  %917 = vmatpush2.msra.mxu0 0.0
  %918 = vmatprep.subr.mxu0 0.0
  %919 = vmatpush2.msra.mxu0 0.0
  %920 = vmatprep.subr.mxu0 0.0
  %921 = vmatpush2.msra.mxu0 0.0
  %922 = vmatprep.subr.mxu0 0.0
  %923 = vmatpush2.msra.mxu0 0.0
  %924 = vmatprep.subr.mxu0 0.0
  %925 = vmatpush2.msra.mxu0 0.0
  %926 = vmatprep.subr.mxu0 0.0
  %927 = vmatpush2.msra.mxu0 0.0
  %928 = vmatprep.subr.mxu0 0.0
  %929 = vmatpush2.msra.mxu0 0.0
  %930 = vmatprep.subr.mxu0 0.0
  %931 = vmatpush2.msra.mxu0 0.0
  %932 = vmatprep.subr.mxu0 0.0
  %933 = vmatpush2.msra.mxu0 0.0
  %934 = vmatprep.subr.mxu0 0.0
  %935 = vmatpush2.msra.mxu0 0.0
  %936 = vmatprep.subr.mxu0 0.0
  %937 = vmatpush2.msra.mxu0 0.0
  %938 = vmatprep.subr.mxu0 0.0
  %939 = vmatpush2.msra.mxu0 0.0
  %940 = vmatprep.subr.mxu0 0.0
  %941 = vmatpush2.msra.mxu0 0.0
  %942 = vmatprep.mubr.f32.mxu0 0.0
  %943 = vmatmul.mubr.f32.gmra.mxu0 %v194
  %v944 = vpop.f32.mrf.mxu0
  %v945 = vadd.f32 %v871, %v944
  %v946 = vpop.f32.mrf.mxu0
  %947 = vmatprep.mubr.f32.mxu0 0.0
  %948 = vmatmul.mubr.f32.gmra.mxu0 %v197
  %v949 = vpop.f32.mrf.mxu0
  %v950 = vadd.f32 %v872, %v949
  %v951 = vpop.f32.mrf.mxu0
  %952 = vmatprep.mubr.f32.mxu0 0.0
  %953 = vmatmul.mubr.f32.gmra.mxu0 %v200
  %v954 = vpop.f32.mrf.mxu0
  %v955 = vadd.f32 %v873, %v954
  %v956 = vpop.f32.mrf.mxu0
  %957 = vdwg.mxu0
  %s958 = scalar_lea.vmem %s4, 64
  %v959 = vld [vmem:[%s958] sm:$0xff]
  %v960 = vld [vmem:[%s958 + $0x8] sm:$0xff]
  %v961 = vld [vmem:[%s958 + $0x10] sm:$0xff]
  %v962 = vld [vmem:[%s958 + $0x18] sm:$0xff]
  %s963 = scalar_lea.vmem %s5, 2
  %v964 = vld [vmem:[%s963] sm:$0x1]
  %v966 = vlaneseq
  %v967 = vshrl.u32 %v966, 7
  %v968 = vsub.s32 0, %v967
  %v969 = vrot.slane %v964, %v968
  %v972 = vsel %vm293, %v945, 0
  %v975 = vsel %vm293, %v950, 0
  %v978 = vsel %vm293, %v955, 0
  %980 = vmatprep.subr.mxu0 0.0
  %981 = vmatpush1.msra.mxu0 0.0
  %982 = vmatprep.subr.mxu0 0.0
  %983 = vmatpush1.msra.mxu0 0.0
  %984 = vmatprep.subr.mxu0 0.0
  %985 = vmatpush1.msra.mxu0 0.0
  %986 = vmatprep.subr.mxu0 0.0
  %987 = vmatpush1.msra.mxu0 0.0
  %988 = vmatprep.subr.mxu0 0.0
  %989 = vmatpush1.msra.mxu0 0.0
  %990 = vmatprep.subr.mxu0 0.0
  %991 = vmatpush1.msra.mxu0 0.0
  %992 = vmatprep.subr.mxu0 0.0
  %993 = vmatpush1.msra.mxu0 0.0
  %994 = vmatprep.subr.mxu0 0.0
  %995 = vmatpush1.msra.mxu0 0.0
  %996 = vmatprep.subr.mxu0 0.0
  %997 = vmatpush1.msra.mxu0 0.0
  %998 = vmatprep.subr.mxu0 0.0
  %999 = vmatpush1.msra.mxu0 0.0
  %1000 = vmatprep.subr.mxu0 0.0
  %1001 = vmatpush1.msra.mxu0 0.0
  %1002 = vmatprep.subr.mxu0 0.0
  %1003 = vmatpush1.msra.mxu0 0.0
  %1004 = vmatprep.subr.mxu0 0.0
  %1005 = vmatpush1.msra.mxu0 %v962
  %1006 = vmatprep.subr.mxu0 0.0
  %1007 = vmatpush1.msra.mxu0 %v961
  %1008 = vmatprep.subr.mxu0 0.0
  %1009 = vmatpush1.msra.mxu0 %v960
  %1010 = vmatprep.subr.mxu0 0.0
  %1011 = vmatpush1.msra.mxu0 %v959
  %1012 = vmatprep.subr.mxu0 0.0
  %1013 = vmatpush2.msra.mxu0 0.0
  %1014 = vmatprep.subr.mxu0 0.0
  %1015 = vmatpush2.msra.mxu0 0.0
  %1016 = vmatprep.subr.mxu0 0.0
  %1017 = vmatpush2.msra.mxu0 0.0
  %1018 = vmatprep.subr.mxu0 0.0
  %1019 = vmatpush2.msra.mxu0 0.0
  %1020 = vmatprep.subr.mxu0 0.0
  %1021 = vmatpush2.msra.mxu0 0.0
  %1022 = vmatprep.subr.mxu0 0.0
  %1023 = vmatpush2.msra.mxu0 0.0
  %1024 = vmatprep.subr.mxu0 0.0
  %1025 = vmatpush2.msra.mxu0 0.0
  %1026 = vmatprep.subr.mxu0 0.0
  %1027 = vmatpush2.msra.mxu0 0.0
  %1028 = vmatprep.subr.mxu0 0.0
  %1029 = vmatpush2.msra.mxu0 0.0
  %1030 = vmatprep.subr.mxu0 0.0
  %1031 = vmatpush2.msra.mxu0 0.0
  %1032 = vmatprep.subr.mxu0 0.0
  %1033 = vmatpush2.msra.mxu0 0.0
  %1034 = vmatprep.subr.mxu0 0.0
  %1035 = vmatpush2.msra.mxu0 0.0
  %1036 = vmatprep.subr.mxu0 0.0
  %1037 = vmatpush2.msra.mxu0 0.0
  %1038 = vmatprep.subr.mxu0 0.0
  %1039 = vmatpush2.msra.mxu0 0.0
  %1040 = vmatprep.subr.mxu0 0.0
  %1041 = vmatpush2.msra.mxu0 0.0
  %1042 = vmatprep.subr.mxu0 0.0
  %1043 = vmatpush2.msra.mxu0 0.0
  %1044 = vmatprep.mubr.f32.mxu0 0.0
  %1045 = vmatmul.mubr.f32.gmra.mxu0 %v972
  %v1046 = vpop.f32.mrf.mxu0
  %v1047 = vadd.f32 %v969, %v1046
  %v1048 = vpop.f32.mrf.mxu0
  %1049 = vmatprep.mubr.f32.mxu0 0.0
  %1050 = vmatmul.mubr.f32.gmra.mxu0 %v975
  %v1051 = vpop.f32.mrf.mxu0
  %v1052 = vadd.f32 %v969, %v1051
  %v1053 = vpop.f32.mrf.mxu0
  %1054 = vmatprep.mubr.f32.mxu0 0.0
  %1055 = vmatmul.mubr.f32.gmra.mxu0 %v978
  %v1056 = vpop.f32.mrf.mxu0
  %v1057 = vadd.f32 %v969, %v1056
  %v1058 = vpop.f32.mrf.mxu0
  %1059 = vdwg.mxu0
  %v1060 = vsel %vm383, %v1047, 0.0
  %v1061 = vsel %vm383, %v1052, 0.0
  %v1062 = vadd.f32 %v1060, %v1061
  %v1063 = vsel %vm383, %v1057, 0.0
  %v1064 = vadd.f32 %v1062, %v1063
  %v1065 = vrot.slane %v1064, 4
  %v1066 = vadd.f32 %v1064, %v1065
  %v1067 = vrot.slane %v1066, 2
  %v1068 = vadd.f32 %v1066, %v1067
  %v1069 = vrot.slane %v1068, 1
  %v1070 = vadd.f32 %v1068, %v1069
  %v1071 = vmul.f32 %v1070, %v395
  %v1072 = vmul.f32 %v1047, %v1047
  %v1073 = vmul.f32 %v1052, %v1052
  %v1074 = vmul.f32 %v1057, %v1057
  %v1075 = vsel %vm383, %v1072, 0.0
  %v1076 = vsel %vm383, %v1073, 0.0
  %v1077 = vadd.f32 %v1075, %v1076
  %v1078 = vsel %vm383, %v1074, 0.0
  %v1079 = vadd.f32 %v1077, %v1078
  %v1080 = vrot.slane %v1079, 4
  %v1081 = vadd.f32 %v1079, %v1080
  %v1082 = vrot.slane %v1081, 2
  %v1083 = vadd.f32 %v1081, %v1082
  %v1084 = vrot.slane %v1083, 1
  %v1085 = vadd.f32 %v1083, %v1084
  %v1086 = vmul.f32 %v1085, %v395
  %v1087 = vmul.f32 %v1071, %v1071
  %v1088 = vsub.f32 %v1086, %v1087
  %v1089 = vmax.f32 %v1088, 0.0
  %v1090 = vsub.f32 %v1047, %v1071
  %v1091 = vsub.f32 %v1052, %v1071
  %v1092 = vsub.f32 %v1057, %v1071
  %v1093 = vadd.f32 %v1089, 1e-05
  %v1094 = vrsqrt.pop %v1093
  %v1095 = vmul.f32 %v1090, %v1094
  %v1096 = vmul.f32 %v1091, %v1094
  %v1097 = vmul.f32 %v1092, %v1094
  %v1098 = vmax.f32 %v1095, 0.0
  %v1099 = vmax.f32 %v1096, 0.0
  %v1100 = vmax.f32 %v1097, 0.0
  %s1101 = scalar_lea.vmem %s6, 128
  %v1102 = vld [vmem:[%s1101] sm:$0xff]
  %v1103 = vld [vmem:[%s1101 + $0x8] sm:$0xff]
  %v1104 = vld [vmem:[%s1101 + $0x10] sm:$0xff]
  %v1105 = vld [vmem:[%s1101 + $0x18] sm:$0xff]
  %v1106 = vld [vmem:[%s1101 + $0x20] sm:$0xff]
  %v1107 = vld [vmem:[%s1101 + $0x28] sm:$0xff]
  %v1108 = vld [vmem:[%s1101 + $0x30] sm:$0xff]
  %v1109 = vld [vmem:[%s1101 + $0x38] sm:$0xff]
  %s1110 = scalar_lea.vmem %s7, 2
  %v1111 = vld [vmem:[%s1110] sm:$0x1]
  %v1113 = vlaneseq
  %v1114 = vshrl.u32 %v1113, 7
  %v1115 = vsub.s32 0, %v1114
  %v1116 = vrot.slane %v1111, %v1115
  %v1119 = vsel %vm383, %v1098, 0
  %v1122 = vsel %vm383, %v1099, 0
  %v1125 = vsel %vm383, %v1100, 0
  %1127 = vmatprep.subr.mxu0 0.0
  %1128 = vmatpush1.msra.mxu0 0.0
  %1129 = vmatprep.subr.mxu0 0.0
  %1130 = vmatpush1.msra.mxu0 0.0
  %1131 = vmatprep.subr.mxu0 0.0
  %1132 = vmatpush1.msra.mxu0 0.0
  %1133 = vmatprep.subr.mxu0 0.0
  %1134 = vmatpush1.msra.mxu0 0.0
  %1135 = vmatprep.subr.mxu0 0.0
  %1136 = vmatpush1.msra.mxu0 0.0
  %1137 = vmatprep.subr.mxu0 0.0
  %1138 = vmatpush1.msra.mxu0 0.0
  %1139 = vmatprep.subr.mxu0 0.0
  %1140 = vmatpush1.msra.mxu0 0.0
  %1141 = vmatprep.subr.mxu0 0.0
  %1142 = vmatpush1.msra.mxu0 0.0
  %1143 = vmatprep.subr.mxu0 0.0
  %1144 = vmatpush1.msra.mxu0 %v1109
  %1145 = vmatprep.subr.mxu0 0.0
  %1146 = vmatpush1.msra.mxu0 %v1108
  %1147 = vmatprep.subr.mxu0 0.0
  %1148 = vmatpush1.msra.mxu0 %v1107
  %1149 = vmatprep.subr.mxu0 0.0
  %1150 = vmatpush1.msra.mxu0 %v1106
  %1151 = vmatprep.subr.mxu0 0.0
  %1152 = vmatpush1.msra.mxu0 %v1105
  %1153 = vmatprep.subr.mxu0 0.0
  %1154 = vmatpush1.msra.mxu0 %v1104
  %1155 = vmatprep.subr.mxu0 0.0
  %1156 = vmatpush1.msra.mxu0 %v1103
  %1157 = vmatprep.subr.mxu0 0.0
  %1158 = vmatpush1.msra.mxu0 %v1102
  %1159 = vmatprep.subr.mxu0 0.0
  %1160 = vmatpush2.msra.mxu0 0.0
  %1161 = vmatprep.subr.mxu0 0.0
  %1162 = vmatpush2.msra.mxu0 0.0
  %1163 = vmatprep.subr.mxu0 0.0
  %1164 = vmatpush2.msra.mxu0 0.0
  %1165 = vmatprep.subr.mxu0 0.0
  %1166 = vmatpush2.msra.mxu0 0.0
  %1167 = vmatprep.subr.mxu0 0.0
  %1168 = vmatpush2.msra.mxu0 0.0
  %1169 = vmatprep.subr.mxu0 0.0
  %1170 = vmatpush2.msra.mxu0 0.0
  %1171 = vmatprep.subr.mxu0 0.0
  %1172 = vmatpush2.msra.mxu0 0.0
  %1173 = vmatprep.subr.mxu0 0.0
  %1174 = vmatpush2.msra.mxu0 0.0
  %1175 = vmatprep.subr.mxu0 0.0
  %1176 = vmatpush2.msra.mxu0 0.0
  %1177 = vmatprep.subr.mxu0 0.0
  %1178 = vmatpush2.msra.mxu0 0.0
  %1179 = vmatprep.subr.mxu0 0.0
  %1180 = vmatpush2.msra.mxu0 0.0
  %1181 = vmatprep.subr.mxu0 0.0
  %1182 = vmatpush2.msra.mxu0 0.0
  %1183 = vmatprep.subr.mxu0 0.0
  %1184 = vmatpush2.msra.mxu0 0.0
  %1185 = vmatprep.subr.mxu0 0.0
  %1186 = vmatpush2.msra.mxu0 0.0
  %1187 = vmatprep.subr.mxu0 0.0
  %1188 = vmatpush2.msra.mxu0 0.0
  %1189 = vmatprep.subr.mxu0 0.0
  %1190 = vmatpush2.msra.mxu0 0.0
  %1191 = vmatprep.mubr.f32.mxu0 0.0
  %1192 = vmatmul.mubr.f32.gmra.mxu0 %v1119
  %v1193 = vpop.f32.mrf.mxu0
  %v1194 = vadd.f32 %v1116, %v1193
  %v1195 = vpop.f32.mrf.mxu0
  %1196 = vmatprep.mubr.f32.mxu0 0.0
  %1197 = vmatmul.mubr.f32.gmra.mxu0 %v1122
  %v1198 = vpop.f32.mrf.mxu0
  %v1199 = vadd.f32 %v1116, %v1198
  %v1200 = vpop.f32.mrf.mxu0
  %1201 = vmatprep.mubr.f32.mxu0 0.0
  %1202 = vmatmul.mubr.f32.gmra.mxu0 %v1125
  %v1203 = vpop.f32.mrf.mxu0
  %v1204 = vadd.f32 %v1116, %v1203
  %v1205 = vpop.f32.mrf.mxu0
  %1206 = vdwg.mxu0
  %v1207 = vmax.f32 %v1194, 0.0
  %v1208 = vmax.f32 %v1199, 0.0
  %v1209 = vmax.f32 %v1204, 0.0
  %v1210 = vadd.f32 %v1207, %v871
  %v1211 = vadd.f32 %v1208, %v872
  %v1212 = vadd.f32 %v1209, %v873
  %s1213 = scalar_lea.vmem [#allocation2], 48
  %1214 = vst.msk [vmem:[%s1213] sm:$0xff] %vm293, %v1210
  %1215 = vst.msk [vmem:[%s1213 + $0x8] sm:$0xff] %vm293, %v1211
  %1216 = vst.msk [vmem:[%s1213 + $0x10] sm:$0xff] %vm293, %v1212
  %1217 = vmatprep.subr.mxu0 0.0
  %1218 = vmatpush1.msra.mxu0 0.0
  %1219 = vmatprep.subr.mxu0 0.0
  %1220 = vmatpush1.msra.mxu0 0.0
  %1221 = vmatprep.subr.mxu0 0.0
  %1222 = vmatpush1.msra.mxu0 0.0
  %1223 = vmatprep.subr.mxu0 0.0
  %1224 = vmatpush1.msra.mxu0 0.0
  %1225 = vmatprep.subr.mxu0 0.0
  %1226 = vmatpush1.msra.mxu0 0.0
  %1227 = vmatprep.subr.mxu0 0.0
  %1228 = vmatpush1.msra.mxu0 0.0
  %1229 = vmatprep.subr.mxu0 0.0
  %1230 = vmatpush1.msra.mxu0 0.0
  %1231 = vmatprep.subr.mxu0 0.0
  %1232 = vmatpush1.msra.mxu0 0.0
  %1233 = vmatprep.subr.mxu0 0.0
  %1234 = vmatpush1.msra.mxu0 0.0
  %1235 = vmatprep.subr.mxu0 0.0
  %1236 = vmatpush1.msra.mxu0 0.0
  %1237 = vmatprep.subr.mxu0 0.0
  %1238 = vmatpush1.msra.mxu0 0.0
  %1239 = vmatprep.subr.mxu0 0.0
  %1240 = vmatpush1.msra.mxu0 0.0
  %1241 = vmatprep.subr.mxu0 0.0
  %1242 = vmatpush1.msra.mxu0 0.0
  %1243 = vmatprep.subr.mxu0 0.0
  %1244 = vmatpush1.msra.mxu0 %v1212
  %1245 = vmatprep.subr.mxu0 0.0
  %1246 = vmatpush1.msra.mxu0 %v1211
  %1247 = vmatprep.subr.mxu0 0.0
  %1248 = vmatpush1.msra.mxu0 %v1210
  %1249 = vmatprep.subr.mxu0 0.0
  %1250 = vmatpush2.msra.mxu0 0.0
  %1251 = vmatprep.subr.mxu0 0.0
  %1252 = vmatpush2.msra.mxu0 0.0
  %1253 = vmatprep.subr.mxu0 0.0
  %1254 = vmatpush2.msra.mxu0 0.0
  %1255 = vmatprep.subr.mxu0 0.0
  %1256 = vmatpush2.msra.mxu0 0.0
  %1257 = vmatprep.subr.mxu0 0.0
  %1258 = vmatpush2.msra.mxu0 0.0
  %1259 = vmatprep.subr.mxu0 0.0
  %1260 = vmatpush2.msra.mxu0 0.0
  %1261 = vmatprep.subr.mxu0 0.0
  %1262 = vmatpush2.msra.mxu0 0.0
  %1263 = vmatprep.subr.mxu0 0.0
  %1264 = vmatpush2.msra.mxu0 0.0
  %1265 = vmatprep.subr.mxu0 0.0
  %1266 = vmatpush2.msra.mxu0 0.0
  %1267 = vmatprep.subr.mxu0 0.0
  %1268 = vmatpush2.msra.mxu0 0.0
  %1269 = vmatprep.subr.mxu0 0.0
  %1270 = vmatpush2.msra.mxu0 0.0
  %1271 = vmatprep.subr.mxu0 0.0
  %1272 = vmatpush2.msra.mxu0 0.0
  %1273 = vmatprep.subr.mxu0 0.0
  %1274 = vmatpush2.msra.mxu0 0.0
  %1275 = vmatprep.subr.mxu0 0.0
  %1276 = vmatpush2.msra.mxu0 0.0
  %1277 = vmatprep.subr.mxu0 0.0
  %1278 = vmatpush2.msra.mxu0 0.0
  %1279 = vmatprep.subr.mxu0 0.0
  %1280 = vmatpush2.msra.mxu0 0.0
  %1281 = vmatprep.mubr.f32.mxu0 0.0
  %1282 = vmatmul.mubr.f32.gmra.mxu0 %v194
  %v1283 = vpop.f32.mrf.mxu0
  %v1284 = vadd.f32 %v1210, %v1283
  %v1285 = vpop.f32.mrf.mxu0
  %1286 = vmatprep.mubr.f32.mxu0 0.0
  %1287 = vmatmul.mubr.f32.gmra.mxu0 %v197
  %v1288 = vpop.f32.mrf.mxu0
  %v1289 = vadd.f32 %v1211, %v1288
  %v1290 = vpop.f32.mrf.mxu0
  %1291 = vmatprep.mubr.f32.mxu0 0.0
  %1292 = vmatmul.mubr.f32.gmra.mxu0 %v200
  %v1293 = vpop.f32.mrf.mxu0
  %v1294 = vadd.f32 %v1212, %v1293
  %v1295 = vpop.f32.mrf.mxu0
  %1296 = vdwg.mxu0
  %s1297 = scalar_lea.vmem %s4, 96
  %v1298 = vld [vmem:[%s1297] sm:$0xff]
  %v1299 = vld [vmem:[%s1297 + $0x8] sm:$0xff]
  %v1300 = vld [vmem:[%s1297 + $0x10] sm:$0xff]
  %v1301 = vld [vmem:[%s1297 + $0x18] sm:$0xff]
  %s1302 = scalar_lea.vmem %s5, 3
  %v1303 = vld [vmem:[%s1302] sm:$0x1]
  %v1305 = vlaneseq
  %v1306 = vshrl.u32 %v1305, 7
  %v1307 = vsub.s32 0, %v1306
  %v1308 = vrot.slane %v1303, %v1307
  %v1311 = vsel %vm293, %v1284, 0
  %v1314 = vsel %vm293, %v1289, 0
  %v1317 = vsel %vm293, %v1294, 0
  %1319 = vmatprep.subr.mxu0 0.0
  %1320 = vmatpush1.msra.mxu0 0.0
  %1321 = vmatprep.subr.mxu0 0.0
  %1322 = vmatpush1.msra.mxu0 0.0
  %1323 = vmatprep.subr.mxu0 0.0
  %1324 = vmatpush1.msra.mxu0 0.0
  %1325 = vmatprep.subr.mxu0 0.0
  %1326 = vmatpush1.msra.mxu0 0.0
  %1327 = vmatprep.subr.mxu0 0.0
  %1328 = vmatpush1.msra.mxu0 0.0
  %1329 = vmatprep.subr.mxu0 0.0
  %1330 = vmatpush1.msra.mxu0 0.0
  %1331 = vmatprep.subr.mxu0 0.0
  %1332 = vmatpush1.msra.mxu0 0.0
  %1333 = vmatprep.subr.mxu0 0.0
  %1334 = vmatpush1.msra.mxu0 0.0
  %1335 = vmatprep.subr.mxu0 0.0
  %1336 = vmatpush1.msra.mxu0 0.0
  %1337 = vmatprep.subr.mxu0 0.0
  %1338 = vmatpush1.msra.mxu0 0.0
  %1339 = vmatprep.subr.mxu0 0.0
  %1340 = vmatpush1.msra.mxu0 0.0
  %1341 = vmatprep.subr.mxu0 0.0
  %1342 = vmatpush1.msra.mxu0 0.0
  %1343 = vmatprep.subr.mxu0 0.0
  %1344 = vmatpush1.msra.mxu0 %v1301
  %1345 = vmatprep.subr.mxu0 0.0
  %1346 = vmatpush1.msra.mxu0 %v1300
  %1347 = vmatprep.subr.mxu0 0.0
  %1348 = vmatpush1.msra.mxu0 %v1299
  %1349 = vmatprep.subr.mxu0 0.0
  %1350 = vmatpush1.msra.mxu0 %v1298
  %1351 = vmatprep.subr.mxu0 0.0
  %1352 = vmatpush2.msra.mxu0 0.0
  %1353 = vmatprep.subr.mxu0 0.0
  %1354 = vmatpush2.msra.mxu0 0.0
  %1355 = vmatprep.subr.mxu0 0.0
  %1356 = vmatpush2.msra.mxu0 0.0
  %1357 = vmatprep.subr.mxu0 0.0
  %1358 = vmatpush2.msra.mxu0 0.0
  %1359 = vmatprep.subr.mxu0 0.0
  %1360 = vmatpush2.msra.mxu0 0.0
  %1361 = vmatprep.subr.mxu0 0.0
  %1362 = vmatpush2.msra.mxu0 0.0
  %1363 = vmatprep.subr.mxu0 0.0
  %1364 = vmatpush2.msra.mxu0 0.0
  %1365 = vmatprep.subr.mxu0 0.0
  %1366 = vmatpush2.msra.mxu0 0.0
  %1367 = vmatprep.subr.mxu0 0.0
  %1368 = vmatpush2.msra.mxu0 0.0
  %1369 = vmatprep.subr.mxu0 0.0
  %1370 = vmatpush2.msra.mxu0 0.0
  %1371 = vmatprep.subr.mxu0 0.0
  %1372 = vmatpush2.msra.mxu0 0.0
  %1373 = vmatprep.subr.mxu0 0.0
  %1374 = vmatpush2.msra.mxu0 0.0
  %1375 = vmatprep.subr.mxu0 0.0
  %1376 = vmatpush2.msra.mxu0 0.0
  %1377 = vmatprep.subr.mxu0 0.0
  %1378 = vmatpush2.msra.mxu0 0.0
  %1379 = vmatprep.subr.mxu0 0.0
  %1380 = vmatpush2.msra.mxu0 0.0
  %1381 = vmatprep.subr.mxu0 0.0
  %1382 = vmatpush2.msra.mxu0 0.0
  %1383 = vmatprep.mubr.f32.mxu0 0.0
  %1384 = vmatmul.mubr.f32.gmra.mxu0 %v1311
  %v1385 = vpop.f32.mrf.mxu0
  %v1386 = vadd.f32 %v1308, %v1385
  %v1387 = vpop.f32.mrf.mxu0
  %1388 = vmatprep.mubr.f32.mxu0 0.0
  %1389 = vmatmul.mubr.f32.gmra.mxu0 %v1314
  %v1390 = vpop.f32.mrf.mxu0
  %v1391 = vadd.f32 %v1308, %v1390
  %v1392 = vpop.f32.mrf.mxu0
  %1393 = vmatprep.mubr.f32.mxu0 0.0
  %1394 = vmatmul.mubr.f32.gmra.mxu0 %v1317
  %v1395 = vpop.f32.mrf.mxu0
  %v1396 = vadd.f32 %v1308, %v1395
  %v1397 = vpop.f32.mrf.mxu0
  %1398 = vdwg.mxu0
  %v1399 = vsel %vm383, %v1386, 0.0
  %v1400 = vsel %vm383, %v1391, 0.0
  %v1401 = vadd.f32 %v1399, %v1400
  %v1402 = vsel %vm383, %v1396, 0.0
  %v1403 = vadd.f32 %v1401, %v1402
  %v1404 = vrot.slane %v1403, 4
  %v1405 = vadd.f32 %v1403, %v1404
  %v1406 = vrot.slane %v1405, 2
  %v1407 = vadd.f32 %v1405, %v1406
  %v1408 = vrot.slane %v1407, 1
  %v1409 = vadd.f32 %v1407, %v1408
  %v1410 = vmul.f32 %v1409, %v395
  %v1411 = vmul.f32 %v1386, %v1386
  %v1412 = vmul.f32 %v1391, %v1391
  %v1413 = vmul.f32 %v1396, %v1396
  %v1414 = vsel %vm383, %v1411, 0.0
  %v1415 = vsel %vm383, %v1412, 0.0
  %v1416 = vadd.f32 %v1414, %v1415
  %v1417 = vsel %vm383, %v1413, 0.0
  %v1418 = vadd.f32 %v1416, %v1417
  %v1419 = vrot.slane %v1418, 4
  %v1420 = vadd.f32 %v1418, %v1419
  %v1421 = vrot.slane %v1420, 2
  %v1422 = vadd.f32 %v1420, %v1421
  %v1423 = vrot.slane %v1422, 1
  %v1424 = vadd.f32 %v1422, %v1423
  %v1425 = vmul.f32 %v1424, %v395
  %v1426 = vmul.f32 %v1410, %v1410
  %v1427 = vsub.f32 %v1425, %v1426
  %v1428 = vmax.f32 %v1427, 0.0
  %v1429 = vsub.f32 %v1386, %v1410
  %v1430 = vsub.f32 %v1391, %v1410
  %v1431 = vsub.f32 %v1396, %v1410
  %v1432 = vadd.f32 %v1428, 1e-05
  %v1433 = vrsqrt.pop %v1432
  %v1434 = vmul.f32 %v1429, %v1433
  %v1435 = vmul.f32 %v1430, %v1433
  %v1436 = vmul.f32 %v1431, %v1433
  %v1437 = vmax.f32 %v1434, 0.0
  %v1438 = vmax.f32 %v1435, 0.0
  %v1439 = vmax.f32 %v1436, 0.0
  %s1440 = scalar_lea.vmem %s6, 192
  %v1441 = vld [vmem:[%s1440] sm:$0xff]
  %v1442 = vld [vmem:[%s1440 + $0x8] sm:$0xff]
  %v1443 = vld [vmem:[%s1440 + $0x10] sm:$0xff]
  %v1444 = vld [vmem:[%s1440 + $0x18] sm:$0xff]
  %v1445 = vld [vmem:[%s1440 + $0x20] sm:$0xff]
  %v1446 = vld [vmem:[%s1440 + $0x28] sm:$0xff]
  %v1447 = vld [vmem:[%s1440 + $0x30] sm:$0xff]
  %v1448 = vld [vmem:[%s1440 + $0x38] sm:$0xff]
  %s1449 = scalar_lea.vmem %s7, 3
  %v1450 = vld [vmem:[%s1449] sm:$0x1]
  %v1452 = vlaneseq
  %v1453 = vshrl.u32 %v1452, 7
  %v1454 = vsub.s32 0, %v1453
  %v1455 = vrot.slane %v1450, %v1454
  %v1458 = vsel %vm383, %v1437, 0
  %v1461 = vsel %vm383, %v1438, 0
  %v1464 = vsel %vm383, %v1439, 0
  %1466 = vmatprep.subr.mxu0 0.0
  %1467 = vmatpush1.msra.mxu0 0.0
  %1468 = vmatprep.subr.mxu0 0.0
  %1469 = vmatpush1.msra.mxu0 0.0
  %1470 = vmatprep.subr.mxu0 0.0
  %1471 = vmatpush1.msra.mxu0 0.0
  %1472 = vmatprep.subr.mxu0 0.0
  %1473 = vmatpush1.msra.mxu0 0.0
  %1474 = vmatprep.subr.mxu0 0.0
  %1475 = vmatpush1.msra.mxu0 0.0
  %1476 = vmatprep.subr.mxu0 0.0
  %1477 = vmatpush1.msra.mxu0 0.0
  %1478 = vmatprep.subr.mxu0 0.0
  %1479 = vmatpush1.msra.mxu0 0.0
  %1480 = vmatprep.subr.mxu0 0.0
  %1481 = vmatpush1.msra.mxu0 0.0
  %1482 = vmatprep.subr.mxu0 0.0
  %1483 = vmatpush1.msra.mxu0 %v1448
  %1484 = vmatprep.subr.mxu0 0.0
  %1485 = vmatpush1.msra.mxu0 %v1447
  %1486 = vmatprep.subr.mxu0 0.0
  %1487 = vmatpush1.msra.mxu0 %v1446
  %1488 = vmatprep.subr.mxu0 0.0
  %1489 = vmatpush1.msra.mxu0 %v1445
  %1490 = vmatprep.subr.mxu0 0.0
  %1491 = vmatpush1.msra.mxu0 %v1444
  %1492 = vmatprep.subr.mxu0 0.0
  %1493 = vmatpush1.msra.mxu0 %v1443
  %1494 = vmatprep.subr.mxu0 0.0
  %1495 = vmatpush1.msra.mxu0 %v1442
  %1496 = vmatprep.subr.mxu0 0.0
  %1497 = vmatpush1.msra.mxu0 %v1441
  %1498 = vmatprep.subr.mxu0 0.0
  %1499 = vmatpush2.msra.mxu0 0.0
  %1500 = vmatprep.subr.mxu0 0.0
  %1501 = vmatpush2.msra.mxu0 0.0
  %1502 = vmatprep.subr.mxu0 0.0
  %1503 = vmatpush2.msra.mxu0 0.0
  %1504 = vmatprep.subr.mxu0 0.0
  %1505 = vmatpush2.msra.mxu0 0.0
  %1506 = vmatprep.subr.mxu0 0.0
  %1507 = vmatpush2.msra.mxu0 0.0
  %1508 = vmatprep.subr.mxu0 0.0
  %1509 = vmatpush2.msra.mxu0 0.0
  %1510 = vmatprep.subr.mxu0 0.0
  %1511 = vmatpush2.msra.mxu0 0.0
  %1512 = vmatprep.subr.mxu0 0.0
  %1513 = vmatpush2.msra.mxu0 0.0
  %1514 = vmatprep.subr.mxu0 0.0
  %1515 = vmatpush2.msra.mxu0 0.0
  %1516 = vmatprep.subr.mxu0 0.0
  %1517 = vmatpush2.msra.mxu0 0.0
  %1518 = vmatprep.subr.mxu0 0.0
  %1519 = vmatpush2.msra.mxu0 0.0
  %1520 = vmatprep.subr.mxu0 0.0
  %1521 = vmatpush2.msra.mxu0 0.0
  %1522 = vmatprep.subr.mxu0 0.0
  %1523 = vmatpush2.msra.mxu0 0.0
  %1524 = vmatprep.subr.mxu0 0.0
  %1525 = vmatpush2.msra.mxu0 0.0
  %1526 = vmatprep.subr.mxu0 0.0
  %1527 = vmatpush2.msra.mxu0 0.0
  %1528 = vmatprep.subr.mxu0 0.0
  %1529 = vmatpush2.msra.mxu0 0.0
  %1530 = vmatprep.mubr.f32.mxu0 0.0
  %1531 = vmatmul.mubr.f32.gmra.mxu0 %v1458
  %v1532 = vpop.f32.mrf.mxu0
  %v1533 = vadd.f32 %v1455, %v1532
  %v1534 = vpop.f32.mrf.mxu0
  %1535 = vmatprep.mubr.f32.mxu0 0.0
  %1536 = vmatmul.mubr.f32.gmra.mxu0 %v1461
  %v1537 = vpop.f32.mrf.mxu0
  %v1538 = vadd.f32 %v1455, %v1537
  %v1539 = vpop.f32.mrf.mxu0
  %1540 = vmatprep.mubr.f32.mxu0 0.0
  %1541 = vmatmul.mubr.f32.gmra.mxu0 %v1464
  %v1542 = vpop.f32.mrf.mxu0
  %v1543 = vadd.f32 %v1455, %v1542
  %v1544 = vpop.f32.mrf.mxu0
  %1545 = vdwg.mxu0
  %v1546 = vmax.f32 %v1533, 0.0
  %v1547 = vmax.f32 %v1538, 0.0
  %v1548 = vmax.f32 %v1543, 0.0
  %v1549 = vadd.f32 %v1546, %v1210
  %v1550 = vadd.f32 %v1547, %v1211
  %v1551 = vadd.f32 %v1548, %v1212
  %s1552 = scalar_lea.vmem [#allocation2], 72
  %1553 = vst.msk [vmem:[%s1552] sm:$0xff] %vm293, %v1549
  %1554 = vst.msk [vmem:[%s1552 + $0x8] sm:$0xff] %vm293, %v1550
  %1555 = vst.msk [vmem:[%s1552 + $0x10] sm:$0xff] %vm293, %v1551
  %1556 = vmatprep.subr.mxu0 0.0
  %1557 = vmatpush1.msra.mxu0 0.0
  %1558 = vmatprep.subr.mxu0 0.0
  %1559 = vmatpush1.msra.mxu0 0.0
  %1560 = vmatprep.subr.mxu0 0.0
  %1561 = vmatpush1.msra.mxu0 0.0
  %1562 = vmatprep.subr.mxu0 0.0
  %1563 = vmatpush1.msra.mxu0 0.0
  %1564 = vmatprep.subr.mxu0 0.0
  %1565 = vmatpush1.msra.mxu0 0.0
  %1566 = vmatprep.subr.mxu0 0.0
  %1567 = vmatpush1.msra.mxu0 0.0
  %1568 = vmatprep.subr.mxu0 0.0
  %1569 = vmatpush1.msra.mxu0 0.0
  %1570 = vmatprep.subr.mxu0 0.0
  %1571 = vmatpush1.msra.mxu0 0.0
  %1572 = vmatprep.subr.mxu0 0.0
  %1573 = vmatpush1.msra.mxu0 0.0
  %1574 = vmatprep.subr.mxu0 0.0
  %1575 = vmatpush1.msra.mxu0 0.0
  %1576 = vmatprep.subr.mxu0 0.0
  %1577 = vmatpush1.msra.mxu0 0.0
  %1578 = vmatprep.subr.mxu0 0.0
  %1579 = vmatpush1.msra.mxu0 0.0
  %1580 = vmatprep.subr.mxu0 0.0
  %1581 = vmatpush1.msra.mxu0 0.0
  %1582 = vmatprep.subr.mxu0 0.0
  %1583 = vmatpush1.msra.mxu0 %v1551
  %1584 = vmatprep.subr.mxu0 0.0
  %1585 = vmatpush1.msra.mxu0 %v1550
  %1586 = vmatprep.subr.mxu0 0.0
  %1587 = vmatpush1.msra.mxu0 %v1549
  %1588 = vmatprep.subr.mxu0 0.0
  %1589 = vmatpush2.msra.mxu0 0.0
  %1590 = vmatprep.subr.mxu0 0.0
  %1591 = vmatpush2.msra.mxu0 0.0
  %1592 = vmatprep.subr.mxu0 0.0
  %1593 = vmatpush2.msra.mxu0 0.0
  %1594 = vmatprep.subr.mxu0 0.0
  %1595 = vmatpush2.msra.mxu0 0.0
  %1596 = vmatprep.subr.mxu0 0.0
  %1597 = vmatpush2.msra.mxu0 0.0
  %1598 = vmatprep.subr.mxu0 0.0
  %1599 = vmatpush2.msra.mxu0 0.0
  %1600 = vmatprep.subr.mxu0 0.0
  %1601 = vmatpush2.msra.mxu0 0.0
  %1602 = vmatprep.subr.mxu0 0.0
  %1603 = vmatpush2.msra.mxu0 0.0
  %1604 = vmatprep.subr.mxu0 0.0
  %1605 = vmatpush2.msra.mxu0 0.0
  %1606 = vmatprep.subr.mxu0 0.0
  %1607 = vmatpush2.msra.mxu0 0.0
  %1608 = vmatprep.subr.mxu0 0.0
  %1609 = vmatpush2.msra.mxu0 0.0
  %1610 = vmatprep.subr.mxu0 0.0
  %1611 = vmatpush2.msra.mxu0 0.0
  %1612 = vmatprep.subr.mxu0 0.0
  %1613 = vmatpush2.msra.mxu0 0.0
  %1614 = vmatprep.subr.mxu0 0.0
  %1615 = vmatpush2.msra.mxu0 0.0
  %1616 = vmatprep.subr.mxu0 0.0
  %1617 = vmatpush2.msra.mxu0 0.0
  %1618 = vmatprep.subr.mxu0 0.0
  %1619 = vmatpush2.msra.mxu0 0.0
  %1620 = vmatprep.mubr.f32.mxu0 0.0
  %1621 = vmatmul.mubr.f32.gmra.mxu0 %v194
  %v1622 = vpop.f32.mrf.mxu0
  %v1623 = vadd.f32 %v1549, %v1622
  %v1624 = vpop.f32.mrf.mxu0
  %1625 = vmatprep.mubr.f32.mxu0 0.0
  %1626 = vmatmul.mubr.f32.gmra.mxu0 %v197
  %v1627 = vpop.f32.mrf.mxu0
  %v1628 = vadd.f32 %v1550, %v1627
  %v1629 = vpop.f32.mrf.mxu0
  %1630 = vmatprep.mubr.f32.mxu0 0.0
  %1631 = vmatmul.mubr.f32.gmra.mxu0 %v200
  %v1632 = vpop.f32.mrf.mxu0
  %v1633 = vadd.f32 %v1551, %v1632
  %v1634 = vpop.f32.mrf.mxu0
  %1635 = vdwg.mxu0
  %s1636 = scalar_lea.vmem %s4, 128
  %v1637 = vld [vmem:[%s1636] sm:$0xff]
  %v1638 = vld [vmem:[%s1636 + $0x8] sm:$0xff]
  %v1639 = vld [vmem:[%s1636 + $0x10] sm:$0xff]
  %v1640 = vld [vmem:[%s1636 + $0x18] sm:$0xff]
  %s1641 = scalar_lea.vmem %s5, 4
  %v1642 = vld [vmem:[%s1641] sm:$0x1]
  %v1644 = vlaneseq
  %v1645 = vshrl.u32 %v1644, 7
  %v1646 = vsub.s32 0, %v1645
  %v1647 = vrot.slane %v1642, %v1646
  %v1650 = vsel %vm293, %v1623, 0
  %v1653 = vsel %vm293, %v1628, 0
  %v1656 = vsel %vm293, %v1633, 0
  %1658 = vmatprep.subr.mxu0 0.0
  %1659 = vmatpush1.msra.mxu0 0.0
  %1660 = vmatprep.subr.mxu0 0.0
  %1661 = vmatpush1.msra.mxu0 0.0
  %1662 = vmatprep.subr.mxu0 0.0
  %1663 = vmatpush1.msra.mxu0 0.0
  %1664 = vmatprep.subr.mxu0 0.0
  %1665 = vmatpush1.msra.mxu0 0.0
  %1666 = vmatprep.subr.mxu0 0.0
  %1667 = vmatpush1.msra.mxu0 0.0
  %1668 = vmatprep.subr.mxu0 0.0
  %1669 = vmatpush1.msra.mxu0 0.0
  %1670 = vmatprep.subr.mxu0 0.0
  %1671 = vmatpush1.msra.mxu0 0.0
  %1672 = vmatprep.subr.mxu0 0.0
  %1673 = vmatpush1.msra.mxu0 0.0
  %1674 = vmatprep.subr.mxu0 0.0
  %1675 = vmatpush1.msra.mxu0 0.0
  %1676 = vmatprep.subr.mxu0 0.0
  %1677 = vmatpush1.msra.mxu0 0.0
  %1678 = vmatprep.subr.mxu0 0.0
  %1679 = vmatpush1.msra.mxu0 0.0
  %1680 = vmatprep.subr.mxu0 0.0
  %1681 = vmatpush1.msra.mxu0 0.0
  %1682 = vmatprep.subr.mxu0 0.0
  %1683 = vmatpush1.msra.mxu0 %v1640
  %1684 = vmatprep.subr.mxu0 0.0
  %1685 = vmatpush1.msra.mxu0 %v1639
  %1686 = vmatprep.subr.mxu0 0.0
  %1687 = vmatpush1.msra.mxu0 %v1638
  %1688 = vmatprep.subr.mxu0 0.0
  %1689 = vmatpush1.msra.mxu0 %v1637
  %1690 = vmatprep.subr.mxu0 0.0
  %1691 = vmatpush2.msra.mxu0 0.0
  %1692 = vmatprep.subr.mxu0 0.0
  %1693 = vmatpush2.msra.mxu0 0.0
  %1694 = vmatprep.subr.mxu0 0.0
  %1695 = vmatpush2.msra.mxu0 0.0
  %1696 = vmatprep.subr.mxu0 0.0
  %1697 = vmatpush2.msra.mxu0 0.0
  %1698 = vmatprep.subr.mxu0 0.0
  %1699 = vmatpush2.msra.mxu0 0.0
  %1700 = vmatprep.subr.mxu0 0.0
  %1701 = vmatpush2.msra.mxu0 0.0
  %1702 = vmatprep.subr.mxu0 0.0
  %1703 = vmatpush2.msra.mxu0 0.0
  %1704 = vmatprep.subr.mxu0 0.0
  %1705 = vmatpush2.msra.mxu0 0.0
  %1706 = vmatprep.subr.mxu0 0.0
  %1707 = vmatpush2.msra.mxu0 0.0
  %1708 = vmatprep.subr.mxu0 0.0
  %1709 = vmatpush2.msra.mxu0 0.0
  %1710 = vmatprep.subr.mxu0 0.0
  %1711 = vmatpush2.msra.mxu0 0.0
  %1712 = vmatprep.subr.mxu0 0.0
  %1713 = vmatpush2.msra.mxu0 0.0
  %1714 = vmatprep.subr.mxu0 0.0
  %1715 = vmatpush2.msra.mxu0 0.0
  %1716 = vmatprep.subr.mxu0 0.0
  %1717 = vmatpush2.msra.mxu0 0.0
  %1718 = vmatprep.subr.mxu0 0.0
  %1719 = vmatpush2.msra.mxu0 0.0
  %1720 = vmatprep.subr.mxu0 0.0
  %1721 = vmatpush2.msra.mxu0 0.0
  %1722 = vmatprep.mubr.f32.mxu0 0.0
  %1723 = vmatmul.mubr.f32.gmra.mxu0 %v1650
  %v1724 = vpop.f32.mrf.mxu0
  %v1725 = vadd.f32 %v1647, %v1724
  %v1726 = vpop.f32.mrf.mxu0
  %1727 = vmatprep.mubr.f32.mxu0 0.0
  %1728 = vmatmul.mubr.f32.gmra.mxu0 %v1653
  %v1729 = vpop.f32.mrf.mxu0
  %v1730 = vadd.f32 %v1647, %v1729
  %v1731 = vpop.f32.mrf.mxu0
  %1732 = vmatprep.mubr.f32.mxu0 0.0
  %1733 = vmatmul.mubr.f32.gmra.mxu0 %v1656
  %v1734 = vpop.f32.mrf.mxu0
  %v1735 = vadd.f32 %v1647, %v1734
  %v1736 = vpop.f32.mrf.mxu0
  %1737 = vdwg.mxu0
  %v1738 = vsel %vm383, %v1725, 0.0
  %v1739 = vsel %vm383, %v1730, 0.0
  %v1740 = vadd.f32 %v1738, %v1739
  %v1741 = vsel %vm383, %v1735, 0.0
  %v1742 = vadd.f32 %v1740, %v1741
  %v1743 = vrot.slane %v1742, 4
  %v1744 = vadd.f32 %v1742, %v1743
  %v1745 = vrot.slane %v1744, 2
  %v1746 = vadd.f32 %v1744, %v1745
  %v1747 = vrot.slane %v1746, 1
  %v1748 = vadd.f32 %v1746, %v1747
  %v1749 = vmul.f32 %v1748, %v395
  %v1750 = vmul.f32 %v1725, %v1725
  %v1751 = vmul.f32 %v1730, %v1730
  %v1752 = vmul.f32 %v1735, %v1735
  %v1753 = vsel %vm383, %v1750, 0.0
  %v1754 = vsel %vm383, %v1751, 0.0
  %v1755 = vadd.f32 %v1753, %v1754
  %v1756 = vsel %vm383, %v1752, 0.0
  %v1757 = vadd.f32 %v1755, %v1756
  %v1758 = vrot.slane %v1757, 4
  %v1759 = vadd.f32 %v1757, %v1758
  %v1760 = vrot.slane %v1759, 2
  %v1761 = vadd.f32 %v1759, %v1760
  %v1762 = vrot.slane %v1761, 1
  %v1763 = vadd.f32 %v1761, %v1762
  %v1764 = vmul.f32 %v1763, %v395
  %v1765 = vmul.f32 %v1749, %v1749
  %v1766 = vsub.f32 %v1764, %v1765
  %v1767 = vmax.f32 %v1766, 0.0
  %v1768 = vsub.f32 %v1725, %v1749
  %v1769 = vsub.f32 %v1730, %v1749
  %v1770 = vsub.f32 %v1735, %v1749
  %v1771 = vadd.f32 %v1767, 1e-05
  %v1772 = vrsqrt.pop %v1771
  %v1773 = vmul.f32 %v1768, %v1772
  %v1774 = vmul.f32 %v1769, %v1772
  %v1775 = vmul.f32 %v1770, %v1772
  %v1776 = vmax.f32 %v1773, 0.0
  %v1777 = vmax.f32 %v1774, 0.0
  %v1778 = vmax.f32 %v1775, 0.0
  %s1779 = scalar_lea.vmem %s6, 256
  %v1780 = vld [vmem:[%s1779] sm:$0xff]
  %v1781 = vld [vmem:[%s1779 + $0x8] sm:$0xff]
  %v1782 = vld [vmem:[%s1779 + $0x10] sm:$0xff]
  %v1783 = vld [vmem:[%s1779 + $0x18] sm:$0xff]
  %v1784 = vld [vmem:[%s1779 + $0x20] sm:$0xff]
  %v1785 = vld [vmem:[%s1779 + $0x28] sm:$0xff]
  %v1786 = vld [vmem:[%s1779 + $0x30] sm:$0xff]
  %v1787 = vld [vmem:[%s1779 + $0x38] sm:$0xff]
  %s1788 = scalar_lea.vmem %s7, 4
  %v1789 = vld [vmem:[%s1788] sm:$0x1]
  %v1791 = vlaneseq
  %v1792 = vshrl.u32 %v1791, 7
  %v1793 = vsub.s32 0, %v1792
  %v1794 = vrot.slane %v1789, %v1793
  %v1797 = vsel %vm383, %v1776, 0
  %v1800 = vsel %vm383, %v1777, 0
  %v1803 = vsel %vm383, %v1778, 0
  %1805 = vmatprep.subr.mxu0 0.0
  %1806 = vmatpush1.msra.mxu0 0.0
  %1807 = vmatprep.subr.mxu0 0.0
  %1808 = vmatpush1.msra.mxu0 0.0
  %1809 = vmatprep.subr.mxu0 0.0
  %1810 = vmatpush1.msra.mxu0 0.0
  %1811 = vmatprep.subr.mxu0 0.0
  %1812 = vmatpush1.msra.mxu0 0.0
  %1813 = vmatprep.subr.mxu0 0.0
  %1814 = vmatpush1.msra.mxu0 0.0
  %1815 = vmatprep.subr.mxu0 0.0
  %1816 = vmatpush1.msra.mxu0 0.0
  %1817 = vmatprep.subr.mxu0 0.0
  %1818 = vmatpush1.msra.mxu0 0.0
  %1819 = vmatprep.subr.mxu0 0.0
  %1820 = vmatpush1.msra.mxu0 0.0
  %1821 = vmatprep.subr.mxu0 0.0
  %1822 = vmatpush1.msra.mxu0 %v1787
  %1823 = vmatprep.subr.mxu0 0.0
  %1824 = vmatpush1.msra.mxu0 %v1786
  %1825 = vmatprep.subr.mxu0 0.0
  %1826 = vmatpush1.msra.mxu0 %v1785
  %1827 = vmatprep.subr.mxu0 0.0
  %1828 = vmatpush1.msra.mxu0 %v1784
  %1829 = vmatprep.subr.mxu0 0.0
  %1830 = vmatpush1.msra.mxu0 %v1783
  %1831 = vmatprep.subr.mxu0 0.0
  %1832 = vmatpush1.msra.mxu0 %v1782
  %1833 = vmatprep.subr.mxu0 0.0
  %1834 = vmatpush1.msra.mxu0 %v1781
  %1835 = vmatprep.subr.mxu0 0.0
  %1836 = vmatpush1.msra.mxu0 %v1780
  %1837 = vmatprep.subr.mxu0 0.0
  %1838 = vmatpush2.msra.mxu0 0.0
  %1839 = vmatprep.subr.mxu0 0.0
  %1840 = vmatpush2.msra.mxu0 0.0
  %1841 = vmatprep.subr.mxu0 0.0
  %1842 = vmatpush2.msra.mxu0 0.0
  %1843 = vmatprep.subr.mxu0 0.0
  %1844 = vmatpush2.msra.mxu0 0.0
  %1845 = vmatprep.subr.mxu0 0.0
  %1846 = vmatpush2.msra.mxu0 0.0
  %1847 = vmatprep.subr.mxu0 0.0
  %1848 = vmatpush2.msra.mxu0 0.0
  %1849 = vmatprep.subr.mxu0 0.0
  %1850 = vmatpush2.msra.mxu0 0.0
  %1851 = vmatprep.subr.mxu0 0.0
  %1852 = vmatpush2.msra.mxu0 0.0
  %1853 = vmatprep.subr.mxu0 0.0
  %1854 = vmatpush2.msra.mxu0 0.0
  %1855 = vmatprep.subr.mxu0 0.0
  %1856 = vmatpush2.msra.mxu0 0.0
  %1857 = vmatprep.subr.mxu0 0.0
  %1858 = vmatpush2.msra.mxu0 0.0
  %1859 = vmatprep.subr.mxu0 0.0
  %1860 = vmatpush2.msra.mxu0 0.0
  %1861 = vmatprep.subr.mxu0 0.0
  %1862 = vmatpush2.msra.mxu0 0.0
  %1863 = vmatprep.subr.mxu0 0.0
  %1864 = vmatpush2.msra.mxu0 0.0
  %1865 = vmatprep.subr.mxu0 0.0
  %1866 = vmatpush2.msra.mxu0 0.0
  %1867 = vmatprep.subr.mxu0 0.0
  %1868 = vmatpush2.msra.mxu0 0.0
  %1869 = vmatprep.mubr.f32.mxu0 0.0
  %1870 = vmatmul.mubr.f32.gmra.mxu0 %v1797
  %v1871 = vpop.f32.mrf.mxu0
  %v1872 = vadd.f32 %v1794, %v1871
  %v1873 = vpop.f32.mrf.mxu0
  %1874 = vmatprep.mubr.f32.mxu0 0.0
  %1875 = vmatmul.mubr.f32.gmra.mxu0 %v1800
  %v1876 = vpop.f32.mrf.mxu0
  %v1877 = vadd.f32 %v1794, %v1876
  %v1878 = vpop.f32.mrf.mxu0
  %1879 = vmatprep.mubr.f32.mxu0 0.0
  %1880 = vmatmul.mubr.f32.gmra.mxu0 %v1803
  %v1881 = vpop.f32.mrf.mxu0
  %v1882 = vadd.f32 %v1794, %v1881
  %v1883 = vpop.f32.mrf.mxu0
  %1884 = vdwg.mxu0
  %v1885 = vadd.f32 %v1872, %v1549
  %v1886 = vadd.f32 %v1877, %v1550
  %v1887 = vadd.f32 %v1882, %v1551
  %s1888 = scalar_lea.vmem [#allocation2], 96
  %1889 = vst.msk [vmem:[%s1888] sm:$0xff] %vm293, %v1885
  %1890 = vst.msk [vmem:[%s1888 + $0x8] sm:$0xff] %vm293, %v1886
  %1891 = vst.msk [vmem:[%s1888 + $0x10] sm:$0xff] %vm293, %v1887
  %v1892 = vld [vmem:[%s8] sm:$0xff]
  %v1893 = vld [vmem:[%s9] sm:$0x1]
  %v1895 = vlaneseq
  %v1896 = vshrl.u32 %v1895, 7
  %v1897 = vsub.s32 0, %v1896
  %v1898 = vrot.slane %v1893, %v1897
  %1900 = vmatprep.subr.mxu0 0.0
  %1901 = vmatpush1.msra.mxu0 0.0
  %1902 = vmatprep.subr.mxu0 0.0
  %1903 = vmatpush1.msra.mxu0 0.0
  %1904 = vmatprep.subr.mxu0 0.0
  %1905 = vmatpush1.msra.mxu0 0.0
  %1906 = vmatprep.subr.mxu0 0.0
  %1907 = vmatpush1.msra.mxu0 0.0
  %1908 = vmatprep.subr.mxu0 0.0
  %1909 = vmatpush1.msra.mxu0 0.0
  %1910 = vmatprep.subr.mxu0 0.0
  %1911 = vmatpush1.msra.mxu0 0.0
  %1912 = vmatprep.subr.mxu0 0.0
  %1913 = vmatpush1.msra.mxu0 0.0
  %1914 = vmatprep.subr.mxu0 0.0
  %1915 = vmatpush1.msra.mxu0 0.0
  %1916 = vmatprep.subr.mxu0 0.0
  %1917 = vmatpush1.msra.mxu0 0.0
  %1918 = vmatprep.subr.mxu0 0.0
  %1919 = vmatpush1.msra.mxu0 0.0
  %1920 = vmatprep.subr.mxu0 0.0
  %1921 = vmatpush1.msra.mxu0 0.0
  %1922 = vmatprep.subr.mxu0 0.0
  %1923 = vmatpush1.msra.mxu0 0.0
  %1924 = vmatprep.subr.mxu0 0.0
  %1925 = vmatpush1.msra.mxu0 0.0
  %1926 = vmatprep.subr.mxu0 0.0
  %1927 = vmatpush1.msra.mxu0 0.0
  %1928 = vmatprep.subr.mxu0 0.0
  %1929 = vmatpush1.msra.mxu0 0.0
  %1930 = vmatprep.subr.mxu0 0.0
  %1931 = vmatpush1.msra.mxu0 %v1892
  %1932 = vmatprep.subr.mxu0 0.0
  %1933 = vmatpush2.msra.mxu0 0.0
  %1934 = vmatprep.subr.mxu0 0.0
  %1935 = vmatpush2.msra.mxu0 0.0
  %1936 = vmatprep.subr.mxu0 0.0
  %1937 = vmatpush2.msra.mxu0 0.0
  %1938 = vmatprep.subr.mxu0 0.0
  %1939 = vmatpush2.msra.mxu0 0.0
  %1940 = vmatprep.subr.mxu0 0.0
  %1941 = vmatpush2.msra.mxu0 0.0
  %1942 = vmatprep.subr.mxu0 0.0
  %1943 = vmatpush2.msra.mxu0 0.0
  %1944 = vmatprep.subr.mxu0 0.0
  %1945 = vmatpush2.msra.mxu0 0.0
  %1946 = vmatprep.subr.mxu0 0.0
  %1947 = vmatpush2.msra.mxu0 0.0
  %1948 = vmatprep.subr.mxu0 0.0
  %1949 = vmatpush2.msra.mxu0 0.0
  %1950 = vmatprep.subr.mxu0 0.0
  %1951 = vmatpush2.msra.mxu0 0.0
  %1952 = vmatprep.subr.mxu0 0.0
  %1953 = vmatpush2.msra.mxu0 0.0
  %1954 = vmatprep.subr.mxu0 0.0
  %1955 = vmatpush2.msra.mxu0 0.0
  %1956 = vmatprep.subr.mxu0 0.0
  %1957 = vmatpush2.msra.mxu0 0.0
  %1958 = vmatprep.subr.mxu0 0.0
  %1959 = vmatpush2.msra.mxu0 0.0
  %1960 = vmatprep.subr.mxu0 0.0
  %1961 = vmatpush2.msra.mxu0 0.0
  %1962 = vmatprep.subr.mxu0 0.0
  %1963 = vmatpush2.msra.mxu0 0.0
  %1964 = vmatprep.mubr.f32.mxu0 0.0
  %1965 = vmatmul.mubr.f32.gmra.mxu0 %v104
  %v1966 = vpop.f32.mrf.mxu0
  %v1967 = vadd.f32 %v1898, %v1966
  %v1968 = vpop.f32.mrf.mxu0
  %1969 = vmatprep.mubr.f32.mxu0 0.0
  %1970 = vmatmul.mubr.f32.gmra.mxu0 %v107
  %v1971 = vpop.f32.mrf.mxu0
  %v1972 = vadd.f32 %v1898, %v1971
  %v1973 = vpop.f32.mrf.mxu0
  %1974 = vmatprep.mubr.f32.mxu0 0.0
  %1975 = vmatmul.mubr.f32.gmra.mxu0 %v110
  %v1976 = vpop.f32.mrf.mxu0
  %v1977 = vadd.f32 %v1898, %v1976
  %v1978 = vpop.f32.mrf.mxu0
  %1979 = vdwg.mxu0
  %1980 = vmatprep.subr.mxu0 0.0
  %1981 = vmatpush1.msra.mxu0 0.0
  %1982 = vmatprep.subr.mxu0 0.0
  %1983 = vmatpush1.msra.mxu0 0.0
  %1984 = vmatprep.subr.mxu0 0.0
  %1985 = vmatpush1.msra.mxu0 0.0
  %1986 = vmatprep.subr.mxu0 0.0
  %1987 = vmatpush1.msra.mxu0 0.0
  %1988 = vmatprep.subr.mxu0 0.0
  %1989 = vmatpush1.msra.mxu0 0.0
  %1990 = vmatprep.subr.mxu0 0.0
  %1991 = vmatpush1.msra.mxu0 0.0
  %1992 = vmatprep.subr.mxu0 0.0
  %1993 = vmatpush1.msra.mxu0 0.0
  %1994 = vmatprep.subr.mxu0 0.0
  %1995 = vmatpush1.msra.mxu0 0.0
  %1996 = vmatprep.subr.mxu0 0.0
  %1997 = vmatpush1.msra.mxu0 0.0
  %1998 = vmatprep.subr.mxu0 0.0
  %1999 = vmatpush1.msra.mxu0 0.0
  %2000 = vmatprep.subr.mxu0 0.0
  %2001 = vmatpush1.msra.mxu0 0.0
  %2002 = vmatprep.subr.mxu0 0.0
  %2003 = vmatpush1.msra.mxu0 0.0
  %2004 = vmatprep.subr.mxu0 0.0
  %2005 = vmatpush1.msra.mxu0 0.0
  %2006 = vmatprep.subr.mxu0 0.0
  %2007 = vmatpush1.msra.mxu0 %v1977
  %2008 = vmatprep.subr.mxu0 0.0
  %2009 = vmatpush1.msra.mxu0 %v1972
  %2010 = vmatprep.subr.mxu0 0.0
  %2011 = vmatpush1.msra.mxu0 %v1967
  %2012 = vmatprep.subr.mxu0 0.0
  %2013 = vmatpush2.msra.mxu0 0.0
  %2014 = vmatprep.subr.mxu0 0.0
  %2015 = vmatpush2.msra.mxu0 0.0
  %2016 = vmatprep.subr.mxu0 0.0
  %2017 = vmatpush2.msra.mxu0 0.0
  %2018 = vmatprep.subr.mxu0 0.0
  %2019 = vmatpush2.msra.mxu0 0.0
  %2020 = vmatprep.subr.mxu0 0.0
  %2021 = vmatpush2.msra.mxu0 0.0
  %2022 = vmatprep.subr.mxu0 0.0
  %2023 = vmatpush2.msra.mxu0 0.0
  %2024 = vmatprep.subr.mxu0 0.0
  %2025 = vmatpush2.msra.mxu0 0.0
  %2026 = vmatprep.subr.mxu0 0.0
  %2027 = vmatpush2.msra.mxu0 0.0
  %2028 = vmatprep.subr.mxu0 0.0
  %2029 = vmatpush2.msra.mxu0 0.0
  %2030 = vmatprep.subr.mxu0 0.0
  %2031 = vmatpush2.msra.mxu0 0.0
  %2032 = vmatprep.subr.mxu0 0.0
  %2033 = vmatpush2.msra.mxu0 0.0
  %2034 = vmatprep.subr.mxu0 0.0
  %2035 = vmatpush2.msra.mxu0 0.0
  %2036 = vmatprep.subr.mxu0 0.0
  %2037 = vmatpush2.msra.mxu0 0.0
  %2038 = vmatprep.subr.mxu0 0.0
  %2039 = vmatpush2.msra.mxu0 0.0
  %2040 = vmatprep.subr.mxu0 0.0
  %2041 = vmatpush2.msra.mxu0 0.0
  %2042 = vmatprep.subr.mxu0 0.0
  %2043 = vmatpush2.msra.mxu0 0.0
  %2044 = vmatprep.mubr.f32.mxu0 0.0
  %2045 = vmatmul.mubr.f32.gmra.mxu0 %v194
  %v2046 = vpop.f32.mrf.mxu0
  %v2047 = vadd.f32 %v1967, %v2046
  %v2048 = vpop.f32.mrf.mxu0
  %2049 = vmatprep.mubr.f32.mxu0 0.0
  %2050 = vmatmul.mubr.f32.gmra.mxu0 %v197
  %v2051 = vpop.f32.mrf.mxu0
  %v2052 = vadd.f32 %v1972, %v2051
  %v2053 = vpop.f32.mrf.mxu0
  %2054 = vmatprep.mubr.f32.mxu0 0.0
  %2055 = vmatmul.mubr.f32.gmra.mxu0 %v200
  %v2056 = vpop.f32.mrf.mxu0
  %v2057 = vadd.f32 %v1977, %v2056
  %v2058 = vpop.f32.mrf.mxu0
  %2059 = vdwg.mxu0
  %v2060 = vld [vmem:[%s10] sm:$0xff]
  %v2061 = vld [vmem:[%s10 + $0x8] sm:$0xff]
  %v2062 = vld [vmem:[%s10 + $0x10] sm:$0xff]
  %v2063 = vld [vmem:[%s10 + $0x18] sm:$0xff]
  %v2064 = vld [vmem:[%s11] sm:$0x1]
  %v2066 = vlaneseq
  %v2067 = vshrl.u32 %v2066, 7
  %v2068 = vsub.s32 0, %v2067
  %v2069 = vrot.slane %v2064, %v2068
  %v2072 = vsel %vm293, %v2047, 0
  %v2075 = vsel %vm293, %v2052, 0
  %v2078 = vsel %vm293, %v2057, 0
  %2080 = vmatprep.subr.mxu0 0.0
  %2081 = vmatpush1.msra.mxu0 0.0
  %2082 = vmatprep.subr.mxu0 0.0
  %2083 = vmatpush1.msra.mxu0 0.0
  %2084 = vmatprep.subr.mxu0 0.0
  %2085 = vmatpush1.msra.mxu0 0.0
  %2086 = vmatprep.subr.mxu0 0.0
  %2087 = vmatpush1.msra.mxu0 0.0
  %2088 = vmatprep.subr.mxu0 0.0
  %2089 = vmatpush1.msra.mxu0 0.0
  %2090 = vmatprep.subr.mxu0 0.0
  %2091 = vmatpush1.msra.mxu0 0.0
  %2092 = vmatprep.subr.mxu0 0.0
  %2093 = vmatpush1.msra.mxu0 0.0
  %2094 = vmatprep.subr.mxu0 0.0
  %2095 = vmatpush1.msra.mxu0 0.0
  %2096 = vmatprep.subr.mxu0 0.0
  %2097 = vmatpush1.msra.mxu0 0.0
  %2098 = vmatprep.subr.mxu0 0.0
  %2099 = vmatpush1.msra.mxu0 0.0
  %2100 = vmatprep.subr.mxu0 0.0
  %2101 = vmatpush1.msra.mxu0 0.0
  %2102 = vmatprep.subr.mxu0 0.0
  %2103 = vmatpush1.msra.mxu0 0.0
  %2104 = vmatprep.subr.mxu0 0.0
  %2105 = vmatpush1.msra.mxu0 %v2063
  %2106 = vmatprep.subr.mxu0 0.0
  %2107 = vmatpush1.msra.mxu0 %v2062
  %2108 = vmatprep.subr.mxu0 0.0
  %2109 = vmatpush1.msra.mxu0 %v2061
  %2110 = vmatprep.subr.mxu0 0.0
  %2111 = vmatpush1.msra.mxu0 %v2060
  %2112 = vmatprep.subr.mxu0 0.0
  %2113 = vmatpush2.msra.mxu0 0.0
  %2114 = vmatprep.subr.mxu0 0.0
  %2115 = vmatpush2.msra.mxu0 0.0
  %2116 = vmatprep.subr.mxu0 0.0
  %2117 = vmatpush2.msra.mxu0 0.0
  %2118 = vmatprep.subr.mxu0 0.0
  %2119 = vmatpush2.msra.mxu0 0.0
  %2120 = vmatprep.subr.mxu0 0.0
  %2121 = vmatpush2.msra.mxu0 0.0
  %2122 = vmatprep.subr.mxu0 0.0
  %2123 = vmatpush2.msra.mxu0 0.0
  %2124 = vmatprep.subr.mxu0 0.0
  %2125 = vmatpush2.msra.mxu0 0.0
  %2126 = vmatprep.subr.mxu0 0.0
  %2127 = vmatpush2.msra.mxu0 0.0
  %2128 = vmatprep.subr.mxu0 0.0
  %2129 = vmatpush2.msra.mxu0 0.0
  %2130 = vmatprep.subr.mxu0 0.0
  %2131 = vmatpush2.msra.mxu0 0.0
  %2132 = vmatprep.subr.mxu0 0.0
  %2133 = vmatpush2.msra.mxu0 0.0
  %2134 = vmatprep.subr.mxu0 0.0
  %2135 = vmatpush2.msra.mxu0 0.0
  %2136 = vmatprep.subr.mxu0 0.0
  %2137 = vmatpush2.msra.mxu0 0.0
  %2138 = vmatprep.subr.mxu0 0.0
  %2139 = vmatpush2.msra.mxu0 0.0
  %2140 = vmatprep.subr.mxu0 0.0
  %2141 = vmatpush2.msra.mxu0 0.0
  %2142 = vmatprep.subr.mxu0 0.0
  %2143 = vmatpush2.msra.mxu0 0.0
  %2144 = vmatprep.mubr.f32.mxu0 0.0
  %2145 = vmatmul.mubr.f32.gmra.mxu0 %v2072
  %v2146 = vpop.f32.mrf.mxu0
  %v2147 = vadd.f32 %v2069, %v2146
  %v2148 = vpop.f32.mrf.mxu0
  %2149 = vmatprep.mubr.f32.mxu0 0.0
  %2150 = vmatmul.mubr.f32.gmra.mxu0 %v2075
  %v2151 = vpop.f32.mrf.mxu0
  %v2152 = vadd.f32 %v2069, %v2151
  %v2153 = vpop.f32.mrf.mxu0
  %2154 = vmatprep.mubr.f32.mxu0 0.0
  %2155 = vmatmul.mubr.f32.gmra.mxu0 %v2078
  %v2156 = vpop.f32.mrf.mxu0
  %v2157 = vadd.f32 %v2069, %v2156
  %v2158 = vpop.f32.mrf.mxu0
  %2159 = vdwg.mxu0
  %v2160 = vsel %vm383, %v2147, 0.0
  %v2161 = vsel %vm383, %v2152, 0.0
  %v2162 = vadd.f32 %v2160, %v2161
  %v2163 = vsel %vm383, %v2157, 0.0
  %v2164 = vadd.f32 %v2162, %v2163
  %v2165 = vrot.slane %v2164, 4
  %v2166 = vadd.f32 %v2164, %v2165
  %v2167 = vrot.slane %v2166, 2
  %v2168 = vadd.f32 %v2166, %v2167
  %v2169 = vrot.slane %v2168, 1
  %v2170 = vadd.f32 %v2168, %v2169
  %v2171 = vmul.f32 %v2170, %v395
  %v2172 = vmul.f32 %v2147, %v2147
  %v2173 = vmul.f32 %v2152, %v2152
  %v2174 = vmul.f32 %v2157, %v2157
  %v2175 = vsel %vm383, %v2172, 0.0
  %v2176 = vsel %vm383, %v2173, 0.0
  %v2177 = vadd.f32 %v2175, %v2176
  %v2178 = vsel %vm383, %v2174, 0.0
  %v2179 = vadd.f32 %v2177, %v2178
  %v2180 = vrot.slane %v2179, 4
  %v2181 = vadd.f32 %v2179, %v2180
  %v2182 = vrot.slane %v2181, 2
  %v2183 = vadd.f32 %v2181, %v2182
  %v2184 = vrot.slane %v2183, 1
  %v2185 = vadd.f32 %v2183, %v2184
  %v2186 = vmul.f32 %v2185, %v395
  %v2187 = vmul.f32 %v2171, %v2171
  %v2188 = vsub.f32 %v2186, %v2187
  %v2189 = vmax.f32 %v2188, 0.0
  %v2190 = vsub.f32 %v2147, %v2171
  %v2191 = vsub.f32 %v2152, %v2171
  %v2192 = vsub.f32 %v2157, %v2171
  %v2193 = vadd.f32 %v2189, 1e-05
  %v2194 = vrsqrt.pop %v2193
  %v2195 = vmul.f32 %v2190, %v2194
  %v2196 = vmul.f32 %v2191, %v2194
  %v2197 = vmul.f32 %v2192, %v2194
  %v2198 = vmax.f32 %v2195, 0.0
  %v2199 = vmax.f32 %v2196, 0.0
  %v2200 = vmax.f32 %v2197, 0.0
  %v2201 = vld [vmem:[%s12] sm:$0xff]
  %v2202 = vld [vmem:[%s12 + $0x8] sm:$0xff]
  %v2203 = vld [vmem:[%s12 + $0x10] sm:$0xff]
  %v2204 = vld [vmem:[%s12 + $0x18] sm:$0xff]
  %v2205 = vld [vmem:[%s12 + $0x20] sm:$0xff]
  %v2206 = vld [vmem:[%s12 + $0x28] sm:$0xff]
  %v2207 = vld [vmem:[%s12 + $0x30] sm:$0xff]
  %v2208 = vld [vmem:[%s12 + $0x38] sm:$0xff]
  %v2209 = vld [vmem:[%s13] sm:$0x1]
  %v2211 = vlaneseq
  %v2212 = vshrl.u32 %v2211, 7
  %v2213 = vsub.s32 0, %v2212
  %v2214 = vrot.slane %v2209, %v2213
  %v2217 = vsel %vm383, %v2198, 0
  %v2220 = vsel %vm383, %v2199, 0
  %v2223 = vsel %vm383, %v2200, 0
  %2225 = vmatprep.subr.mxu0 0.0
  %2226 = vmatpush1.msra.mxu0 0.0
  %2227 = vmatprep.subr.mxu0 0.0
  %2228 = vmatpush1.msra.mxu0 0.0
  %2229 = vmatprep.subr.mxu0 0.0
  %2230 = vmatpush1.msra.mxu0 0.0
  %2231 = vmatprep.subr.mxu0 0.0
  %2232 = vmatpush1.msra.mxu0 0.0
  %2233 = vmatprep.subr.mxu0 0.0
  %2234 = vmatpush1.msra.mxu0 0.0
  %2235 = vmatprep.subr.mxu0 0.0
  %2236 = vmatpush1.msra.mxu0 0.0
  %2237 = vmatprep.subr.mxu0 0.0
  %2238 = vmatpush1.msra.mxu0 0.0
  %2239 = vmatprep.subr.mxu0 0.0
  %2240 = vmatpush1.msra.mxu0 0.0
  %2241 = vmatprep.subr.mxu0 0.0
  %2242 = vmatpush1.msra.mxu0 %v2208
  %2243 = vmatprep.subr.mxu0 0.0
  %2244 = vmatpush1.msra.mxu0 %v2207
  %2245 = vmatprep.subr.mxu0 0.0
  %2246 = vmatpush1.msra.mxu0 %v2206
  %2247 = vmatprep.subr.mxu0 0.0
  %2248 = vmatpush1.msra.mxu0 %v2205
  %2249 = vmatprep.subr.mxu0 0.0
  %2250 = vmatpush1.msra.mxu0 %v2204
  %2251 = vmatprep.subr.mxu0 0.0
  %2252 = vmatpush1.msra.mxu0 %v2203
  %2253 = vmatprep.subr.mxu0 0.0
  %2254 = vmatpush1.msra.mxu0 %v2202
  %2255 = vmatprep.subr.mxu0 0.0
  %2256 = vmatpush1.msra.mxu0 %v2201
  %2257 = vmatprep.subr.mxu0 0.0
  %2258 = vmatpush2.msra.mxu0 0.0
  %2259 = vmatprep.subr.mxu0 0.0
  %2260 = vmatpush2.msra.mxu0 0.0
  %2261 = vmatprep.subr.mxu0 0.0
  %2262 = vmatpush2.msra.mxu0 0.0
  %2263 = vmatprep.subr.mxu0 0.0
  %2264 = vmatpush2.msra.mxu0 0.0
  %2265 = vmatprep.subr.mxu0 0.0
  %2266 = vmatpush2.msra.mxu0 0.0
  %2267 = vmatprep.subr.mxu0 0.0
  %2268 = vmatpush2.msra.mxu0 0.0
  %2269 = vmatprep.subr.mxu0 0.0
  %2270 = vmatpush2.msra.mxu0 0.0
  %2271 = vmatprep.subr.mxu0 0.0
  %2272 = vmatpush2.msra.mxu0 0.0
  %2273 = vmatprep.subr.mxu0 0.0
  %2274 = vmatpush2.msra.mxu0 0.0
  %2275 = vmatprep.subr.mxu0 0.0
  %2276 = vmatpush2.msra.mxu0 0.0
  %2277 = vmatprep.subr.mxu0 0.0
  %2278 = vmatpush2.msra.mxu0 0.0
  %2279 = vmatprep.subr.mxu0 0.0
  %2280 = vmatpush2.msra.mxu0 0.0
  %2281 = vmatprep.subr.mxu0 0.0
  %2282 = vmatpush2.msra.mxu0 0.0
  %2283 = vmatprep.subr.mxu0 0.0
  %2284 = vmatpush2.msra.mxu0 0.0
  %2285 = vmatprep.subr.mxu0 0.0
  %2286 = vmatpush2.msra.mxu0 0.0
  %2287 = vmatprep.subr.mxu0 0.0
  %2288 = vmatpush2.msra.mxu0 0.0
  %2289 = vmatprep.mubr.f32.mxu0 0.0
  %2290 = vmatmul.mubr.f32.gmra.mxu0 %v2217
  %v2291 = vpop.f32.mrf.mxu0
  %v2292 = vadd.f32 %v2214, %v2291
  %v2293 = vpop.f32.mrf.mxu0
  %2294 = vmatprep.mubr.f32.mxu0 0.0
  %2295 = vmatmul.mubr.f32.gmra.mxu0 %v2220
  %v2296 = vpop.f32.mrf.mxu0
  %v2297 = vadd.f32 %v2214, %v2296
  %v2298 = vpop.f32.mrf.mxu0
  %2299 = vmatprep.mubr.f32.mxu0 0.0
  %2300 = vmatmul.mubr.f32.gmra.mxu0 %v2223
  %v2301 = vpop.f32.mrf.mxu0
  %v2302 = vadd.f32 %v2214, %v2301
  %v2303 = vpop.f32.mrf.mxu0
  %2304 = vdwg.mxu0
  %v2305 = vmax.f32 %v2292, 0.0
  %v2306 = vmax.f32 %v2297, 0.0
  %v2307 = vmax.f32 %v2302, 0.0
  %v2308 = vadd.f32 %v2305, %v1967
  %v2309 = vadd.f32 %v2306, %v1972
  %v2310 = vadd.f32 %v2307, %v1977
  %2311 = vmatprep.subr.mxu0 0.0
  %2312 = vmatpush1.msra.mxu0 0.0
  %2313 = vmatprep.subr.mxu0 0.0
  %2314 = vmatpush1.msra.mxu0 0.0
  %2315 = vmatprep.subr.mxu0 0.0
  %2316 = vmatpush1.msra.mxu0 0.0
  %2317 = vmatprep.subr.mxu0 0.0
  %2318 = vmatpush1.msra.mxu0 0.0
  %2319 = vmatprep.subr.mxu0 0.0
  %2320 = vmatpush1.msra.mxu0 0.0
  %2321 = vmatprep.subr.mxu0 0.0
  %2322 = vmatpush1.msra.mxu0 0.0
  %2323 = vmatprep.subr.mxu0 0.0
  %2324 = vmatpush1.msra.mxu0 0.0
  %2325 = vmatprep.subr.mxu0 0.0
  %2326 = vmatpush1.msra.mxu0 0.0
  %2327 = vmatprep.subr.mxu0 0.0
  %2328 = vmatpush1.msra.mxu0 0.0
  %2329 = vmatprep.subr.mxu0 0.0
  %2330 = vmatpush1.msra.mxu0 0.0
  %2331 = vmatprep.subr.mxu0 0.0
  %2332 = vmatpush1.msra.mxu0 0.0
  %2333 = vmatprep.subr.mxu0 0.0
  %2334 = vmatpush1.msra.mxu0 0.0
  %2335 = vmatprep.subr.mxu0 0.0
  %2336 = vmatpush1.msra.mxu0 0.0
  %2337 = vmatprep.subr.mxu0 0.0
  %2338 = vmatpush1.msra.mxu0 %v2310
  %2339 = vmatprep.subr.mxu0 0.0
  %2340 = vmatpush1.msra.mxu0 %v2309
  %2341 = vmatprep.subr.mxu0 0.0
  %2342 = vmatpush1.msra.mxu0 %v2308
  %2343 = vmatprep.subr.mxu0 0.0
  %2344 = vmatpush2.msra.mxu0 0.0
  %2345 = vmatprep.subr.mxu0 0.0
  %2346 = vmatpush2.msra.mxu0 0.0
  %2347 = vmatprep.subr.mxu0 0.0
  %2348 = vmatpush2.msra.mxu0 0.0
  %2349 = vmatprep.subr.mxu0 0.0
  %2350 = vmatpush2.msra.mxu0 0.0
  %2351 = vmatprep.subr.mxu0 0.0
  %2352 = vmatpush2.msra.mxu0 0.0
  %2353 = vmatprep.subr.mxu0 0.0
  %2354 = vmatpush2.msra.mxu0 0.0
  %2355 = vmatprep.subr.mxu0 0.0
  %2356 = vmatpush2.msra.mxu0 0.0
  %2357 = vmatprep.subr.mxu0 0.0
  %2358 = vmatpush2.msra.mxu0 0.0
  %2359 = vmatprep.subr.mxu0 0.0
  %2360 = vmatpush2.msra.mxu0 0.0
  %2361 = vmatprep.subr.mxu0 0.0
  %2362 = vmatpush2.msra.mxu0 0.0
  %2363 = vmatprep.subr.mxu0 0.0
  %2364 = vmatpush2.msra.mxu0 0.0
  %2365 = vmatprep.subr.mxu0 0.0
  %2366 = vmatpush2.msra.mxu0 0.0
  %2367 = vmatprep.subr.mxu0 0.0
  %2368 = vmatpush2.msra.mxu0 0.0
  %2369 = vmatprep.subr.mxu0 0.0
  %2370 = vmatpush2.msra.mxu0 0.0
  %2371 = vmatprep.subr.mxu0 0.0
  %2372 = vmatpush2.msra.mxu0 0.0
  %2373 = vmatprep.subr.mxu0 0.0
  %2374 = vmatpush2.msra.mxu0 0.0
  %2375 = vmatprep.mubr.f32.mxu0 0.0
  %2376 = vmatmul.mubr.f32.gmra.mxu0 %v194
  %v2377 = vpop.f32.mrf.mxu0
  %v2378 = vadd.f32 %v2308, %v2377
  %v2379 = vpop.f32.mrf.mxu0
  %2380 = vmatprep.mubr.f32.mxu0 0.0
  %2381 = vmatmul.mubr.f32.gmra.mxu0 %v197
  %v2382 = vpop.f32.mrf.mxu0
  %v2383 = vadd.f32 %v2309, %v2382
  %v2384 = vpop.f32.mrf.mxu0
  %2385 = vmatprep.mubr.f32.mxu0 0.0
  %2386 = vmatmul.mubr.f32.gmra.mxu0 %v200
  %v2387 = vpop.f32.mrf.mxu0
  %v2388 = vadd.f32 %v2310, %v2387
  %v2389 = vpop.f32.mrf.mxu0
  %2390 = vdwg.mxu0
  %s2391 = scalar_lea.vmem %s10, 32
  %v2392 = vld [vmem:[%s2391] sm:$0xff]
  %v2393 = vld [vmem:[%s2391 + $0x8] sm:$0xff]
  %v2394 = vld [vmem:[%s2391 + $0x10] sm:$0xff]
  %v2395 = vld [vmem:[%s2391 + $0x18] sm:$0xff]
  %s2396 = scalar_lea.vmem %s11, 1
  %v2397 = vld [vmem:[%s2396] sm:$0x1]
  %v2399 = vlaneseq
  %v2400 = vshrl.u32 %v2399, 7
  %v2401 = vsub.s32 0, %v2400
  %v2402 = vrot.slane %v2397, %v2401
  %v2405 = vsel %vm293, %v2378, 0
  %v2408 = vsel %vm293, %v2383, 0
  %v2411 = vsel %vm293, %v2388, 0
  %2413 = vmatprep.subr.mxu0 0.0
  %2414 = vmatpush1.msra.mxu0 0.0
  %2415 = vmatprep.subr.mxu0 0.0
  %2416 = vmatpush1.msra.mxu0 0.0
  %2417 = vmatprep.subr.mxu0 0.0
  %2418 = vmatpush1.msra.mxu0 0.0
  %2419 = vmatprep.subr.mxu0 0.0
  %2420 = vmatpush1.msra.mxu0 0.0
  %2421 = vmatprep.subr.mxu0 0.0
  %2422 = vmatpush1.msra.mxu0 0.0
  %2423 = vmatprep.subr.mxu0 0.0
  %2424 = vmatpush1.msra.mxu0 0.0
  %2425 = vmatprep.subr.mxu0 0.0
  %2426 = vmatpush1.msra.mxu0 0.0
  %2427 = vmatprep.subr.mxu0 0.0
  %2428 = vmatpush1.msra.mxu0 0.0
  %2429 = vmatprep.subr.mxu0 0.0
  %2430 = vmatpush1.msra.mxu0 0.0
  %2431 = vmatprep.subr.mxu0 0.0
  %2432 = vmatpush1.msra.mxu0 0.0
  %2433 = vmatprep.subr.mxu0 0.0
  %2434 = vmatpush1.msra.mxu0 0.0
  %2435 = vmatprep.subr.mxu0 0.0
  %2436 = vmatpush1.msra.mxu0 0.0
  %2437 = vmatprep.subr.mxu0 0.0
  %2438 = vmatpush1.msra.mxu0 %v2395
  %2439 = vmatprep.subr.mxu0 0.0
  %2440 = vmatpush1.msra.mxu0 %v2394
  %2441 = vmatprep.subr.mxu0 0.0
  %2442 = vmatpush1.msra.mxu0 %v2393
  %2443 = vmatprep.subr.mxu0 0.0
  %2444 = vmatpush1.msra.mxu0 %v2392
  %2445 = vmatprep.subr.mxu0 0.0
  %2446 = vmatpush2.msra.mxu0 0.0
  %2447 = vmatprep.subr.mxu0 0.0
  %2448 = vmatpush2.msra.mxu0 0.0
  %2449 = vmatprep.subr.mxu0 0.0
  %2450 = vmatpush2.msra.mxu0 0.0
  %2451 = vmatprep.subr.mxu0 0.0
  %2452 = vmatpush2.msra.mxu0 0.0
  %2453 = vmatprep.subr.mxu0 0.0
  %2454 = vmatpush2.msra.mxu0 0.0
  %2455 = vmatprep.subr.mxu0 0.0
  %2456 = vmatpush2.msra.mxu0 0.0
  %2457 = vmatprep.subr.mxu0 0.0
  %2458 = vmatpush2.msra.mxu0 0.0
  %2459 = vmatprep.subr.mxu0 0.0
  %2460 = vmatpush2.msra.mxu0 0.0
  %2461 = vmatprep.subr.mxu0 0.0
  %2462 = vmatpush2.msra.mxu0 0.0
  %2463 = vmatprep.subr.mxu0 0.0
  %2464 = vmatpush2.msra.mxu0 0.0
  %2465 = vmatprep.subr.mxu0 0.0
  %2466 = vmatpush2.msra.mxu0 0.0
  %2467 = vmatprep.subr.mxu0 0.0
  %2468 = vmatpush2.msra.mxu0 0.0
  %2469 = vmatprep.subr.mxu0 0.0
  %2470 = vmatpush2.msra.mxu0 0.0
  %2471 = vmatprep.subr.mxu0 0.0
  %2472 = vmatpush2.msra.mxu0 0.0
  %2473 = vmatprep.subr.mxu0 0.0
  %2474 = vmatpush2.msra.mxu0 0.0
  %2475 = vmatprep.subr.mxu0 0.0
  %2476 = vmatpush2.msra.mxu0 0.0
  %2477 = vmatprep.mubr.f32.mxu0 0.0
  %2478 = vmatmul.mubr.f32.gmra.mxu0 %v2405
  %v2479 = vpop.f32.mrf.mxu0
  %v2480 = vadd.f32 %v2402, %v2479
  %v2481 = vpop.f32.mrf.mxu0
  %2482 = vmatprep.mubr.f32.mxu0 0.0
  %2483 = vmatmul.mubr.f32.gmra.mxu0 %v2408
  %v2484 = vpop.f32.mrf.mxu0
  %v2485 = vadd.f32 %v2402, %v2484
  %v2486 = vpop.f32.mrf.mxu0
  %2487 = vmatprep.mubr.f32.mxu0 0.0
  %2488 = vmatmul.mubr.f32.gmra.mxu0 %v2411
  %v2489 = vpop.f32.mrf.mxu0
  %v2490 = vadd.f32 %v2402, %v2489
  %v2491 = vpop.f32.mrf.mxu0
  %2492 = vdwg.mxu0
  %v2493 = vsel %vm383, %v2480, 0.0
  %v2494 = vsel %vm383, %v2485, 0.0
  %v2495 = vadd.f32 %v2493, %v2494
  %v2496 = vsel %vm383, %v2490, 0.0
  %v2497 = vadd.f32 %v2495, %v2496
  %v2498 = vrot.slane %v2497, 4
  %v2499 = vadd.f32 %v2497, %v2498
  %v2500 = vrot.slane %v2499, 2
  %v2501 = vadd.f32 %v2499, %v2500
  %v2502 = vrot.slane %v2501, 1
  %v2503 = vadd.f32 %v2501, %v2502
  %v2504 = vmul.f32 %v2503, %v395
  %v2505 = vmul.f32 %v2480, %v2480
  %v2506 = vmul.f32 %v2485, %v2485
  %v2507 = vmul.f32 %v2490, %v2490
  %v2508 = vsel %vm383, %v2505, 0.0
  %v2509 = vsel %vm383, %v2506, 0.0
  %v2510 = vadd.f32 %v2508, %v2509
  %v2511 = vsel %vm383, %v2507, 0.0
  %v2512 = vadd.f32 %v2510, %v2511
  %v2513 = vrot.slane %v2512, 4
  %v2514 = vadd.f32 %v2512, %v2513
  %v2515 = vrot.slane %v2514, 2
  %v2516 = vadd.f32 %v2514, %v2515
  %v2517 = vrot.slane %v2516, 1
  %v2518 = vadd.f32 %v2516, %v2517
  %v2519 = vmul.f32 %v2518, %v395
  %v2520 = vmul.f32 %v2504, %v2504
  %v2521 = vsub.f32 %v2519, %v2520
  %v2522 = vmax.f32 %v2521, 0.0
  %v2523 = vsub.f32 %v2480, %v2504
  %v2524 = vsub.f32 %v2485, %v2504
  %v2525 = vsub.f32 %v2490, %v2504
  %v2526 = vadd.f32 %v2522, 1e-05
  %v2527 = vrsqrt.pop %v2526
  %v2528 = vmul.f32 %v2523, %v2527
  %v2529 = vmul.f32 %v2524, %v2527
  %v2530 = vmul.f32 %v2525, %v2527
  %v2531 = vmax.f32 %v2528, 0.0
  %v2532 = vmax.f32 %v2529, 0.0
  %v2533 = vmax.f32 %v2530, 0.0
  %s2534 = scalar_lea.vmem %s12, 64
  %v2535 = vld [vmem:[%s2534] sm:$0xff]
  %v2536 = vld [vmem:[%s2534 + $0x8] sm:$0xff]
  %v2537 = vld [vmem:[%s2534 + $0x10] sm:$0xff]
  %v2538 = vld [vmem:[%s2534 + $0x18] sm:$0xff]
  %v2539 = vld [vmem:[%s2534 + $0x20] sm:$0xff]
  %v2540 = vld [vmem:[%s2534 + $0x28] sm:$0xff]
  %v2541 = vld [vmem:[%s2534 + $0x30] sm:$0xff]
  %v2542 = vld [vmem:[%s2534 + $0x38] sm:$0xff]
  %s2543 = scalar_lea.vmem %s13, 1
  %v2544 = vld [vmem:[%s2543] sm:$0x1]
  %v2546 = vlaneseq
  %v2547 = vshrl.u32 %v2546, 7
  %v2548 = vsub.s32 0, %v2547
  %v2549 = vrot.slane %v2544, %v2548
  %v2552 = vsel %vm383, %v2531, 0
  %v2555 = vsel %vm383, %v2532, 0
  %v2558 = vsel %vm383, %v2533, 0
  %2560 = vmatprep.subr.mxu0 0.0
  %2561 = vmatpush1.msra.mxu0 0.0
  %2562 = vmatprep.subr.mxu0 0.0
  %2563 = vmatpush1.msra.mxu0 0.0
  %2564 = vmatprep.subr.mxu0 0.0
  %2565 = vmatpush1.msra.mxu0 0.0
  %2566 = vmatprep.subr.mxu0 0.0
  %2567 = vmatpush1.msra.mxu0 0.0
  %2568 = vmatprep.subr.mxu0 0.0
  %2569 = vmatpush1.msra.mxu0 0.0
  %2570 = vmatprep.subr.mxu0 0.0
  %2571 = vmatpush1.msra.mxu0 0.0
  %2572 = vmatprep.subr.mxu0 0.0
  %2573 = vmatpush1.msra.mxu0 0.0
  %2574 = vmatprep.subr.mxu0 0.0
  %2575 = vmatpush1.msra.mxu0 0.0
  %2576 = vmatprep.subr.mxu0 0.0
  %2577 = vmatpush1.msra.mxu0 %v2542
  %2578 = vmatprep.subr.mxu0 0.0
  %2579 = vmatpush1.msra.mxu0 %v2541
  %2580 = vmatprep.subr.mxu0 0.0
  %2581 = vmatpush1.msra.mxu0 %v2540
  %2582 = vmatprep.subr.mxu0 0.0
  %2583 = vmatpush1.msra.mxu0 %v2539
  %2584 = vmatprep.subr.mxu0 0.0
  %2585 = vmatpush1.msra.mxu0 %v2538
  %2586 = vmatprep.subr.mxu0 0.0
  %2587 = vmatpush1.msra.mxu0 %v2537
  %2588 = vmatprep.subr.mxu0 0.0
  %2589 = vmatpush1.msra.mxu0 %v2536
  %2590 = vmatprep.subr.mxu0 0.0
  %2591 = vmatpush1.msra.mxu0 %v2535
  %2592 = vmatprep.subr.mxu0 0.0
  %2593 = vmatpush2.msra.mxu0 0.0
  %2594 = vmatprep.subr.mxu0 0.0
  %2595 = vmatpush2.msra.mxu0 0.0
  %2596 = vmatprep.subr.mxu0 0.0
  %2597 = vmatpush2.msra.mxu0 0.0
  %2598 = vmatprep.subr.mxu0 0.0
  %2599 = vmatpush2.msra.mxu0 0.0
  %2600 = vmatprep.subr.mxu0 0.0
  %2601 = vmatpush2.msra.mxu0 0.0
  %2602 = vmatprep.subr.mxu0 0.0
  %2603 = vmatpush2.msra.mxu0 0.0
  %2604 = vmatprep.subr.mxu0 0.0
  %2605 = vmatpush2.msra.mxu0 0.0
  %2606 = vmatprep.subr.mxu0 0.0
  %2607 = vmatpush2.msra.mxu0 0.0
  %2608 = vmatprep.subr.mxu0 0.0
  %2609 = vmatpush2.msra.mxu0 0.0
  %2610 = vmatprep.subr.mxu0 0.0
  %2611 = vmatpush2.msra.mxu0 0.0
  %2612 = vmatprep.subr.mxu0 0.0
  %2613 = vmatpush2.msra.mxu0 0.0
  %2614 = vmatprep.subr.mxu0 0.0
  %2615 = vmatpush2.msra.mxu0 0.0
  %2616 = vmatprep.subr.mxu0 0.0
  %2617 = vmatpush2.msra.mxu0 0.0
  %2618 = vmatprep.subr.mxu0 0.0
  %2619 = vmatpush2.msra.mxu0 0.0
  %2620 = vmatprep.subr.mxu0 0.0
  %2621 = vmatpush2.msra.mxu0 0.0
  %2622 = vmatprep.subr.mxu0 0.0
  %2623 = vmatpush2.msra.mxu0 0.0
  %2624 = vmatprep.mubr.f32.mxu0 0.0
  %2625 = vmatmul.mubr.f32.gmra.mxu0 %v2552
  %v2626 = vpop.f32.mrf.mxu0
  %v2627 = vadd.f32 %v2549, %v2626
  %v2628 = vpop.f32.mrf.mxu0
  %2629 = vmatprep.mubr.f32.mxu0 0.0
  %2630 = vmatmul.mubr.f32.gmra.mxu0 %v2555
  %v2631 = vpop.f32.mrf.mxu0
  %v2632 = vadd.f32 %v2549, %v2631
  %v2633 = vpop.f32.mrf.mxu0
  %2634 = vmatprep.mubr.f32.mxu0 0.0
  %2635 = vmatmul.mubr.f32.gmra.mxu0 %v2558
  %v2636 = vpop.f32.mrf.mxu0
  %v2637 = vadd.f32 %v2549, %v2636
  %v2638 = vpop.f32.mrf.mxu0
  %2639 = vdwg.mxu0
  %v2640 = vadd.f32 %v2627, %v2308
  %v2641 = vadd.f32 %v2632, %v2309
  %v2642 = vadd.f32 %v2637, %v2310
  %v2643 = vld [vmem:[%s14] sm:$0xff]
  %v2644 = vld [vmem:[%s14 + $0x8] sm:$0xff]
  %v2645 = vld [vmem:[%s14 + $0x10] sm:$0xff]
  %v2646 = vld [vmem:[%s14 + $0x18] sm:$0xff]
  %v2647 = vld [vmem:[%s15] sm:$0x1]
  %v2649 = vlaneseq
  %v2650 = vshrl.u32 %v2649, 7
  %v2651 = vsub.s32 0, %v2650
  %v2652 = vrot.slane %v2647, %v2651
  %v2655 = vsel %vm293, %v2640, 0
  %v2658 = vsel %vm293, %v2641, 0
  %v2661 = vsel %vm293, %v2642, 0
  %2663 = vmatprep.subr.mxu0 0.0
  %2664 = vmatpush1.msra.mxu0 0.0
  %2665 = vmatprep.subr.mxu0 0.0
  %2666 = vmatpush1.msra.mxu0 0.0
  %2667 = vmatprep.subr.mxu0 0.0
  %2668 = vmatpush1.msra.mxu0 0.0
  %2669 = vmatprep.subr.mxu0 0.0
  %2670 = vmatpush1.msra.mxu0 0.0
  %2671 = vmatprep.subr.mxu0 0.0
  %2672 = vmatpush1.msra.mxu0 0.0
  %2673 = vmatprep.subr.mxu0 0.0
  %2674 = vmatpush1.msra.mxu0 0.0
  %2675 = vmatprep.subr.mxu0 0.0
  %2676 = vmatpush1.msra.mxu0 0.0
  %2677 = vmatprep.subr.mxu0 0.0
  %2678 = vmatpush1.msra.mxu0 0.0
  %2679 = vmatprep.subr.mxu0 0.0
  %2680 = vmatpush1.msra.mxu0 0.0
  %2681 = vmatprep.subr.mxu0 0.0
  %2682 = vmatpush1.msra.mxu0 0.0
  %2683 = vmatprep.subr.mxu0 0.0
  %2684 = vmatpush1.msra.mxu0 0.0
  %2685 = vmatprep.subr.mxu0 0.0
  %2686 = vmatpush1.msra.mxu0 0.0
  %2687 = vmatprep.subr.mxu0 0.0
  %2688 = vmatpush1.msra.mxu0 %v2646
  %2689 = vmatprep.subr.mxu0 0.0
  %2690 = vmatpush1.msra.mxu0 %v2645
  %2691 = vmatprep.subr.mxu0 0.0
  %2692 = vmatpush1.msra.mxu0 %v2644
  %2693 = vmatprep.subr.mxu0 0.0
  %2694 = vmatpush1.msra.mxu0 %v2643
  %2695 = vmatprep.subr.mxu0 0.0
  %2696 = vmatpush2.msra.mxu0 0.0
  %2697 = vmatprep.subr.mxu0 0.0
  %2698 = vmatpush2.msra.mxu0 0.0
  %2699 = vmatprep.subr.mxu0 0.0
  %2700 = vmatpush2.msra.mxu0 0.0
  %2701 = vmatprep.subr.mxu0 0.0
  %2702 = vmatpush2.msra.mxu0 0.0
  %2703 = vmatprep.subr.mxu0 0.0
  %2704 = vmatpush2.msra.mxu0 0.0
  %2705 = vmatprep.subr.mxu0 0.0
  %2706 = vmatpush2.msra.mxu0 0.0
  %2707 = vmatprep.subr.mxu0 0.0
  %2708 = vmatpush2.msra.mxu0 0.0
  %2709 = vmatprep.subr.mxu0 0.0
  %2710 = vmatpush2.msra.mxu0 0.0
  %2711 = vmatprep.subr.mxu0 0.0
  %2712 = vmatpush2.msra.mxu0 0.0
  %2713 = vmatprep.subr.mxu0 0.0
  %2714 = vmatpush2.msra.mxu0 0.0
  %2715 = vmatprep.subr.mxu0 0.0
  %2716 = vmatpush2.msra.mxu0 0.0
  %2717 = vmatprep.subr.mxu0 0.0
  %2718 = vmatpush2.msra.mxu0 0.0
  %2719 = vmatprep.subr.mxu0 0.0
  %2720 = vmatpush2.msra.mxu0 0.0
  %2721 = vmatprep.subr.mxu0 0.0
  %2722 = vmatpush2.msra.mxu0 0.0
  %2723 = vmatprep.subr.mxu0 0.0
  %2724 = vmatpush2.msra.mxu0 0.0
  %2725 = vmatprep.subr.mxu0 0.0
  %2726 = vmatpush2.msra.mxu0 0.0
  %2727 = vmatprep.mubr.f32.mxu0 0.0
  %2728 = vmatmul.mubr.f32.gmra.mxu0 %v2655
  %v2729 = vpop.f32.mrf.mxu0
  %v2730 = vadd.f32 %v2652, %v2729
  %v2731 = vpop.f32.mrf.mxu0
  %2732 = vmatprep.mubr.f32.mxu0 0.0
  %2733 = vmatmul.mubr.f32.gmra.mxu0 %v2658
  %v2734 = vpop.f32.mrf.mxu0
  %v2735 = vadd.f32 %v2652, %v2734
  %v2736 = vpop.f32.mrf.mxu0
  %2737 = vmatprep.mubr.f32.mxu0 0.0
  %2738 = vmatmul.mubr.f32.gmra.mxu0 %v2661
  %v2739 = vpop.f32.mrf.mxu0
  %v2740 = vadd.f32 %v2652, %v2739
  %v2741 = vpop.f32.mrf.mxu0
  %2742 = vdwg.mxu0
  %v2743 = vsel %vm383, %v2730, 0.0
  %v2744 = vsel %vm383, %v2735, 0.0
  %v2745 = vadd.f32 %v2743, %v2744
  %v2746 = vsel %vm383, %v2740, 0.0
  %v2747 = vadd.f32 %v2745, %v2746
  %v2748 = vrot.slane %v2747, 4
  %v2749 = vadd.f32 %v2747, %v2748
  %v2750 = vrot.slane %v2749, 2
  %v2751 = vadd.f32 %v2749, %v2750
  %v2752 = vrot.slane %v2751, 1
  %v2753 = vadd.f32 %v2751, %v2752
  %v2754 = vmul.f32 %v2753, %v395
  %v2755 = vmul.f32 %v2730, %v2730
  %v2756 = vmul.f32 %v2735, %v2735
  %v2757 = vmul.f32 %v2740, %v2740
  %v2758 = vsel %vm383, %v2755, 0.0
  %v2759 = vsel %vm383, %v2756, 0.0
  %v2760 = vadd.f32 %v2758, %v2759
  %v2761 = vsel %vm383, %v2757, 0.0
  %v2762 = vadd.f32 %v2760, %v2761
  %v2763 = vrot.slane %v2762, 4
  %v2764 = vadd.f32 %v2762, %v2763
  %v2765 = vrot.slane %v2764, 2
  %v2766 = vadd.f32 %v2764, %v2765
  %v2767 = vrot.slane %v2766, 1
  %v2768 = vadd.f32 %v2766, %v2767
  %v2769 = vmul.f32 %v2768, %v395
  %v2770 = vmul.f32 %v2754, %v2754
  %v2771 = vsub.f32 %v2769, %v2770
  %v2772 = vmax.f32 %v2771, 0.0
  %v2773 = vsub.f32 %v2730, %v2754
  %v2774 = vsub.f32 %v2735, %v2754
  %v2775 = vsub.f32 %v2740, %v2754
  %v2776 = vadd.f32 %v2772, 1e-05
  %v2777 = vrsqrt.pop %v2776
  %v2778 = vmul.f32 %v2773, %v2777
  %v2779 = vmul.f32 %v2774, %v2777
  %v2780 = vmul.f32 %v2775, %v2777
  %v2781 = vmax.f32 %v2778, 0.0
  %v2782 = vmax.f32 %v2779, 0.0
  %v2783 = vmax.f32 %v2780, 0.0
  %v2784 = vld [vmem:[%s16] sm:$0xff]
  %v2785 = vld [vmem:[%s16 + $0x8] sm:$0xff]
  %v2786 = vld [vmem:[%s16 + $0x10] sm:$0xff]
  %v2787 = vld [vmem:[%s16 + $0x18] sm:$0xff]
  %v2788 = vld [vmem:[%s16 + $0x20] sm:$0xff]
  %v2789 = vld [vmem:[%s16 + $0x28] sm:$0xff]
  %v2790 = vld [vmem:[%s16 + $0x30] sm:$0xff]
  %v2791 = vld [vmem:[%s16 + $0x38] sm:$0xff]
  %v2792 = vld [vmem:[%s17] sm:$0x1]
  %v2794 = vlaneseq
  %v2795 = vshrl.u32 %v2794, 7
  %v2796 = vsub.s32 0, %v2795
  %v2797 = vrot.slane %v2792, %v2796
  %v2800 = vsel %vm383, %v2781, 0
  %v2803 = vsel %vm383, %v2782, 0
  %v2806 = vsel %vm383, %v2783, 0
  %2808 = vmatprep.subr.mxu0 0.0
  %2809 = vmatpush1.msra.mxu0 0.0
  %2810 = vmatprep.subr.mxu0 0.0
  %2811 = vmatpush1.msra.mxu0 0.0
  %2812 = vmatprep.subr.mxu0 0.0
  %2813 = vmatpush1.msra.mxu0 0.0
  %2814 = vmatprep.subr.mxu0 0.0
  %2815 = vmatpush1.msra.mxu0 0.0
  %2816 = vmatprep.subr.mxu0 0.0
  %2817 = vmatpush1.msra.mxu0 0.0
  %2818 = vmatprep.subr.mxu0 0.0
  %2819 = vmatpush1.msra.mxu0 0.0
  %2820 = vmatprep.subr.mxu0 0.0
  %2821 = vmatpush1.msra.mxu0 0.0
  %2822 = vmatprep.subr.mxu0 0.0
  %2823 = vmatpush1.msra.mxu0 0.0
  %2824 = vmatprep.subr.mxu0 0.0
  %2825 = vmatpush1.msra.mxu0 %v2791
  %2826 = vmatprep.subr.mxu0 0.0
  %2827 = vmatpush1.msra.mxu0 %v2790
  %2828 = vmatprep.subr.mxu0 0.0
  %2829 = vmatpush1.msra.mxu0 %v2789
  %2830 = vmatprep.subr.mxu0 0.0
  %2831 = vmatpush1.msra.mxu0 %v2788
  %2832 = vmatprep.subr.mxu0 0.0
  %2833 = vmatpush1.msra.mxu0 %v2787
  %2834 = vmatprep.subr.mxu0 0.0
  %2835 = vmatpush1.msra.mxu0 %v2786
  %2836 = vmatprep.subr.mxu0 0.0
  %2837 = vmatpush1.msra.mxu0 %v2785
  %2838 = vmatprep.subr.mxu0 0.0
  %2839 = vmatpush1.msra.mxu0 %v2784
  %2840 = vmatprep.subr.mxu0 0.0
  %2841 = vmatpush2.msra.mxu0 0.0
  %2842 = vmatprep.subr.mxu0 0.0
  %2843 = vmatpush2.msra.mxu0 0.0
  %2844 = vmatprep.subr.mxu0 0.0
  %2845 = vmatpush2.msra.mxu0 0.0
  %2846 = vmatprep.subr.mxu0 0.0
  %2847 = vmatpush2.msra.mxu0 0.0
  %2848 = vmatprep.subr.mxu0 0.0
  %2849 = vmatpush2.msra.mxu0 0.0
  %2850 = vmatprep.subr.mxu0 0.0
  %2851 = vmatpush2.msra.mxu0 0.0
  %2852 = vmatprep.subr.mxu0 0.0
  %2853 = vmatpush2.msra.mxu0 0.0
  %2854 = vmatprep.subr.mxu0 0.0
  %2855 = vmatpush2.msra.mxu0 0.0
  %2856 = vmatprep.subr.mxu0 0.0
  %2857 = vmatpush2.msra.mxu0 0.0
  %2858 = vmatprep.subr.mxu0 0.0
  %2859 = vmatpush2.msra.mxu0 0.0
  %2860 = vmatprep.subr.mxu0 0.0
  %2861 = vmatpush2.msra.mxu0 0.0
  %2862 = vmatprep.subr.mxu0 0.0
  %2863 = vmatpush2.msra.mxu0 0.0
  %2864 = vmatprep.subr.mxu0 0.0
  %2865 = vmatpush2.msra.mxu0 0.0
  %2866 = vmatprep.subr.mxu0 0.0
  %2867 = vmatpush2.msra.mxu0 0.0
  %2868 = vmatprep.subr.mxu0 0.0
  %2869 = vmatpush2.msra.mxu0 0.0
  %2870 = vmatprep.subr.mxu0 0.0
  %2871 = vmatpush2.msra.mxu0 0.0
  %2872 = vmatprep.mubr.f32.mxu0 0.0
  %2873 = vmatmul.mubr.f32.gmra.mxu0 %v2800
  %v2874 = vpop.f32.mrf.mxu0
  %v2875 = vadd.f32 %v2797, %v2874
  %v2876 = vpop.f32.mrf.mxu0
  %2877 = vmatprep.mubr.f32.mxu0 0.0
  %2878 = vmatmul.mubr.f32.gmra.mxu0 %v2803
  %v2879 = vpop.f32.mrf.mxu0
  %v2880 = vadd.f32 %v2797, %v2879
  %v2881 = vpop.f32.mrf.mxu0
  %2882 = vmatprep.mubr.f32.mxu0 0.0
  %2883 = vmatmul.mubr.f32.gmra.mxu0 %v2806
  %v2884 = vpop.f32.mrf.mxu0
  %v2885 = vadd.f32 %v2797, %v2884
  %v2886 = vpop.f32.mrf.mxu0
  %2887 = vdwg.mxu0
  %v2888 = vld [vmem:[%s22] sm:$0xff]
  %v2889 = vld [vmem:[%s22 + $0x8] sm:$0xff]
  %v2890 = vld [vmem:[%s22 + $0x10] sm:$0xff]
  %v2891 = vadd.f32 %v2875, %v2888
  %v2892 = vadd.f32 %v2880, %v2889
  %v2893 = vadd.f32 %v2885, %v2890
  %2897 = vrot.lane.b32.xlu0 %v2891, 1
  %v2898 = vpop.permute.xlu0 %2897
  %2899 = vrot.lane.b32.xlu0 %v2892, 1
  %v2900 = vpop.permute.xlu0 %2899
  %2901 = vrot.lane.b32.xlu0 %v2893, 1
  %v2902 = vpop.permute.xlu0 %2901
  %v2906 = vsub.f32 %v2891, %v2898
  %v2907 = vsub.f32 %v2892, %v2900
  %v2908 = vsub.f32 %v2893, %v2902
  %v2909 = vsub.f32 0.0, %v2906
  %v2910 = vsub.f32 0.0, %v2907
  %v2911 = vsub.f32 0.0, %v2908
  %v2912 = vmul.f32 %v2909, 1.442695
  %v2913 = vpow.pop %v2912
  %v2914 = vmul.f32 %v2910, 1.442695
  %v2915 = vpow.pop %v2914
  %v2916 = vmul.f32 %v2911, 1.442695
  %v2917 = vpow.pop %v2916
  %v2918 = vadd.f32 %v2913, 1.0
  %v2919 = vadd.f32 %v2915, 1.0
  %v2920 = vadd.f32 %v2917, 1.0
  %v2921 = vrcp.pop %v2918
  %v2922 = vmul.f32 1.0, %v2921
  %v2923 = vrcp.pop %v2919
  %v2924 = vmul.f32 1.0, %v2923
  %v2925 = vrcp.pop %v2920
  %v2926 = vmul.f32 1.0, %v2925
  %v2927 = vld [vmem:[%s23] sm:$0xf]
  %v2928 = vld [vmem:[%s24] sm:$0xf]
  %2930 = vset.pattern.permute.xlu0 1
  %2931 = vperm.xlu0 %2930, %v2922
  %v2932 = vpop.permute.xlu0 %2931
  %2935 = vset.pattern.permute.xlu0 1
  %2936 = vperm.xlu0 %2935, %v2924
  %v2937 = vpop.permute.xlu0 %2936
  %2940 = vset.pattern.permute.xlu0 1
  %2941 = vperm.xlu0 %2940, %v2926
  %v2942 = vpop.permute.xlu0 %2941
  %v2944 = vmul.f32 %v2932, %v1885
  %v2945 = vmul.f32 %v2937, %v1886
  %v2946 = vmul.f32 %v2942, %v1887
  %v2948 = vsel %vm192, %v2927, 0
  %2950 = vmatprep.subr.mxu0 0.0
  %2951 = vmatpush1.msra.mxu0 0.0
  %2952 = vmatprep.subr.mxu0 0.0
  %2953 = vmatpush1.msra.mxu0 0.0
  %2954 = vmatprep.subr.mxu0 0.0
  %2955 = vmatpush1.msra.mxu0 0.0
  %2956 = vmatprep.subr.mxu0 0.0
  %2957 = vmatpush1.msra.mxu0 0.0
  %2958 = vmatprep.subr.mxu0 0.0
  %2959 = vmatpush1.msra.mxu0 0.0
  %2960 = vmatprep.subr.mxu0 0.0
  %2961 = vmatpush1.msra.mxu0 0.0
  %2962 = vmatprep.subr.mxu0 0.0
  %2963 = vmatpush1.msra.mxu0 0.0
  %2964 = vmatprep.subr.mxu0 0.0
  %2965 = vmatpush1.msra.mxu0 0.0
  %2966 = vmatprep.subr.mxu0 0.0
  %2967 = vmatpush1.msra.mxu0 0.0
  %2968 = vmatprep.subr.mxu0 0.0
  %2969 = vmatpush1.msra.mxu0 0.0
  %2970 = vmatprep.subr.mxu0 0.0
  %2971 = vmatpush1.msra.mxu0 0.0
  %2972 = vmatprep.subr.mxu0 0.0
  %2973 = vmatpush1.msra.mxu0 0.0
  %2974 = vmatprep.subr.mxu0 0.0
  %2975 = vmatpush1.msra.mxu0 0.0
  %2976 = vmatprep.subr.mxu0 0.0
  %2977 = vmatpush1.msra.mxu0 %v2946
  %2978 = vmatprep.subr.mxu0 0.0
  %2979 = vmatpush1.msra.mxu0 %v2945
  %2980 = vmatprep.subr.mxu0 0.0
  %2981 = vmatpush1.msra.mxu0 %v2944
  %2982 = vmatprep.subr.mxu0 0.0
  %2983 = vmatpush2.msra.mxu0 0.0
  %2984 = vmatprep.subr.mxu0 0.0
  %2985 = vmatpush2.msra.mxu0 0.0
  %2986 = vmatprep.subr.mxu0 0.0
  %2987 = vmatpush2.msra.mxu0 0.0
  %2988 = vmatprep.subr.mxu0 0.0
  %2989 = vmatpush2.msra.mxu0 0.0
  %2990 = vmatprep.subr.mxu0 0.0
  %2991 = vmatpush2.msra.mxu0 0.0
  %2992 = vmatprep.subr.mxu0 0.0
  %2993 = vmatpush2.msra.mxu0 0.0
  %2994 = vmatprep.subr.mxu0 0.0
  %2995 = vmatpush2.msra.mxu0 0.0
  %2996 = vmatprep.subr.mxu0 0.0
  %2997 = vmatpush2.msra.mxu0 0.0
  %2998 = vmatprep.subr.mxu0 0.0
  %2999 = vmatpush2.msra.mxu0 0.0
  %3000 = vmatprep.subr.mxu0 0.0
  %3001 = vmatpush2.msra.mxu0 0.0
  %3002 = vmatprep.subr.mxu0 0.0
  %3003 = vmatpush2.msra.mxu0 0.0
  %3004 = vmatprep.subr.mxu0 0.0
  %3005 = vmatpush2.msra.mxu0 0.0
  %3006 = vmatprep.subr.mxu0 0.0
  %3007 = vmatpush2.msra.mxu0 0.0
  %3008 = vmatprep.subr.mxu0 0.0
  %3009 = vmatpush2.msra.mxu0 0.0
  %3010 = vmatprep.subr.mxu0 0.0
  %3011 = vmatpush2.msra.mxu0 0.0
  %3012 = vmatprep.subr.mxu0 0.0
  %3013 = vmatpush2.msra.mxu0 0.0
  %3014 = vmatprep.mubr.f32.mxu0 0.0
  %3015 = vmatmul.mubr.f32.gmra.mxu0 %v2948
  %v3016 = vpop.f32.mrf.mxu0
  %v3017 = vadd.f32 0.0, %v3016
  %v3018 = vpop.f32.mrf.mxu0
  %3019 = vdwg.mxu0
  %3020 = vmatprep.subr.mxu0 0.0
  %3021 = vmatpush1.msra.mxu0 0.0
  %3022 = vmatprep.subr.mxu0 0.0
  %3023 = vmatpush1.msra.mxu0 0.0
  %3024 = vmatprep.subr.mxu0 0.0
  %3025 = vmatpush1.msra.mxu0 0.0
  %3026 = vmatprep.subr.mxu0 0.0
  %3027 = vmatpush1.msra.mxu0 0.0
  %3028 = vmatprep.subr.mxu0 0.0
  %3029 = vmatpush1.msra.mxu0 0.0
  %3030 = vmatprep.subr.mxu0 0.0
  %3031 = vmatpush1.msra.mxu0 0.0
  %3032 = vmatprep.subr.mxu0 0.0
  %3033 = vmatpush1.msra.mxu0 0.0
  %3034 = vmatprep.subr.mxu0 0.0
  %3035 = vmatpush1.msra.mxu0 0.0
  %3036 = vmatprep.subr.mxu0 0.0
  %3037 = vmatpush1.msra.mxu0 0.0
  %3038 = vmatprep.subr.mxu0 0.0
  %3039 = vmatpush1.msra.mxu0 0.0
  %3040 = vmatprep.subr.mxu0 0.0
  %3041 = vmatpush1.msra.mxu0 0.0
  %3042 = vmatprep.subr.mxu0 0.0
  %3043 = vmatpush1.msra.mxu0 0.0
  %3044 = vmatprep.subr.mxu0 0.0
  %3045 = vmatpush1.msra.mxu0 0.0
  %3046 = vmatprep.subr.mxu0 0.0
  %3047 = vmatpush1.msra.mxu0 %v1887
  %3048 = vmatprep.subr.mxu0 0.0
  %3049 = vmatpush1.msra.mxu0 %v1886
  %3050 = vmatprep.subr.mxu0 0.0
  %3051 = vmatpush1.msra.mxu0 %v1885
  %3052 = vmatprep.subr.mxu0 0.0
  %3053 = vmatpush2.msra.mxu0 0.0
  %3054 = vmatprep.subr.mxu0 0.0
  %3055 = vmatpush2.msra.mxu0 0.0
  %3056 = vmatprep.subr.mxu0 0.0
  %3057 = vmatpush2.msra.mxu0 0.0
  %3058 = vmatprep.subr.mxu0 0.0
  %3059 = vmatpush2.msra.mxu0 0.0
  %3060 = vmatprep.subr.mxu0 0.0
  %3061 = vmatpush2.msra.mxu0 0.0
  %3062 = vmatprep.subr.mxu0 0.0
  %3063 = vmatpush2.msra.mxu0 0.0
  %3064 = vmatprep.subr.mxu0 0.0
  %3065 = vmatpush2.msra.mxu0 0.0
  %3066 = vmatprep.subr.mxu0 0.0
  %3067 = vmatpush2.msra.mxu0 0.0
  %3068 = vmatprep.subr.mxu0 0.0
  %3069 = vmatpush2.msra.mxu0 0.0
  %3070 = vmatprep.subr.mxu0 0.0
  %3071 = vmatpush2.msra.mxu0 0.0
  %3072 = vmatprep.subr.mxu0 0.0
  %3073 = vmatpush2.msra.mxu0 0.0
  %3074 = vmatprep.subr.mxu0 0.0
  %3075 = vmatpush2.msra.mxu0 0.0
  %3076 = vmatprep.subr.mxu0 0.0
  %3077 = vmatpush2.msra.mxu0 0.0
  %3078 = vmatprep.subr.mxu0 0.0
  %3079 = vmatpush2.msra.mxu0 0.0
  %3080 = vmatprep.subr.mxu0 0.0
  %3081 = vmatpush2.msra.mxu0 0.0
  %3082 = vmatprep.subr.mxu0 0.0
  %3083 = vmatpush2.msra.mxu0 0.0
  %3084 = vmatprep.mubr.f32.mxu0 0.0
  %3085 = vmatmul.mubr.f32.gmra.mxu0 %v2948
  %v3086 = vpop.f32.mrf.mxu0
  %v3087 = vadd.f32 0.0, %v3086
  %v3088 = vpop.f32.mrf.mxu0
  %3089 = vdwg.mxu0
  %v3090 = vsub.f32 %v3087, %v3017
  %3092 = vset.pattern.permute.xlu0 0
  %3093 = vperm.xlu0 %3092, %v2928
  %v3094 = vpop.permute.xlu0 %3093
  %v3096 = vmul.f32 %v2927, %v3094
  %3097 = vrot.lane.b32.xlu0 %v2922, 127
  %v3098 = vpop.permute.xlu0 %3097
  %3099 = vrot.lane.b32.xlu0 %v2924, 127
  %v3100 = vpop.permute.xlu0 %3099
  %3101 = vrot.lane.b32.xlu0 %v2926, 127
  %v3102 = vpop.permute.xlu0 %3101
  %v3107 = vsel %vm192, %v3096, 0
  %3109 = vmatprep.subr.mxu0 0.0
  %3110 = vmatpush1.msra.mxu0 0.0
  %3111 = vmatprep.subr.mxu0 0.0
  %3112 = vmatpush1.msra.mxu0 0.0
  %3113 = vmatprep.subr.mxu0 0.0
  %3114 = vmatpush1.msra.mxu0 0.0
  %3115 = vmatprep.subr.mxu0 0.0
  %3116 = vmatpush1.msra.mxu0 0.0
  %3117 = vmatprep.subr.mxu0 0.0
  %3118 = vmatpush1.msra.mxu0 0.0
  %3119 = vmatprep.subr.mxu0 0.0
  %3120 = vmatpush1.msra.mxu0 0.0
  %3121 = vmatprep.subr.mxu0 0.0
  %3122 = vmatpush1.msra.mxu0 0.0
  %3123 = vmatprep.subr.mxu0 0.0
  %3124 = vmatpush1.msra.mxu0 0.0
  %3125 = vmatprep.subr.mxu0 0.0
  %3126 = vmatpush1.msra.mxu0 0.0
  %3127 = vmatprep.subr.mxu0 0.0
  %3128 = vmatpush1.msra.mxu0 0.0
  %3129 = vmatprep.subr.mxu0 0.0
  %3130 = vmatpush1.msra.mxu0 0.0
  %3131 = vmatprep.subr.mxu0 0.0
  %3132 = vmatpush1.msra.mxu0 0.0
  %3133 = vmatprep.subr.mxu0 0.0
  %3134 = vmatpush1.msra.mxu0 0.0
  %3135 = vmatprep.subr.mxu0 0.0
  %3136 = vmatpush1.msra.mxu0 %v3102
  %3137 = vmatprep.subr.mxu0 0.0
  %3138 = vmatpush1.msra.mxu0 %v3100
  %3139 = vmatprep.subr.mxu0 0.0
  %3140 = vmatpush1.msra.mxu0 %v3098
  %3141 = vmatprep.subr.mxu0 0.0
  %3142 = vmatpush2.msra.mxu0 0.0
  %3143 = vmatprep.subr.mxu0 0.0
  %3144 = vmatpush2.msra.mxu0 0.0
  %3145 = vmatprep.subr.mxu0 0.0
  %3146 = vmatpush2.msra.mxu0 0.0
  %3147 = vmatprep.subr.mxu0 0.0
  %3148 = vmatpush2.msra.mxu0 0.0
  %3149 = vmatprep.subr.mxu0 0.0
  %3150 = vmatpush2.msra.mxu0 0.0
  %3151 = vmatprep.subr.mxu0 0.0
  %3152 = vmatpush2.msra.mxu0 0.0
  %3153 = vmatprep.subr.mxu0 0.0
  %3154 = vmatpush2.msra.mxu0 0.0
  %3155 = vmatprep.subr.mxu0 0.0
  %3156 = vmatpush2.msra.mxu0 0.0
  %3157 = vmatprep.subr.mxu0 0.0
  %3158 = vmatpush2.msra.mxu0 0.0
  %3159 = vmatprep.subr.mxu0 0.0
  %3160 = vmatpush2.msra.mxu0 0.0
  %3161 = vmatprep.subr.mxu0 0.0
  %3162 = vmatpush2.msra.mxu0 0.0
  %3163 = vmatprep.subr.mxu0 0.0
  %3164 = vmatpush2.msra.mxu0 0.0
  %3165 = vmatprep.subr.mxu0 0.0
  %3166 = vmatpush2.msra.mxu0 0.0
  %3167 = vmatprep.subr.mxu0 0.0
  %3168 = vmatpush2.msra.mxu0 0.0
  %3169 = vmatprep.subr.mxu0 0.0
  %3170 = vmatpush2.msra.mxu0 0.0
  %3171 = vmatprep.subr.mxu0 0.0
  %3172 = vmatpush2.msra.mxu0 0.0
  %3173 = vmatprep.mubr.f32.mxu0 0.0
  %3174 = vmatmul.mubr.f32.gmra.mxu0 %v3107
  %v3175 = vpop.f32.mrf.mxu0
  %v3176 = vadd.f32 1e-08, %v3175
  %v3177 = vpop.f32.mrf.mxu0
  %3178 = vdwg.mxu0
  %v3179 = vadd.f32 %v2928, 2e-08
  %v3180 = vrcp.pop %v3179
  %v3181 = vmul.f32 %v3176, %v3180
  %v3182 = vsub.f32 %v3181, 0.4
  %v3183 = vand.u32 2147483647, %v3182
  %vm3184 = vcmask 3072
  %v3185 = vsel %vm3184, %v3183, 0.0
  %3186 = vadd.xlane.f32.xlu0 %v3185
  %v3187 = vpop.xlane.xlu0 %3186
  %v3188 = vrot.slane %v3187, 4
  %v3189 = vadd.f32 %v3187, %v3188
  %v3190 = vrot.slane %v3189, 2
  %v3191 = vadd.f32 %v3189, %v3190
  %v3192 = vrot.slane %v3191, 1
  %v3193 = vadd.f32 %v3191, %v3192
  %s3194 = vtos %v3193
  %v3195 = vrcp.pop 4.0
  %s3196 = vtos %v3195
  %s3197 = smul.f32 %s3194, %s3196
  %v3198 = vsub.f32 1.0, %v2922
  %v3199 = vsub.f32 1.0, %v2924
  %v3200 = vsub.f32 1.0, %v2926
  %v3201 = vld [vmem:[#allocation2] sm:$0xff]
  %v3202 = vld [vmem:[#allocation2 + $0x8] sm:$0xff]
  %v3203 = vld [vmem:[#allocation2 + $0x10] sm:$0xff]
  %v3204 = vld [vmem:[#allocation2 + $0x18] sm:$0xff]
  %v3205 = vld [vmem:[#allocation2 + $0x20] sm:$0xff]
  %v3206 = vld [vmem:[#allocation2 + $0x28] sm:$0xff]
  %v3207 = vld [vmem:[#allocation2 + $0x30] sm:$0xff]
  %v3208 = vld [vmem:[#allocation2 + $0x38] sm:$0xff]
  %v3209 = vld [vmem:[#allocation2 + $0x40] sm:$0xff]
  %v3210 = vld [vmem:[#allocation2 + $0x48] sm:$0xff]
  %v3211 = vld [vmem:[#allocation2 + $0x50] sm:$0xff]
  %v3212 = vld [vmem:[#allocation2 + $0x58] sm:$0xff]
  %v3213 = vld [vmem:[#allocation2 + $0x60] sm:$0xff]
  %v3214 = vld [vmem:[#allocation2 + $0x68] sm:$0xff]
  %v3215 = vld [vmem:[#allocation2 + $0x70] sm:$0xff]
  %3217 = vset.pattern.permute.xlu0 1
  %3218 = vperm.xlu0 %3217, %v3198
  %v3219 = vpop.permute.xlu0 %3218
  %3222 = vset.pattern.permute.xlu0 1
  %3223 = vperm.xlu0 %3222, %v3199
  %v3224 = vpop.permute.xlu0 %3223
  %3227 = vset.pattern.permute.xlu0 1
  %3228 = vperm.xlu0 %3227, %v3200
  %v3229 = vpop.permute.xlu0 %3228
  %v3231 = vmul.f32 %v3219, %v3201
  %v3232 = vmul.f32 %v3224, %v3202
  %v3233 = vmul.f32 %v3229, %v3203
  %v3234 = vmul.f32 %v3219, %v3204
  %v3235 = vmul.f32 %v3224, %v3205
  %v3236 = vmul.f32 %v3229, %v3206
  %v3237 = vmul.f32 %v3219, %v3207
  %v3238 = vmul.f32 %v3224, %v3208
  %v3239 = vmul.f32 %v3229, %v3209
  %v3240 = vmul.f32 %v3219, %v3210
  %v3241 = vmul.f32 %v3224, %v3211
  %v3242 = vmul.f32 %v3229, %v3212
  %v3243 = vmul.f32 %v3219, %v3213
  %v3244 = vmul.f32 %v3224, %v3214
  %v3245 = vmul.f32 %v3229, %v3215
  %v3246 = vld [vmem:[%s25] sm:$0xf]
  %v3247 = vld [vmem:[%s25 + $0x4] sm:$0xf]
  %v3248 = vld [vmem:[%s25 + $0x8] sm:$0xf]
  %v3249 = vld [vmem:[%s25 + $0xc] sm:$0xf]
  %v3250 = vld [vmem:[%s25 + $0x10] sm:$0xf]
  %v3252 = vsel %vm192, %v3246, 0
  %3254 = vmatprep.subr.mxu0 0.0
  %3255 = vmatpush1.msra.mxu0 0.0
  %3256 = vmatprep.subr.mxu0 0.0
  %3257 = vmatpush1.msra.mxu0 0.0
  %3258 = vmatprep.subr.mxu0 0.0
  %3259 = vmatpush1.msra.mxu0 0.0
  %3260 = vmatprep.subr.mxu0 0.0
  %3261 = vmatpush1.msra.mxu0 0.0
  %3262 = vmatprep.subr.mxu0 0.0
  %3263 = vmatpush1.msra.mxu0 0.0
  %3264 = vmatprep.subr.mxu0 0.0
  %3265 = vmatpush1.msra.mxu0 0.0
  %3266 = vmatprep.subr.mxu0 0.0
  %3267 = vmatpush1.msra.mxu0 0.0
  %3268 = vmatprep.subr.mxu0 0.0
  %3269 = vmatpush1.msra.mxu0 0.0
  %3270 = vmatprep.subr.mxu0 0.0
  %3271 = vmatpush1.msra.mxu0 0.0
  %3272 = vmatprep.subr.mxu0 0.0
  %3273 = vmatpush1.msra.mxu0 0.0
  %3274 = vmatprep.subr.mxu0 0.0
  %3275 = vmatpush1.msra.mxu0 0.0
  %3276 = vmatprep.subr.mxu0 0.0
  %3277 = vmatpush1.msra.mxu0 0.0
  %3278 = vmatprep.subr.mxu0 0.0
  %3279 = vmatpush1.msra.mxu0 0.0
  %3280 = vmatprep.subr.mxu0 0.0
  %3281 = vmatpush1.msra.mxu0 %v3233
  %3282 = vmatprep.subr.mxu0 0.0
  %3283 = vmatpush1.msra.mxu0 %v3232
  %3284 = vmatprep.subr.mxu0 0.0
  %3285 = vmatpush1.msra.mxu0 %v3231
  %3286 = vmatprep.subr.mxu0 0.0
  %3287 = vmatpush2.msra.mxu0 0.0
  %3288 = vmatprep.subr.mxu0 0.0
  %3289 = vmatpush2.msra.mxu0 0.0
  %3290 = vmatprep.subr.mxu0 0.0
  %3291 = vmatpush2.msra.mxu0 0.0
  %3292 = vmatprep.subr.mxu0 0.0
  %3293 = vmatpush2.msra.mxu0 0.0
  %3294 = vmatprep.subr.mxu0 0.0
  %3295 = vmatpush2.msra.mxu0 0.0
  %3296 = vmatprep.subr.mxu0 0.0
  %3297 = vmatpush2.msra.mxu0 0.0
  %3298 = vmatprep.subr.mxu0 0.0
  %3299 = vmatpush2.msra.mxu0 0.0
  %3300 = vmatprep.subr.mxu0 0.0
  %3301 = vmatpush2.msra.mxu0 0.0
  %3302 = vmatprep.subr.mxu0 0.0
  %3303 = vmatpush2.msra.mxu0 0.0
  %3304 = vmatprep.subr.mxu0 0.0
  %3305 = vmatpush2.msra.mxu0 0.0
  %3306 = vmatprep.subr.mxu0 0.0
  %3307 = vmatpush2.msra.mxu0 0.0
  %3308 = vmatprep.subr.mxu0 0.0
  %3309 = vmatpush2.msra.mxu0 0.0
  %3310 = vmatprep.subr.mxu0 0.0
  %3311 = vmatpush2.msra.mxu0 0.0
  %3312 = vmatprep.subr.mxu0 0.0
  %3313 = vmatpush2.msra.mxu0 0.0
  %3314 = vmatprep.subr.mxu0 0.0
  %3315 = vmatpush2.msra.mxu0 0.0
  %3316 = vmatprep.subr.mxu0 0.0
  %3317 = vmatpush2.msra.mxu0 0.0
  %3318 = vmatprep.mubr.f32.mxu0 0.0
  %3319 = vmatmul.mubr.f32.gmra.mxu0 %v3252
  %v3320 = vpop.f32.mrf.mxu0
  %v3321 = vadd.f32 0.0, %v3320
  %v3322 = vpop.f32.mrf.mxu0
  %3323 = vdwg.mxu0
  %v3325 = vsel %vm192, %v3247, 0
  %3327 = vmatprep.subr.mxu0 0.0
  %3328 = vmatpush1.msra.mxu0 0.0
  %3329 = vmatprep.subr.mxu0 0.0
  %3330 = vmatpush1.msra.mxu0 0.0
  %3331 = vmatprep.subr.mxu0 0.0
  %3332 = vmatpush1.msra.mxu0 0.0
  %3333 = vmatprep.subr.mxu0 0.0
  %3334 = vmatpush1.msra.mxu0 0.0
  %3335 = vmatprep.subr.mxu0 0.0
  %3336 = vmatpush1.msra.mxu0 0.0
  %3337 = vmatprep.subr.mxu0 0.0
  %3338 = vmatpush1.msra.mxu0 0.0
  %3339 = vmatprep.subr.mxu0 0.0
  %3340 = vmatpush1.msra.mxu0 0.0
  %3341 = vmatprep.subr.mxu0 0.0
  %3342 = vmatpush1.msra.mxu0 0.0
  %3343 = vmatprep.subr.mxu0 0.0
  %3344 = vmatpush1.msra.mxu0 0.0
  %3345 = vmatprep.subr.mxu0 0.0
  %3346 = vmatpush1.msra.mxu0 0.0
  %3347 = vmatprep.subr.mxu0 0.0
  %3348 = vmatpush1.msra.mxu0 0.0
  %3349 = vmatprep.subr.mxu0 0.0
  %3350 = vmatpush1.msra.mxu0 0.0
  %3351 = vmatprep.subr.mxu0 0.0
  %3352 = vmatpush1.msra.mxu0 0.0
  %3353 = vmatprep.subr.mxu0 0.0
  %3354 = vmatpush1.msra.mxu0 %v3236
  %3355 = vmatprep.subr.mxu0 0.0
  %3356 = vmatpush1.msra.mxu0 %v3235
  %3357 = vmatprep.subr.mxu0 0.0
  %3358 = vmatpush1.msra.mxu0 %v3234
  %3359 = vmatprep.subr.mxu0 0.0
  %3360 = vmatpush2.msra.mxu0 0.0
  %3361 = vmatprep.subr.mxu0 0.0
  %3362 = vmatpush2.msra.mxu0 0.0
  %3363 = vmatprep.subr.mxu0 0.0
  %3364 = vmatpush2.msra.mxu0 0.0
  %3365 = vmatprep.subr.mxu0 0.0
  %3366 = vmatpush2.msra.mxu0 0.0
  %3367 = vmatprep.subr.mxu0 0.0
  %3368 = vmatpush2.msra.mxu0 0.0
  %3369 = vmatprep.subr.mxu0 0.0
  %3370 = vmatpush2.msra.mxu0 0.0
  %3371 = vmatprep.subr.mxu0 0.0
  %3372 = vmatpush2.msra.mxu0 0.0
  %3373 = vmatprep.subr.mxu0 0.0
  %3374 = vmatpush2.msra.mxu0 0.0
  %3375 = vmatprep.subr.mxu0 0.0
  %3376 = vmatpush2.msra.mxu0 0.0
  %3377 = vmatprep.subr.mxu0 0.0
  %3378 = vmatpush2.msra.mxu0 0.0
  %3379 = vmatprep.subr.mxu0 0.0
  %3380 = vmatpush2.msra.mxu0 0.0
  %3381 = vmatprep.subr.mxu0 0.0
  %3382 = vmatpush2.msra.mxu0 0.0
  %3383 = vmatprep.subr.mxu0 0.0
  %3384 = vmatpush2.msra.mxu0 0.0
  %3385 = vmatprep.subr.mxu0 0.0
  %3386 = vmatpush2.msra.mxu0 0.0
  %3387 = vmatprep.subr.mxu0 0.0
  %3388 = vmatpush2.msra.mxu0 0.0
  %3389 = vmatprep.subr.mxu0 0.0
  %3390 = vmatpush2.msra.mxu0 0.0
  %3391 = vmatprep.mubr.f32.mxu0 0.0
  %3392 = vmatmul.mubr.f32.gmra.mxu0 %v3325
  %v3393 = vpop.f32.mrf.mxu0
  %v3394 = vadd.f32 0.0, %v3393
  %v3395 = vpop.f32.mrf.mxu0
  %3396 = vdwg.mxu0
  %v3398 = vsel %vm192, %v3248, 0
  %3400 = vmatprep.subr.mxu0 0.0
  %3401 = vmatpush1.msra.mxu0 0.0
  %3402 = vmatprep.subr.mxu0 0.0
  %3403 = vmatpush1.msra.mxu0 0.0
  %3404 = vmatprep.subr.mxu0 0.0
  %3405 = vmatpush1.msra.mxu0 0.0
  %3406 = vmatprep.subr.mxu0 0.0
  %3407 = vmatpush1.msra.mxu0 0.0
  %3408 = vmatprep.subr.mxu0 0.0
  %3409 = vmatpush1.msra.mxu0 0.0
  %3410 = vmatprep.subr.mxu0 0.0
  %3411 = vmatpush1.msra.mxu0 0.0
  %3412 = vmatprep.subr.mxu0 0.0
  %3413 = vmatpush1.msra.mxu0 0.0
  %3414 = vmatprep.subr.mxu0 0.0
  %3415 = vmatpush1.msra.mxu0 0.0
  %3416 = vmatprep.subr.mxu0 0.0
  %3417 = vmatpush1.msra.mxu0 0.0
  %3418 = vmatprep.subr.mxu0 0.0
  %3419 = vmatpush1.msra.mxu0 0.0
  %3420 = vmatprep.subr.mxu0 0.0
  %3421 = vmatpush1.msra.mxu0 0.0
  %3422 = vmatprep.subr.mxu0 0.0
  %3423 = vmatpush1.msra.mxu0 0.0
  %3424 = vmatprep.subr.mxu0 0.0
  %3425 = vmatpush1.msra.mxu0 0.0
  %3426 = vmatprep.subr.mxu0 0.0
  %3427 = vmatpush1.msra.mxu0 %v3239
  %3428 = vmatprep.subr.mxu0 0.0
  %3429 = vmatpush1.msra.mxu0 %v3238
  %3430 = vmatprep.subr.mxu0 0.0
  %3431 = vmatpush1.msra.mxu0 %v3237
  %3432 = vmatprep.subr.mxu0 0.0
  %3433 = vmatpush2.msra.mxu0 0.0
  %3434 = vmatprep.subr.mxu0 0.0
  %3435 = vmatpush2.msra.mxu0 0.0
  %3436 = vmatprep.subr.mxu0 0.0
  %3437 = vmatpush2.msra.mxu0 0.0
  %3438 = vmatprep.subr.mxu0 0.0
  %3439 = vmatpush2.msra.mxu0 0.0
  %3440 = vmatprep.subr.mxu0 0.0
  %3441 = vmatpush2.msra.mxu0 0.0
  %3442 = vmatprep.subr.mxu0 0.0
  %3443 = vmatpush2.msra.mxu0 0.0
  %3444 = vmatprep.subr.mxu0 0.0
  %3445 = vmatpush2.msra.mxu0 0.0
  %3446 = vmatprep.subr.mxu0 0.0
  %3447 = vmatpush2.msra.mxu0 0.0
  %3448 = vmatprep.subr.mxu0 0.0
  %3449 = vmatpush2.msra.mxu0 0.0
  %3450 = vmatprep.subr.mxu0 0.0
  %3451 = vmatpush2.msra.mxu0 0.0
  %3452 = vmatprep.subr.mxu0 0.0
  %3453 = vmatpush2.msra.mxu0 0.0
  %3454 = vmatprep.subr.mxu0 0.0
  %3455 = vmatpush2.msra.mxu0 0.0
  %3456 = vmatprep.subr.mxu0 0.0
  %3457 = vmatpush2.msra.mxu0 0.0
  %3458 = vmatprep.subr.mxu0 0.0
  %3459 = vmatpush2.msra.mxu0 0.0
  %3460 = vmatprep.subr.mxu0 0.0
  %3461 = vmatpush2.msra.mxu0 0.0
  %3462 = vmatprep.subr.mxu0 0.0
  %3463 = vmatpush2.msra.mxu0 0.0
  %3464 = vmatprep.mubr.f32.mxu0 0.0
  %3465 = vmatmul.mubr.f32.gmra.mxu0 %v3398
  %v3466 = vpop.f32.mrf.mxu0
  %v3467 = vadd.f32 0.0, %v3466
  %v3468 = vpop.f32.mrf.mxu0
  %3469 = vdwg.mxu0
  %v3471 = vsel %vm192, %v3249, 0
  %3473 = vmatprep.subr.mxu0 0.0
  %3474 = vmatpush1.msra.mxu0 0.0
  %3475 = vmatprep.subr.mxu0 0.0
  %3476 = vmatpush1.msra.mxu0 0.0
  %3477 = vmatprep.subr.mxu0 0.0
  %3478 = vmatpush1.msra.mxu0 0.0
  %3479 = vmatprep.subr.mxu0 0.0
  %3480 = vmatpush1.msra.mxu0 0.0
  %3481 = vmatprep.subr.mxu0 0.0
  %3482 = vmatpush1.msra.mxu0 0.0
  %3483 = vmatprep.subr.mxu0 0.0
  %3484 = vmatpush1.msra.mxu0 0.0
  %3485 = vmatprep.subr.mxu0 0.0
  %3486 = vmatpush1.msra.mxu0 0.0
  %3487 = vmatprep.subr.mxu0 0.0
  %3488 = vmatpush1.msra.mxu0 0.0
  %3489 = vmatprep.subr.mxu0 0.0
  %3490 = vmatpush1.msra.mxu0 0.0
  %3491 = vmatprep.subr.mxu0 0.0
  %3492 = vmatpush1.msra.mxu0 0.0
  %3493 = vmatprep.subr.mxu0 0.0
  %3494 = vmatpush1.msra.mxu0 0.0
  %3495 = vmatprep.subr.mxu0 0.0
  %3496 = vmatpush1.msra.mxu0 0.0
  %3497 = vmatprep.subr.mxu0 0.0
  %3498 = vmatpush1.msra.mxu0 0.0
  %3499 = vmatprep.subr.mxu0 0.0
  %3500 = vmatpush1.msra.mxu0 %v3242
  %3501 = vmatprep.subr.mxu0 0.0
  %3502 = vmatpush1.msra.mxu0 %v3241
  %3503 = vmatprep.subr.mxu0 0.0
  %3504 = vmatpush1.msra.mxu0 %v3240
  %3505 = vmatprep.subr.mxu0 0.0
  %3506 = vmatpush2.msra.mxu0 0.0
  %3507 = vmatprep.subr.mxu0 0.0
  %3508 = vmatpush2.msra.mxu0 0.0
  %3509 = vmatprep.subr.mxu0 0.0
  %3510 = vmatpush2.msra.mxu0 0.0
  %3511 = vmatprep.subr.mxu0 0.0
  %3512 = vmatpush2.msra.mxu0 0.0
  %3513 = vmatprep.subr.mxu0 0.0
  %3514 = vmatpush2.msra.mxu0 0.0
  %3515 = vmatprep.subr.mxu0 0.0
  %3516 = vmatpush2.msra.mxu0 0.0
  %3517 = vmatprep.subr.mxu0 0.0
  %3518 = vmatpush2.msra.mxu0 0.0
  %3519 = vmatprep.subr.mxu0 0.0
  %3520 = vmatpush2.msra.mxu0 0.0
  %3521 = vmatprep.subr.mxu0 0.0
  %3522 = vmatpush2.msra.mxu0 0.0
  %3523 = vmatprep.subr.mxu0 0.0
  %3524 = vmatpush2.msra.mxu0 0.0
  %3525 = vmatprep.subr.mxu0 0.0
  %3526 = vmatpush2.msra.mxu0 0.0
  %3527 = vmatprep.subr.mxu0 0.0
  %3528 = vmatpush2.msra.mxu0 0.0
  %3529 = vmatprep.subr.mxu0 0.0
  %3530 = vmatpush2.msra.mxu0 0.0
  %3531 = vmatprep.subr.mxu0 0.0
  %3532 = vmatpush2.msra.mxu0 0.0
  %3533 = vmatprep.subr.mxu0 0.0
  %3534 = vmatpush2.msra.mxu0 0.0
  %3535 = vmatprep.subr.mxu0 0.0
  %3536 = vmatpush2.msra.mxu0 0.0
  %3537 = vmatprep.mubr.f32.mxu0 0.0
  %3538 = vmatmul.mubr.f32.gmra.mxu0 %v3471
  %v3539 = vpop.f32.mrf.mxu0
  %v3540 = vadd.f32 0.0, %v3539
  %v3541 = vpop.f32.mrf.mxu0
  %3542 = vdwg.mxu0
  %v3544 = vsel %vm192, %v3250, 0
  %3546 = vmatprep.subr.mxu0 0.0
  %3547 = vmatpush1.msra.mxu0 0.0
  %3548 = vmatprep.subr.mxu0 0.0
  %3549 = vmatpush1.msra.mxu0 0.0
  %3550 = vmatprep.subr.mxu0 0.0
  %3551 = vmatpush1.msra.mxu0 0.0
  %3552 = vmatprep.subr.mxu0 0.0
  %3553 = vmatpush1.msra.mxu0 0.0
  %3554 = vmatprep.subr.mxu0 0.0
  %3555 = vmatpush1.msra.mxu0 0.0
  %3556 = vmatprep.subr.mxu0 0.0
  %3557 = vmatpush1.msra.mxu0 0.0
  %3558 = vmatprep.subr.mxu0 0.0
  %3559 = vmatpush1.msra.mxu0 0.0
  %3560 = vmatprep.subr.mxu0 0.0
  %3561 = vmatpush1.msra.mxu0 0.0
  %3562 = vmatprep.subr.mxu0 0.0
  %3563 = vmatpush1.msra.mxu0 0.0
  %3564 = vmatprep.subr.mxu0 0.0
  %3565 = vmatpush1.msra.mxu0 0.0
  %3566 = vmatprep.subr.mxu0 0.0
  %3567 = vmatpush1.msra.mxu0 0.0
  %3568 = vmatprep.subr.mxu0 0.0
  %3569 = vmatpush1.msra.mxu0 0.0
  %3570 = vmatprep.subr.mxu0 0.0
  %3571 = vmatpush1.msra.mxu0 0.0
  %3572 = vmatprep.subr.mxu0 0.0
  %3573 = vmatpush1.msra.mxu0 %v3245
  %3574 = vmatprep.subr.mxu0 0.0
  %3575 = vmatpush1.msra.mxu0 %v3244
  %3576 = vmatprep.subr.mxu0 0.0
  %3577 = vmatpush1.msra.mxu0 %v3243
  %3578 = vmatprep.subr.mxu0 0.0
  %3579 = vmatpush2.msra.mxu0 0.0
  %3580 = vmatprep.subr.mxu0 0.0
  %3581 = vmatpush2.msra.mxu0 0.0
  %3582 = vmatprep.subr.mxu0 0.0
  %3583 = vmatpush2.msra.mxu0 0.0
  %3584 = vmatprep.subr.mxu0 0.0
  %3585 = vmatpush2.msra.mxu0 0.0
  %3586 = vmatprep.subr.mxu0 0.0
  %3587 = vmatpush2.msra.mxu0 0.0
  %3588 = vmatprep.subr.mxu0 0.0
  %3589 = vmatpush2.msra.mxu0 0.0
  %3590 = vmatprep.subr.mxu0 0.0
  %3591 = vmatpush2.msra.mxu0 0.0
  %3592 = vmatprep.subr.mxu0 0.0
  %3593 = vmatpush2.msra.mxu0 0.0
  %3594 = vmatprep.subr.mxu0 0.0
  %3595 = vmatpush2.msra.mxu0 0.0
  %3596 = vmatprep.subr.mxu0 0.0
  %3597 = vmatpush2.msra.mxu0 0.0
  %3598 = vmatprep.subr.mxu0 0.0
  %3599 = vmatpush2.msra.mxu0 0.0
  %3600 = vmatprep.subr.mxu0 0.0
  %3601 = vmatpush2.msra.mxu0 0.0
  %3602 = vmatprep.subr.mxu0 0.0
  %3603 = vmatpush2.msra.mxu0 0.0
  %3604 = vmatprep.subr.mxu0 0.0
  %3605 = vmatpush2.msra.mxu0 0.0
  %3606 = vmatprep.subr.mxu0 0.0
  %3607 = vmatpush2.msra.mxu0 0.0
  %3608 = vmatprep.subr.mxu0 0.0
  %3609 = vmatpush2.msra.mxu0 0.0
  %3610 = vmatprep.mubr.f32.mxu0 0.0
  %3611 = vmatmul.mubr.f32.gmra.mxu0 %v3544
  %v3612 = vpop.f32.mrf.mxu0
  %v3613 = vadd.f32 0.0, %v3612
  %v3614 = vpop.f32.mrf.mxu0
  %3615 = vdwg.mxu0
  %vm3616 = vcmask 257024
  %3617 = vst.msk [vmem:[#allocation3] sm:$0xf] %vm3616, %v3017
  %v3618 = vadd.f32 %v3017, %v3321
  %3619 = vst.msk [vmem:[#allocation3 + $0x4] sm:$0xf] %vm3616, %v3618
  %v3620 = vadd.f32 %v3017, %v3394
  %3621 = vst.msk [vmem:[#allocation3 + $0x8] sm:$0xf] %vm3616, %v3620
  %v3622 = vadd.f32 %v3017, %v3467
  %3623 = vst.msk [vmem:[#allocation3 + $0xc] sm:$0xf] %vm3616, %v3622
  %v3624 = vadd.f32 %v3017, %v3540
  %3625 = vst.msk [vmem:[#allocation3 + $0x10] sm:$0xf] %vm3616, %v3624
  %v3626 = vadd.f32 %v3017, %v3613
  %3627 = vst.msk [vmem:[#allocation3 + $0x14] sm:$0xf] %vm3616, %v3626
  %v3628 = vld [vmem:[#allocation3] sm:$0xff]
  %v3629 = vld [vmem:[#allocation3 + $0x8] sm:$0xff]
  %v3630 = vld [vmem:[#allocation3 + $0x10] sm:$0xff]
  %v3631 = vld [vmem:[%s18] sm:$0xff]
  %v3632 = vld [vmem:[%s18 + $0x8] sm:$0xff]
  %v3633 = vld [vmem:[%s18 + $0x10] sm:$0xff]
  %v3634 = vld [vmem:[%s18 + $0x18] sm:$0xff]
  %v3635 = vld [vmem:[%s19] sm:$0x1]
  %v3637 = vlaneseq
  %v3638 = vshrl.u32 %v3637, 7
  %v3639 = vsub.s32 0, %v3638
  %v3640 = vrot.slane %v3635, %v3639
  %v3643 = vsel %vm293, %v3628, 0
  %v3646 = vsel %vm293, %v3629, 0
  %v3649 = vsel %vm293, %v3630, 0
  %3651 = vmatprep.subr.mxu0 0.0
  %3652 = vmatpush1.msra.mxu0 0.0
  %3653 = vmatprep.subr.mxu0 0.0
  %3654 = vmatpush1.msra.mxu0 0.0
  %3655 = vmatprep.subr.mxu0 0.0
  %3656 = vmatpush1.msra.mxu0 0.0
  %3657 = vmatprep.subr.mxu0 0.0
  %3658 = vmatpush1.msra.mxu0 0.0
  %3659 = vmatprep.subr.mxu0 0.0
  %3660 = vmatpush1.msra.mxu0 0.0
  %3661 = vmatprep.subr.mxu0 0.0
  %3662 = vmatpush1.msra.mxu0 0.0
  %3663 = vmatprep.subr.mxu0 0.0
  %3664 = vmatpush1.msra.mxu0 0.0
  %3665 = vmatprep.subr.mxu0 0.0
  %3666 = vmatpush1.msra.mxu0 0.0
  %3667 = vmatprep.subr.mxu0 0.0
  %3668 = vmatpush1.msra.mxu0 0.0
  %3669 = vmatprep.subr.mxu0 0.0
  %3670 = vmatpush1.msra.mxu0 0.0
  %3671 = vmatprep.subr.mxu0 0.0
  %3672 = vmatpush1.msra.mxu0 0.0
  %3673 = vmatprep.subr.mxu0 0.0
  %3674 = vmatpush1.msra.mxu0 0.0
  %3675 = vmatprep.subr.mxu0 0.0
  %3676 = vmatpush1.msra.mxu0 %v3634
  %3677 = vmatprep.subr.mxu0 0.0
  %3678 = vmatpush1.msra.mxu0 %v3633
  %3679 = vmatprep.subr.mxu0 0.0
  %3680 = vmatpush1.msra.mxu0 %v3632
  %3681 = vmatprep.subr.mxu0 0.0
  %3682 = vmatpush1.msra.mxu0 %v3631
  %3683 = vmatprep.subr.mxu0 0.0
  %3684 = vmatpush2.msra.mxu0 0.0
  %3685 = vmatprep.subr.mxu0 0.0
  %3686 = vmatpush2.msra.mxu0 0.0
  %3687 = vmatprep.subr.mxu0 0.0
  %3688 = vmatpush2.msra.mxu0 0.0
  %3689 = vmatprep.subr.mxu0 0.0
  %3690 = vmatpush2.msra.mxu0 0.0
  %3691 = vmatprep.subr.mxu0 0.0
  %3692 = vmatpush2.msra.mxu0 0.0
  %3693 = vmatprep.subr.mxu0 0.0
  %3694 = vmatpush2.msra.mxu0 0.0
  %3695 = vmatprep.subr.mxu0 0.0
  %3696 = vmatpush2.msra.mxu0 0.0
  %3697 = vmatprep.subr.mxu0 0.0
  %3698 = vmatpush2.msra.mxu0 0.0
  %3699 = vmatprep.subr.mxu0 0.0
  %3700 = vmatpush2.msra.mxu0 0.0
  %3701 = vmatprep.subr.mxu0 0.0
  %3702 = vmatpush2.msra.mxu0 0.0
  %3703 = vmatprep.subr.mxu0 0.0
  %3704 = vmatpush2.msra.mxu0 0.0
  %3705 = vmatprep.subr.mxu0 0.0
  %3706 = vmatpush2.msra.mxu0 0.0
  %3707 = vmatprep.subr.mxu0 0.0
  %3708 = vmatpush2.msra.mxu0 0.0
  %3709 = vmatprep.subr.mxu0 0.0
  %3710 = vmatpush2.msra.mxu0 0.0
  %3711 = vmatprep.subr.mxu0 0.0
  %3712 = vmatpush2.msra.mxu0 0.0
  %3713 = vmatprep.subr.mxu0 0.0
  %3714 = vmatpush2.msra.mxu0 0.0
  %3715 = vmatprep.mubr.f32.mxu0 0.0
  %3716 = vmatmul.mubr.f32.gmra.mxu0 %v3643
  %v3717 = vpop.f32.mrf.mxu0
  %v3718 = vadd.f32 %v3640, %v3717
  %v3719 = vpop.f32.mrf.mxu0
  %3720 = vmatprep.mubr.f32.mxu0 0.0
  %3721 = vmatmul.mubr.f32.gmra.mxu0 %v3646
  %v3722 = vpop.f32.mrf.mxu0
  %v3723 = vadd.f32 %v3640, %v3722
  %v3724 = vpop.f32.mrf.mxu0
  %3725 = vmatprep.mubr.f32.mxu0 0.0
  %3726 = vmatmul.mubr.f32.gmra.mxu0 %v3649
  %v3727 = vpop.f32.mrf.mxu0
  %v3728 = vadd.f32 %v3640, %v3727
  %v3729 = vpop.f32.mrf.mxu0
  %3730 = vdwg.mxu0
  %v3731 = vld [vmem:[%s26] sm:$0xff]
  %v3732 = vld [vmem:[%s26 + $0x8] sm:$0xff]
  %v3733 = vld [vmem:[%s26 + $0x10] sm:$0xff]
  %v3735 = vsel %vm192, %v3731, 0
  %v3738 = vsel %vm192, %v3732, 0
  %v3741 = vsel %vm192, %v3733, 0
  %3743 = vmatprep.subr.mxu0 0.0
  %3744 = vmatpush1.msra.mxu0 0.0
  %3745 = vmatprep.subr.mxu0 0.0
  %3746 = vmatpush1.msra.mxu0 0.0
  %3747 = vmatprep.subr.mxu0 0.0
  %3748 = vmatpush1.msra.mxu0 0.0
  %3749 = vmatprep.subr.mxu0 0.0
  %3750 = vmatpush1.msra.mxu0 0.0
  %3751 = vmatprep.subr.mxu0 0.0
  %3752 = vmatpush1.msra.mxu0 0.0
  %3753 = vmatprep.subr.mxu0 0.0
  %3754 = vmatpush1.msra.mxu0 0.0
  %3755 = vmatprep.subr.mxu0 0.0
  %3756 = vmatpush1.msra.mxu0 0.0
  %3757 = vmatprep.subr.mxu0 0.0
  %3758 = vmatpush1.msra.mxu0 0.0
  %3759 = vmatprep.subr.mxu0 0.0
  %3760 = vmatpush1.msra.mxu0 0.0
  %3761 = vmatprep.subr.mxu0 0.0
  %3762 = vmatpush1.msra.mxu0 0.0
  %3763 = vmatprep.subr.mxu0 0.0
  %3764 = vmatpush1.msra.mxu0 0.0
  %3765 = vmatprep.subr.mxu0 0.0
  %3766 = vmatpush1.msra.mxu0 0.0
  %3767 = vmatprep.subr.mxu0 0.0
  %3768 = vmatpush1.msra.mxu0 0.0
  %3769 = vmatprep.subr.mxu0 0.0
  %3770 = vmatpush1.msra.mxu0 %v3728
  %3771 = vmatprep.subr.mxu0 0.0
  %3772 = vmatpush1.msra.mxu0 %v3723
  %3773 = vmatprep.subr.mxu0 0.0
  %3774 = vmatpush1.msra.mxu0 %v3718
  %3775 = vmatprep.subr.mxu0 0.0
  %3776 = vmatpush2.msra.mxu0 0.0
  %3777 = vmatprep.subr.mxu0 0.0
  %3778 = vmatpush2.msra.mxu0 0.0
  %3779 = vmatprep.subr.mxu0 0.0
  %3780 = vmatpush2.msra.mxu0 0.0
  %3781 = vmatprep.subr.mxu0 0.0
  %3782 = vmatpush2.msra.mxu0 0.0
  %3783 = vmatprep.subr.mxu0 0.0
  %3784 = vmatpush2.msra.mxu0 0.0
  %3785 = vmatprep.subr.mxu0 0.0
  %3786 = vmatpush2.msra.mxu0 0.0
  %3787 = vmatprep.subr.mxu0 0.0
  %3788 = vmatpush2.msra.mxu0 0.0
  %3789 = vmatprep.subr.mxu0 0.0
  %3790 = vmatpush2.msra.mxu0 0.0
  %3791 = vmatprep.subr.mxu0 0.0
  %3792 = vmatpush2.msra.mxu0 0.0
  %3793 = vmatprep.subr.mxu0 0.0
  %3794 = vmatpush2.msra.mxu0 0.0
  %3795 = vmatprep.subr.mxu0 0.0
  %3796 = vmatpush2.msra.mxu0 0.0
  %3797 = vmatprep.subr.mxu0 0.0
  %3798 = vmatpush2.msra.mxu0 0.0
  %3799 = vmatprep.subr.mxu0 0.0
  %3800 = vmatpush2.msra.mxu0 0.0
  %3801 = vmatprep.subr.mxu0 0.0
  %3802 = vmatpush2.msra.mxu0 0.0
  %3803 = vmatprep.subr.mxu0 0.0
  %3804 = vmatpush2.msra.mxu0 0.0
  %3805 = vmatprep.subr.mxu0 0.0
  %3806 = vmatpush2.msra.mxu0 0.0
  %3807 = vmatprep.mubr.f32.mxu0 0.0
  %3808 = vmatmul.mubr.f32.gmra.mxu0 %v3735
  %v3809 = vpop.f32.mrf.mxu0
  %v3810 = vadd.f32 0.0, %v3809
  %v3811 = vpop.f32.mrf.mxu0
  %3812 = vmatprep.mubr.f32.mxu0 0.0
  %3813 = vmatmul.mubr.f32.gmra.mxu0 %v3738
  %v3814 = vpop.f32.mrf.mxu0
  %v3815 = vadd.f32 0.0, %v3814
  %v3816 = vpop.f32.mrf.mxu0
  %3817 = vmatprep.mubr.f32.mxu0 0.0
  %3818 = vmatmul.mubr.f32.gmra.mxu0 %v3741
  %v3819 = vpop.f32.mrf.mxu0
  %v3820 = vadd.f32 0.0, %v3819
  %v3821 = vpop.f32.mrf.mxu0
  %3822 = vdwg.mxu0
  %v3823 = vmul.f32 %v3718, %v3718
  %v3824 = vmul.f32 %v3723, %v3723
  %v3825 = vmul.f32 %v3728, %v3728
  %3826 = vmatprep.subr.mxu0 0.0
  %3827 = vmatpush1.msra.mxu0 0.0
  %3828 = vmatprep.subr.mxu0 0.0
  %3829 = vmatpush1.msra.mxu0 0.0
  %3830 = vmatprep.subr.mxu0 0.0
  %3831 = vmatpush1.msra.mxu0 0.0
  %3832 = vmatprep.subr.mxu0 0.0
  %3833 = vmatpush1.msra.mxu0 0.0
  %3834 = vmatprep.subr.mxu0 0.0
  %3835 = vmatpush1.msra.mxu0 0.0
  %3836 = vmatprep.subr.mxu0 0.0
  %3837 = vmatpush1.msra.mxu0 0.0
  %3838 = vmatprep.subr.mxu0 0.0
  %3839 = vmatpush1.msra.mxu0 0.0
  %3840 = vmatprep.subr.mxu0 0.0
  %3841 = vmatpush1.msra.mxu0 0.0
  %3842 = vmatprep.subr.mxu0 0.0
  %3843 = vmatpush1.msra.mxu0 0.0
  %3844 = vmatprep.subr.mxu0 0.0
  %3845 = vmatpush1.msra.mxu0 0.0
  %3846 = vmatprep.subr.mxu0 0.0
  %3847 = vmatpush1.msra.mxu0 0.0
  %3848 = vmatprep.subr.mxu0 0.0
  %3849 = vmatpush1.msra.mxu0 0.0
  %3850 = vmatprep.subr.mxu0 0.0
  %3851 = vmatpush1.msra.mxu0 0.0
  %3852 = vmatprep.subr.mxu0 0.0
  %3853 = vmatpush1.msra.mxu0 %v3825
  %3854 = vmatprep.subr.mxu0 0.0
  %3855 = vmatpush1.msra.mxu0 %v3824
  %3856 = vmatprep.subr.mxu0 0.0
  %3857 = vmatpush1.msra.mxu0 %v3823
  %3858 = vmatprep.subr.mxu0 0.0
  %3859 = vmatpush2.msra.mxu0 0.0
  %3860 = vmatprep.subr.mxu0 0.0
  %3861 = vmatpush2.msra.mxu0 0.0
  %3862 = vmatprep.subr.mxu0 0.0
  %3863 = vmatpush2.msra.mxu0 0.0
  %3864 = vmatprep.subr.mxu0 0.0
  %3865 = vmatpush2.msra.mxu0 0.0
  %3866 = vmatprep.subr.mxu0 0.0
  %3867 = vmatpush2.msra.mxu0 0.0
  %3868 = vmatprep.subr.mxu0 0.0
  %3869 = vmatpush2.msra.mxu0 0.0
  %3870 = vmatprep.subr.mxu0 0.0
  %3871 = vmatpush2.msra.mxu0 0.0
  %3872 = vmatprep.subr.mxu0 0.0
  %3873 = vmatpush2.msra.mxu0 0.0
  %3874 = vmatprep.subr.mxu0 0.0
  %3875 = vmatpush2.msra.mxu0 0.0
  %3876 = vmatprep.subr.mxu0 0.0
  %3877 = vmatpush2.msra.mxu0 0.0
  %3878 = vmatprep.subr.mxu0 0.0
  %3879 = vmatpush2.msra.mxu0 0.0
  %3880 = vmatprep.subr.mxu0 0.0
  %3881 = vmatpush2.msra.mxu0 0.0
  %3882 = vmatprep.subr.mxu0 0.0
  %3883 = vmatpush2.msra.mxu0 0.0
  %3884 = vmatprep.subr.mxu0 0.0
  %3885 = vmatpush2.msra.mxu0 0.0
  %3886 = vmatprep.subr.mxu0 0.0
  %3887 = vmatpush2.msra.mxu0 0.0
  %3888 = vmatprep.subr.mxu0 0.0
  %3889 = vmatpush2.msra.mxu0 0.0
  %3890 = vmatprep.mubr.f32.mxu0 0.0
  %3891 = vmatmul.mubr.f32.gmra.mxu0 %v3735
  %v3892 = vpop.f32.mrf.mxu0
  %v3893 = vadd.f32 0.0, %v3892
  %v3894 = vpop.f32.mrf.mxu0
  %3895 = vmatprep.mubr.f32.mxu0 0.0
  %3896 = vmatmul.mubr.f32.gmra.mxu0 %v3738
  %v3897 = vpop.f32.mrf.mxu0
  %v3898 = vadd.f32 0.0, %v3897
  %v3899 = vpop.f32.mrf.mxu0
  %3900 = vmatprep.mubr.f32.mxu0 0.0
  %3901 = vmatmul.mubr.f32.gmra.mxu0 %v3741
  %v3902 = vpop.f32.mrf.mxu0
  %v3903 = vadd.f32 0.0, %v3902
  %v3904 = vpop.f32.mrf.mxu0
  %3905 = vdwg.mxu0
  %v3906 = vmul.f32 %v3810, %v3810
  %v3907 = vmul.f32 %v3815, %v3815
  %v3908 = vmul.f32 %v3820, %v3820
  %v3909 = vsub.f32 %v3893, %v3906
  %v3910 = vsub.f32 %v3898, %v3907
  %v3911 = vsub.f32 %v3903, %v3908
  %v3912 = vmax.f32 %v3909, 0.0
  %v3913 = vmax.f32 %v3910, 0.0
  %v3914 = vmax.f32 %v3911, 0.0
  %v3915 = vsub.f32 %v3718, %v3810
  %v3916 = vsub.f32 %v3723, %v3815
  %v3917 = vsub.f32 %v3728, %v3820
  %v3918 = vadd.f32 %v3912, 1e-05
  %v3919 = vadd.f32 %v3913, 1e-05
  %v3920 = vadd.f32 %v3914, 1e-05
  %v3921 = vrsqrt.pop %v3918
  %v3922 = vrsqrt.pop %v3919
  %v3923 = vrsqrt.pop %v3920
  %v3924 = vmul.f32 %v3915, %v3921
  %v3925 = vmul.f32 %v3916, %v3922
  %v3926 = vmul.f32 %v3917, %v3923
  %v3927 = vmax.f32 %v3924, 0.0
  %v3928 = vmax.f32 %v3925, 0.0
  %v3929 = vmax.f32 %v3926, 0.0
  %v3930 = vld [vmem:[%s20] sm:$0xff]
  %v3931 = vld [vmem:[%s20 + $0x8] sm:$0xff]
  %v3932 = vld [vmem:[%s20 + $0x10] sm:$0xff]
  %v3933 = vld [vmem:[%s20 + $0x18] sm:$0xff]
  %v3934 = vld [vmem:[%s20 + $0x20] sm:$0xff]
  %v3935 = vld [vmem:[%s20 + $0x28] sm:$0xff]
  %v3936 = vld [vmem:[%s20 + $0x30] sm:$0xff]
  %v3937 = vld [vmem:[%s20 + $0x38] sm:$0xff]
  %v3938 = vld [vmem:[%s21] sm:$0x1]
  %v3940 = vlaneseq
  %v3941 = vshrl.u32 %v3940, 7
  %v3942 = vsub.s32 0, %v3941
  %v3943 = vrot.slane %v3938, %v3942
  %v3946 = vsel %vm383, %v3927, 0
  %v3949 = vsel %vm383, %v3928, 0
  %v3952 = vsel %vm383, %v3929, 0
  %3954 = vmatprep.subr.mxu0 0.0
  %3955 = vmatpush1.msra.mxu0 0.0
  %3956 = vmatprep.subr.mxu0 0.0
  %3957 = vmatpush1.msra.mxu0 0.0
  %3958 = vmatprep.subr.mxu0 0.0
  %3959 = vmatpush1.msra.mxu0 0.0
  %3960 = vmatprep.subr.mxu0 0.0
  %3961 = vmatpush1.msra.mxu0 0.0
  %3962 = vmatprep.subr.mxu0 0.0
  %3963 = vmatpush1.msra.mxu0 0.0
  %3964 = vmatprep.subr.mxu0 0.0
  %3965 = vmatpush1.msra.mxu0 0.0
  %3966 = vmatprep.subr.mxu0 0.0
  %3967 = vmatpush1.msra.mxu0 0.0
  %3968 = vmatprep.subr.mxu0 0.0
  %3969 = vmatpush1.msra.mxu0 0.0
  %3970 = vmatprep.subr.mxu0 0.0
  %3971 = vmatpush1.msra.mxu0 %v3937
  %3972 = vmatprep.subr.mxu0 0.0
  %3973 = vmatpush1.msra.mxu0 %v3936
  %3974 = vmatprep.subr.mxu0 0.0
  %3975 = vmatpush1.msra.mxu0 %v3935
  %3976 = vmatprep.subr.mxu0 0.0
  %3977 = vmatpush1.msra.mxu0 %v3934
  %3978 = vmatprep.subr.mxu0 0.0
  %3979 = vmatpush1.msra.mxu0 %v3933
  %3980 = vmatprep.subr.mxu0 0.0
  %3981 = vmatpush1.msra.mxu0 %v3932
  %3982 = vmatprep.subr.mxu0 0.0
  %3983 = vmatpush1.msra.mxu0 %v3931
  %3984 = vmatprep.subr.mxu0 0.0
  %3985 = vmatpush1.msra.mxu0 %v3930
  %3986 = vmatprep.subr.mxu0 0.0
  %3987 = vmatpush2.msra.mxu0 0.0
  %3988 = vmatprep.subr.mxu0 0.0
  %3989 = vmatpush2.msra.mxu0 0.0
  %3990 = vmatprep.subr.mxu0 0.0
  %3991 = vmatpush2.msra.mxu0 0.0
  %3992 = vmatprep.subr.mxu0 0.0
  %3993 = vmatpush2.msra.mxu0 0.0
  %3994 = vmatprep.subr.mxu0 0.0
  %3995 = vmatpush2.msra.mxu0 0.0
  %3996 = vmatprep.subr.mxu0 0.0
  %3997 = vmatpush2.msra.mxu0 0.0
  %3998 = vmatprep.subr.mxu0 0.0
  %3999 = vmatpush2.msra.mxu0 0.0
  %4000 = vmatprep.subr.mxu0 0.0
  %4001 = vmatpush2.msra.mxu0 0.0
  %4002 = vmatprep.subr.mxu0 0.0
  %4003 = vmatpush2.msra.mxu0 0.0
  %4004 = vmatprep.subr.mxu0 0.0
  %4005 = vmatpush2.msra.mxu0 0.0
  %4006 = vmatprep.subr.mxu0 0.0
  %4007 = vmatpush2.msra.mxu0 0.0
  %4008 = vmatprep.subr.mxu0 0.0
  %4009 = vmatpush2.msra.mxu0 0.0
  %4010 = vmatprep.subr.mxu0 0.0
  %4011 = vmatpush2.msra.mxu0 0.0
  %4012 = vmatprep.subr.mxu0 0.0
  %4013 = vmatpush2.msra.mxu0 0.0
  %4014 = vmatprep.subr.mxu0 0.0
  %4015 = vmatpush2.msra.mxu0 0.0
  %4016 = vmatprep.subr.mxu0 0.0
  %4017 = vmatpush2.msra.mxu0 0.0
  %4018 = vmatprep.mubr.f32.mxu0 0.0
  %4019 = vmatmul.mubr.f32.gmra.mxu0 %v3946
  %v4020 = vpop.f32.mrf.mxu0
  %v4021 = vadd.f32 %v3943, %v4020
  %v4022 = vpop.f32.mrf.mxu0
  %4023 = vmatprep.mubr.f32.mxu0 0.0
  %4024 = vmatmul.mubr.f32.gmra.mxu0 %v3949
  %v4025 = vpop.f32.mrf.mxu0
  %v4026 = vadd.f32 %v3943, %v4025
  %v4027 = vpop.f32.mrf.mxu0
  %4028 = vmatprep.mubr.f32.mxu0 0.0
  %4029 = vmatmul.mubr.f32.gmra.mxu0 %v3952
  %v4030 = vpop.f32.mrf.mxu0
  %v4031 = vadd.f32 %v3943, %v4030
  %v4032 = vpop.f32.mrf.mxu0
  %4033 = vdwg.mxu0
  %4034 = vst [vmem:[%s27] sm:$0xff] %v4021
  %4035 = vst [vmem:[%s27 + $0x8] sm:$0xff] %v4026
  %4036 = vst [vmem:[%s27 + $0x10] sm:$0xff] %v4031
  %v4037 = vadd.f32 %v3017, %v3090
  %v4038 = vmul.f32 %v3017, %v3017
  %v4039 = vsel %vm3616, %v4038, 0.0
  %4040 = vadd.xlane.f32.xlu0 %v4039
  %v4041 = vpop.xlane.xlu0 %4040
  %v4042 = vrsqrt.pop %v4041
  %v4043 = vmul.f32 %v4041, %v4042
  %vm4044 = vcmp.eq.f32.partialorder %v4041, inf
  %v4045 = vsel %vm4044, %v4041, %v4043
  %vm4046 = vcmp.eq.f32.partialorder %v4041, 0.0
  %v4047 = vand.u32 %v4041, 2147483648
  %v4048 = vsel %vm4046, %v4047, %v4045
  %v4049 = vmul.f32 %v4037, %v4037
  %v4050 = vsel %vm3616, %v4049, 0.0
  %4051 = vadd.xlane.f32.xlu0 %v4050
  %v4052 = vpop.xlane.xlu0 %4051
  %v4053 = vrsqrt.pop %v4052
  %v4054 = vmul.f32 %v4052, %v4053
  %vm4055 = vcmp.eq.f32.partialorder %v4052, inf
  %v4056 = vsel %vm4055, %v4052, %v4054
  %vm4057 = vcmp.eq.f32.partialorder %v4052, 0.0
  %v4058 = vand.u32 %v4052, 2147483648
  %v4059 = vsel %vm4057, %v4058, %v4056
  %v4060 = vmul.f32 %v3090, %v3090
  %v4061 = vsel %vm3616, %v4060, 0.0
  %4062 = vadd.xlane.f32.xlu0 %v4061
  %v4063 = vpop.xlane.xlu0 %4062
  %v4064 = vrsqrt.pop %v4063
  %v4065 = vmul.f32 %v4063, %v4064
  %vm4066 = vcmp.eq.f32.partialorder %v4063, inf
  %v4067 = vsel %vm4066, %v4063, %v4065
  %vm4068 = vcmp.eq.f32.partialorder %v4063, 0.0
  %v4069 = vand.u32 %v4063, 2147483648
  %v4070 = vsel %vm4068, %v4069, %v4067
  %v4072 = vsel %vm293, %v3017, 0
  %v4075 = vsel %vm293, %v4037, 0
  %4077 = vmatprep.subr.mxu0 0.0
  %4078 = vmatpush1.xpose.msra.mxu0 0.0
  %4079 = vmatprep.subr.mxu0 0.0
  %4080 = vmatpush1.xpose.msra.mxu0 0.0
  %4081 = vmatprep.subr.mxu0 0.0
  %4082 = vmatpush1.xpose.msra.mxu0 0.0
  %4083 = vmatprep.subr.mxu0 0.0
  %4084 = vmatpush1.xpose.msra.mxu0 0.0
  %4085 = vmatprep.subr.mxu0 0.0
  %4086 = vmatpush1.xpose.msra.mxu0 0.0
  %4087 = vmatprep.subr.mxu0 0.0
  %4088 = vmatpush1.xpose.msra.mxu0 0.0
  %4089 = vmatprep.subr.mxu0 0.0
  %4090 = vmatpush1.xpose.msra.mxu0 0.0
  %4091 = vmatprep.subr.mxu0 0.0
  %4092 = vmatpush1.xpose.msra.mxu0 0.0
  %4093 = vmatprep.subr.mxu0 0.0
  %4094 = vmatpush1.xpose.msra.mxu0 0.0
  %4095 = vmatprep.subr.mxu0 0.0
  %4096 = vmatpush1.xpose.msra.mxu0 0.0
  %4097 = vmatprep.subr.mxu0 0.0
  %4098 = vmatpush1.xpose.msra.mxu0 0.0
  %4099 = vmatprep.subr.mxu0 0.0
  %4100 = vmatpush1.xpose.msra.mxu0 0.0
  %4101 = vmatprep.subr.mxu0 0.0
  %4102 = vmatpush1.xpose.msra.mxu0 0.0
  %4103 = vmatprep.subr.mxu0 0.0
  %4104 = vmatpush1.xpose.msra.mxu0 0.0
  %4105 = vmatprep.subr.mxu0 0.0
  %4106 = vmatpush1.xpose.msra.mxu0 0.0
  %4107 = vmatprep.subr.mxu0 0.0
  %4108 = vmatpush1.xpose.msra.mxu0 %v4075
  %4109 = vmatprep.subr.mxu0 0.0
  %4110 = vmatpush2.xpose.msra.mxu0 0.0
  %4111 = vmatprep.subr.mxu0 0.0
  %4112 = vmatpush2.xpose.msra.mxu0 0.0
  %4113 = vmatprep.subr.mxu0 0.0
  %4114 = vmatpush2.xpose.msra.mxu0 0.0
  %4115 = vmatprep.subr.mxu0 0.0
  %4116 = vmatpush2.xpose.msra.mxu0 0.0
  %4117 = vmatprep.subr.mxu0 0.0
  %4118 = vmatpush2.xpose.msra.mxu0 0.0
  %4119 = vmatprep.subr.mxu0 0.0
  %4120 = vmatpush2.xpose.msra.mxu0 0.0
  %4121 = vmatprep.subr.mxu0 0.0
  %4122 = vmatpush2.xpose.msra.mxu0 0.0
  %4123 = vmatprep.subr.mxu0 0.0
  %4124 = vmatpush2.xpose.msra.mxu0 0.0
  %4125 = vmatprep.subr.mxu0 0.0
  %4126 = vmatpush2.xpose.msra.mxu0 0.0
  %4127 = vmatprep.subr.mxu0 0.0
  %4128 = vmatpush2.xpose.msra.mxu0 0.0
  %4129 = vmatprep.subr.mxu0 0.0
  %4130 = vmatpush2.xpose.msra.mxu0 0.0
  %4131 = vmatprep.subr.mxu0 0.0
  %4132 = vmatpush2.xpose.msra.mxu0 0.0
  %4133 = vmatprep.subr.mxu0 0.0
  %4134 = vmatpush2.xpose.msra.mxu0 0.0
  %4135 = vmatprep.subr.mxu0 0.0
  %4136 = vmatpush2.xpose.msra.mxu0 0.0
  %4137 = vmatprep.subr.mxu0 0.0
  %4138 = vmatpush2.xpose.msra.mxu0 0.0
  %4139 = vmatprep.subr.mxu0 0.0
  %4140 = vmatpush2.xpose.msra.mxu0 0.0
  %4141 = vmatprep.mubr.f32.mxu0 0.0
  %4142 = vmatmul.mubr.f32.gmra.mxu0 %v4072
  %v4143 = vpop.f32.mrf.mxu0
  %v4144 = vadd.f32 0.0, %v4143
  %v4145 = vpop.f32.mrf.mxu0
  %4146 = vdwg.mxu0
  %vm4147 = vcmask 7168
  %v4149 = vsel %vm4147, %v4048, 0
  %v4152 = vsel %vm4147, %v4059, 0
  %4154 = vmatprep.subr.mxu0 0.0
  %4155 = vmatpush1.xpose.msra.mxu0 0.0
  %4156 = vmatprep.subr.mxu0 0.0
  %4157 = vmatpush1.xpose.msra.mxu0 0.0
  %4158 = vmatprep.subr.mxu0 0.0
  %4159 = vmatpush1.xpose.msra.mxu0 0.0
  %4160 = vmatprep.subr.mxu0 0.0
  %4161 = vmatpush1.xpose.msra.mxu0 0.0
  %4162 = vmatprep.subr.mxu0 0.0
  %4163 = vmatpush1.xpose.msra.mxu0 0.0
  %4164 = vmatprep.subr.mxu0 0.0
  %4165 = vmatpush1.xpose.msra.mxu0 0.0
  %4166 = vmatprep.subr.mxu0 0.0
  %4167 = vmatpush1.xpose.msra.mxu0 0.0
  %4168 = vmatprep.subr.mxu0 0.0
  %4169 = vmatpush1.xpose.msra.mxu0 0.0
  %4170 = vmatprep.subr.mxu0 0.0
  %4171 = vmatpush1.xpose.msra.mxu0 0.0
  %4172 = vmatprep.subr.mxu0 0.0
  %4173 = vmatpush1.xpose.msra.mxu0 0.0
  %4174 = vmatprep.subr.mxu0 0.0
  %4175 = vmatpush1.xpose.msra.mxu0 0.0
  %4176 = vmatprep.subr.mxu0 0.0
  %4177 = vmatpush1.xpose.msra.mxu0 0.0
  %4178 = vmatprep.subr.mxu0 0.0
  %4179 = vmatpush1.xpose.msra.mxu0 0.0
  %4180 = vmatprep.subr.mxu0 0.0
  %4181 = vmatpush1.xpose.msra.mxu0 0.0
  %4182 = vmatprep.subr.mxu0 0.0
  %4183 = vmatpush1.xpose.msra.mxu0 0.0
  %4184 = vmatprep.subr.mxu0 0.0
  %4185 = vmatpush1.xpose.msra.mxu0 %v4152
  %4186 = vmatprep.subr.mxu0 0.0
  %4187 = vmatpush2.xpose.msra.mxu0 0.0
  %4188 = vmatprep.subr.mxu0 0.0
  %4189 = vmatpush2.xpose.msra.mxu0 0.0
  %4190 = vmatprep.subr.mxu0 0.0
  %4191 = vmatpush2.xpose.msra.mxu0 0.0
  %4192 = vmatprep.subr.mxu0 0.0
  %4193 = vmatpush2.xpose.msra.mxu0 0.0
  %4194 = vmatprep.subr.mxu0 0.0
  %4195 = vmatpush2.xpose.msra.mxu0 0.0
  %4196 = vmatprep.subr.mxu0 0.0
  %4197 = vmatpush2.xpose.msra.mxu0 0.0
  %4198 = vmatprep.subr.mxu0 0.0
  %4199 = vmatpush2.xpose.msra.mxu0 0.0
  %4200 = vmatprep.subr.mxu0 0.0
  %4201 = vmatpush2.xpose.msra.mxu0 0.0
  %4202 = vmatprep.subr.mxu0 0.0
  %4203 = vmatpush2.xpose.msra.mxu0 0.0
  %4204 = vmatprep.subr.mxu0 0.0
  %4205 = vmatpush2.xpose.msra.mxu0 0.0
  %4206 = vmatprep.subr.mxu0 0.0
  %4207 = vmatpush2.xpose.msra.mxu0 0.0
  %4208 = vmatprep.subr.mxu0 0.0
  %4209 = vmatpush2.xpose.msra.mxu0 0.0
  %4210 = vmatprep.subr.mxu0 0.0
  %4211 = vmatpush2.xpose.msra.mxu0 0.0
  %4212 = vmatprep.subr.mxu0 0.0
  %4213 = vmatpush2.xpose.msra.mxu0 0.0
  %4214 = vmatprep.subr.mxu0 0.0
  %4215 = vmatpush2.xpose.msra.mxu0 0.0
  %4216 = vmatprep.subr.mxu0 0.0
  %4217 = vmatpush2.xpose.msra.mxu0 0.0
  %4218 = vmatprep.mubr.f32.mxu0 0.0
  %4219 = vmatmul.mubr.f32.gmra.mxu0 %v4149
  %v4220 = vpop.f32.mrf.mxu0
  %v4221 = vadd.f32 1e-08, %v4220
  %v4222 = vpop.f32.mrf.mxu0
  %4223 = vdwg.mxu0
  %v4224 = vrcp.pop %v4221
  %v4225 = vmul.f32 %v4144, %v4224
  %v4226 = vmul.f32 %v4225, 5.0
  %v4227 = vmul.f32 %v4226, 1.442695
  %v4228 = vpow.pop %v4227
  %v4230 = vsel %vm293, %v3090, 0
  %4232 = vmatprep.subr.mxu0 0.0
  %4233 = vmatpush1.xpose.msra.mxu0 0.0
  %4234 = vmatprep.subr.mxu0 0.0
  %4235 = vmatpush1.xpose.msra.mxu0 0.0
  %4236 = vmatprep.subr.mxu0 0.0
  %4237 = vmatpush1.xpose.msra.mxu0 0.0
  %4238 = vmatprep.subr.mxu0 0.0
  %4239 = vmatpush1.xpose.msra.mxu0 0.0
  %4240 = vmatprep.subr.mxu0 0.0
  %4241 = vmatpush1.xpose.msra.mxu0 0.0
  %4242 = vmatprep.subr.mxu0 0.0
  %4243 = vmatpush1.xpose.msra.mxu0 0.0
  %4244 = vmatprep.subr.mxu0 0.0
  %4245 = vmatpush1.xpose.msra.mxu0 0.0
  %4246 = vmatprep.subr.mxu0 0.0
  %4247 = vmatpush1.xpose.msra.mxu0 0.0
  %4248 = vmatprep.subr.mxu0 0.0
  %4249 = vmatpush1.xpose.msra.mxu0 0.0
  %4250 = vmatprep.subr.mxu0 0.0
  %4251 = vmatpush1.xpose.msra.mxu0 0.0
  %4252 = vmatprep.subr.mxu0 0.0
  %4253 = vmatpush1.xpose.msra.mxu0 0.0
  %4254 = vmatprep.subr.mxu0 0.0
  %4255 = vmatpush1.xpose.msra.mxu0 0.0
  %4256 = vmatprep.subr.mxu0 0.0
  %4257 = vmatpush1.xpose.msra.mxu0 0.0
  %4258 = vmatprep.subr.mxu0 0.0
  %4259 = vmatpush1.xpose.msra.mxu0 0.0
  %4260 = vmatprep.subr.mxu0 0.0
  %4261 = vmatpush1.xpose.msra.mxu0 0.0
  %4262 = vmatprep.subr.mxu0 0.0
  %4263 = vmatpush1.xpose.msra.mxu0 %v4230
  %4264 = vmatprep.subr.mxu0 0.0
  %4265 = vmatpush2.xpose.msra.mxu0 0.0
  %4266 = vmatprep.subr.mxu0 0.0
  %4267 = vmatpush2.xpose.msra.mxu0 0.0
  %4268 = vmatprep.subr.mxu0 0.0
  %4269 = vmatpush2.xpose.msra.mxu0 0.0
  %4270 = vmatprep.subr.mxu0 0.0
  %4271 = vmatpush2.xpose.msra.mxu0 0.0
  %4272 = vmatprep.subr.mxu0 0.0
  %4273 = vmatpush2.xpose.msra.mxu0 0.0
  %4274 = vmatprep.subr.mxu0 0.0
  %4275 = vmatpush2.xpose.msra.mxu0 0.0
  %4276 = vmatprep.subr.mxu0 0.0
  %4277 = vmatpush2.xpose.msra.mxu0 0.0
  %4278 = vmatprep.subr.mxu0 0.0
  %4279 = vmatpush2.xpose.msra.mxu0 0.0
  %4280 = vmatprep.subr.mxu0 0.0
  %4281 = vmatpush2.xpose.msra.mxu0 0.0
  %4282 = vmatprep.subr.mxu0 0.0
  %4283 = vmatpush2.xpose.msra.mxu0 0.0
  %4284 = vmatprep.subr.mxu0 0.0
  %4285 = vmatpush2.xpose.msra.mxu0 0.0
  %4286 = vmatprep.subr.mxu0 0.0
  %4287 = vmatpush2.xpose.msra.mxu0 0.0
  %4288 = vmatprep.subr.mxu0 0.0
  %4289 = vmatpush2.xpose.msra.mxu0 0.0
  %4290 = vmatprep.subr.mxu0 0.0
  %4291 = vmatpush2.xpose.msra.mxu0 0.0
  %4292 = vmatprep.subr.mxu0 0.0
  %4293 = vmatpush2.xpose.msra.mxu0 0.0
  %4294 = vmatprep.subr.mxu0 0.0
  %4295 = vmatpush2.xpose.msra.mxu0 0.0
  %4296 = vmatprep.mubr.f32.mxu0 0.0
  %4297 = vmatmul.mubr.f32.gmra.mxu0 %v4072
  %v4298 = vpop.f32.mrf.mxu0
  %v4299 = vadd.f32 0.0, %v4298
  %v4300 = vpop.f32.mrf.mxu0
  %4301 = vdwg.mxu0
  %v4303 = vsel %vm4147, %v4070, 0
  %4305 = vmatprep.subr.mxu0 0.0
  %4306 = vmatpush1.xpose.msra.mxu0 0.0
  %4307 = vmatprep.subr.mxu0 0.0
  %4308 = vmatpush1.xpose.msra.mxu0 0.0
  %4309 = vmatprep.subr.mxu0 0.0
  %4310 = vmatpush1.xpose.msra.mxu0 0.0
  %4311 = vmatprep.subr.mxu0 0.0
  %4312 = vmatpush1.xpose.msra.mxu0 0.0
  %4313 = vmatprep.subr.mxu0 0.0
  %4314 = vmatpush1.xpose.msra.mxu0 0.0
  %4315 = vmatprep.subr.mxu0 0.0
  %4316 = vmatpush1.xpose.msra.mxu0 0.0
  %4317 = vmatprep.subr.mxu0 0.0
  %4318 = vmatpush1.xpose.msra.mxu0 0.0
  %4319 = vmatprep.subr.mxu0 0.0
  %4320 = vmatpush1.xpose.msra.mxu0 0.0
  %4321 = vmatprep.subr.mxu0 0.0
  %4322 = vmatpush1.xpose.msra.mxu0 0.0
  %4323 = vmatprep.subr.mxu0 0.0
  %4324 = vmatpush1.xpose.msra.mxu0 0.0
  %4325 = vmatprep.subr.mxu0 0.0
  %4326 = vmatpush1.xpose.msra.mxu0 0.0
  %4327 = vmatprep.subr.mxu0 0.0
  %4328 = vmatpush1.xpose.msra.mxu0 0.0
  %4329 = vmatprep.subr.mxu0 0.0
  %4330 = vmatpush1.xpose.msra.mxu0 0.0
  %4331 = vmatprep.subr.mxu0 0.0
  %4332 = vmatpush1.xpose.msra.mxu0 0.0
  %4333 = vmatprep.subr.mxu0 0.0
  %4334 = vmatpush1.xpose.msra.mxu0 0.0
  %4335 = vmatprep.subr.mxu0 0.0
  %4336 = vmatpush1.xpose.msra.mxu0 %v4303
  %4337 = vmatprep.subr.mxu0 0.0
  %4338 = vmatpush2.xpose.msra.mxu0 0.0
  %4339 = vmatprep.subr.mxu0 0.0
  %4340 = vmatpush2.xpose.msra.mxu0 0.0
  %4341 = vmatprep.subr.mxu0 0.0
  %4342 = vmatpush2.xpose.msra.mxu0 0.0
  %4343 = vmatprep.subr.mxu0 0.0
  %4344 = vmatpush2.xpose.msra.mxu0 0.0
  %4345 = vmatprep.subr.mxu0 0.0
  %4346 = vmatpush2.xpose.msra.mxu0 0.0
  %4347 = vmatprep.subr.mxu0 0.0
  %4348 = vmatpush2.xpose.msra.mxu0 0.0
  %4349 = vmatprep.subr.mxu0 0.0
  %4350 = vmatpush2.xpose.msra.mxu0 0.0
  %4351 = vmatprep.subr.mxu0 0.0
  %4352 = vmatpush2.xpose.msra.mxu0 0.0
  %4353 = vmatprep.subr.mxu0 0.0
  %4354 = vmatpush2.xpose.msra.mxu0 0.0
  %4355 = vmatprep.subr.mxu0 0.0
  %4356 = vmatpush2.xpose.msra.mxu0 0.0
  %4357 = vmatprep.subr.mxu0 0.0
  %4358 = vmatpush2.xpose.msra.mxu0 0.0
  %4359 = vmatprep.subr.mxu0 0.0
  %4360 = vmatpush2.xpose.msra.mxu0 0.0
  %4361 = vmatprep.subr.mxu0 0.0
  %4362 = vmatpush2.xpose.msra.mxu0 0.0
  %4363 = vmatprep.subr.mxu0 0.0
  %4364 = vmatpush2.xpose.msra.mxu0 0.0
  %4365 = vmatprep.subr.mxu0 0.0
  %4366 = vmatpush2.xpose.msra.mxu0 0.0
  %4367 = vmatprep.subr.mxu0 0.0
  %4368 = vmatpush2.xpose.msra.mxu0 0.0
  %4369 = vmatprep.mubr.f32.mxu0 0.0
  %4370 = vmatmul.mubr.f32.gmra.mxu0 %v4149
  %v4371 = vpop.f32.mrf.mxu0
  %v4372 = vadd.f32 1e-08, %v4371
  %v4373 = vpop.f32.mrf.mxu0
  %4374 = vdwg.mxu0
  %v4375 = vrcp.pop %v4372
  %v4376 = vmul.f32 %v4299, %v4375
  %v4377 = vmul.f32 %v4376, 5.0
  %v4378 = vmul.f32 %v4377, 1.442695
  %v4379 = vpow.pop %v4378
  %v4380 = vlaneseq
  %v4381 = vshrl.u32 %v4380, 7
  %v4382 = vlaneseq
  %v4383 = vand.u32 %v4382, 127
  %vm4384 = vcmp.eq.s32.totalorder %v4381, %v4383
  %v4385 = vsel %vm4384, %v4228, 0.0
  %vm4386 = vcmask 27648
  %v4387 = vsel %vm4386, %v4385, 0.0
  %4388 = vadd.xlane.f32.xlu0 %v4387
  %v4389 = vpop.xlane.xlu0 %4388
  %v4390 = vsel %vm4386, %v4379, 0.0
  %4391 = vadd.xlane.f32.xlu0 %v4390
  %v4392 = vpop.xlane.xlu0 %4391
  %v4393 = vadd.f32 %v4392, %v4389
  %v4394 = vrcp.pop %v4393
  %v4395 = vmul.f32 %v4389, %v4394
  %v4396 = vlog2.pop %v4395
  %v4397 = vmul.f32 %v4396, 0.6931472
  %v4398 = vsel %vm3184, %v4397, 0.0
  %4399 = vadd.xlane.f32.xlu0 %v4398
  %v4400 = vpop.xlane.xlu0 %4399
  %v4401 = vrot.slane %v4400, 4
  %v4402 = vadd.f32 %v4400, %v4401
  %v4403 = vrot.slane %v4402, 2
  %v4404 = vadd.f32 %v4402, %v4403
  %v4405 = vrot.slane %v4404, 1
  %v4406 = vadd.f32 %v4404, %v4405
  %s4407 = vtos %v4406
  %v4408 = vrcp.pop 4.0
  %s4409 = vtos %v4408
  %s4410 = smul.f32 %s4407, %s4409
  %s4411 = ssub.f32 0.0, %s4410
  %vm4412 = vcmp.eq.s32.totalorder %v4383, 0
  %v4413 = vstv %s3197
  %v4414 = vsel %vm4412, %v4413, 0.0
  %vm4415 = vcmp.eq.s32.totalorder %v4383, 1
  %v4416 = vstv %s4411
  %v4417 = vsel %vm4415, %v4416, 0.0
  %v4418 = vadd.f32 %v4414, %v4417
  %4419 = vst [vmem:[%s28] sm:$0x1] %v4418
  // Predicated region
  $region110: #{car_forward.3} parent=0 // pred_check
    _
  $region111: #{car_forward.3} parent=0 // pred_check_branch
    %4421 = sbr.rel (0) target = $region113
  $region112: #{car_forward.3} parent=0 // pred_region
    _
  $region113: #{car_forward.3} parent=0 // pred_fallthru
    _
  // Predicated region
  $region114: #{car_forward.3} parent=0 // pred_check
    _
  $region115: #{car_forward.3} parent=0 // pred_check_branch
    %4423 = sbr.rel (0) target = $region117
  $region116: #{car_forward.3} parent=0 // pred_region
    _
  $region117: #{car_forward.3} parent=0 // pred_fallthru
    _
  // Predicated region
  $region118: #{car_forward.3} parent=0 // pred_check
    _
  $region119: #{car_forward.3} parent=0 // pred_check_branch
    %4425 = sbr.rel (0) target = $region121
  $region120: #{car_forward.3} parent=0 // pred_region
    _
  $region121: #{car_forward.3} parent=0 // pred_fallthru
    _
  // Predicated region
  $region122: #{car_forward.3} parent=0 // pred_check
    _
  $region123: #{car_forward.3} parent=0 // pred_check_branch
    %4427 = sbr.rel (0) target = $region125
  $region124: #{car_forward.3} parent=0 // pred_region
    _
  $region125: #{car_forward.3} parent=0 // pred_fallthru
    _

</llo_original>
